<compile_context>
chip_gen: v6e
topology: v6e:2x2x1
jax: 0.10.0
libtpu: 0.0.40
codegen_flags: <defaults>
</compile_context>

<pallas_src>
import jax
import jax.numpy as jnp
from jax import lax
from jax.experimental import pallas as pl
from jax.experimental.pallas import tpu as pltpu


# ---------------------------------------------------------------------------
# small helpers
# ---------------------------------------------------------------------------
def _round_up(x, m):
    return ((x + m - 1) // m) * m


def _softmax_last(x):
    m = jnp.max(x, axis=-1, keepdims=True)
    e = jnp.exp(x - m)
    # reciprocal on the EUP slot instead of a VALU divide
    return e * pl.reciprocal(jnp.sum(e, axis=-1, keepdims=True), approx=True)


def _leaky(x):  # LeakyReLU(0.1), the slope the module passes explicitly
    return jnp.where(x > 0, x, 0.1 * x)


def _normalize_last(x):  # simple_normalize over the last axis (dim=1 of each 2-D slice)
    n2 = jnp.sum(x * x, axis=-1, keepdims=True)
    return x * lax.rsqrt(jnp.where(n2 == 0.0, 1.0, n2))


# ---------------------------------------------------------------------------
# kernel factory (static dims / row offsets captured by closure)
# ---------------------------------------------------------------------------
def _make_kernel(*, Bb, G, nc, X, msi, du, row_off, w_pad, r_out):
    ro_vu, ro_ku, ro_vs, ro_ks, ro_sg, ro_ii = row_off
    f32 = jnp.float32
    abt = (((1,), (1,)), ((), ()))        # 2-D  A @ B.T  (lane-lane contraction)
    w_raw = X + nc + 2 * G

    def kernel(data_ref,
               ps_w1p_ref, ps_w1s_ref, ps_b1_ref, ps_w2_ref, ps_b2_ref, ps_w3_ref,
               ph_w1p_ref, ph_w1h_ref, ph_b1_ref, ph_w2_ref, ph_b2_ref, ph_w3_ref,
               merge_ref, slab_ref):
        # ---- unpack the packed per-sample data slab (row-blocked, lane offset 0) ----
        vuser  = data_ref[:, ro_vu:ro_vu + G,  0:du]     # (Bb, G,  du)
        kuser  = data_ref[:, ro_ku:ro_ku + G,  0:du]     # (Bb, G,  du)
        vscore = data_ref[:, ro_vs:ro_vs + G,  0:X]      # (Bb, G,  X)
        kscore = data_ref[:, ro_ks:ro_ks + G,  0:nc]     # (Bb, G,  nc)
        sgs    = data_ref[:, ro_sg:ro_sg + nc, 0:X]      # (Bb, nc, X)
        ii     = data_ref[:, ro_ii:ro_ii + nc, 0:msi]    # (Bb, nc, msi)

        # ---- user-user similarity (batched lane-lane contraction) ----
        vuu = jnp.einsum('bgd,bhd->bgh', vuser, vuser, preferred_element_type=f32)
        kuu = jnp.einsum('bgd,bhd->bgh', kuser, kuser, preferred_element_type=f32)

        # ---- item-group softmax + its transpose (transpose is also an output) ----
        ig = _softmax_last(sgs)                          # (Bb, nc, X)
        igt = jnp.swapaxes(ig, -1, -2)                   # (Bb, X,  nc)

        # ---- prefer / social ----
        prefer = kscore - jnp.einsum('bgx,bcx->bgc', vscore, ig,
                                     preferred_element_type=f32)          # (Bb, G, nc)
        social = merge_ref[0] * vuu + merge_ref[1] * kuu + merge_ref[2]   # (Bb, G, G)

        # ---- PS branch, flattened over (sample, group-member) ----
        pf = prefer.reshape(Bb * G, nc)
        sf = social.reshape(Bb * G, G)
        h = _leaky(lax.dot_general(pf, ps_w1p_ref[...], abt, preferred_element_type=f32)
                   + lax.dot_general(sf, ps_w1s_ref[...], abt, preferred_element_type=f32)
                   + ps_b1_ref[...])
        h = _leaky(lax.dot_general(h, ps_w2_ref[...], abt, preferred_element_type=f32)
                   + ps_b2_ref[...])
        ps = lax.dot_general(h, ps_w3_ref[...], abt, preferred_element_type=f32)
        prefer_social = ps.reshape(Bb, G, nc)

        # ---- PH branch, flattened over (sample, class) ----
        pt = jnp.swapaxes(prefer, -1, -2).reshape(Bb * nc, G)
        hf = ii.reshape(Bb * nc, msi)
        t = _leaky(lax.dot_general(pt, ph_w1p_ref[...], abt, preferred_element_type=f32)
                   + lax.dot_general(hf, ph_w1h_ref[...], abt, preferred_element_type=f32)
                   + ph_b1_ref[...])
        t = _leaky(lax.dot_general(t, ph_w2_ref[...], abt, preferred_element_type=f32)
                   + ph_b2_ref[...])
        ph = lax.dot_general(t, ph_w3_ref[...], abt, preferred_element_type=f32)  # (Bb*nc, G)
        prefer_haptic = jnp.swapaxes(ph.reshape(Bb, nc, G), -1, -2)               # (Bb, G, nc)

        # ---- normalize, merge_KU, softmaxes ----
        ps_n = _normalize_last(prefer_social)
        ph_n = _normalize_last(prefer_haptic)
        score = merge_ref[3] * ps_n + merge_ref[4] * ph_n + merge_ref[5]          # (Bb, G, nc)

        sub = _softmax_last(score)                                                # (Bb, G, nc)
        rec = _softmax_last(jnp.einsum('bgc,bxc->bgx', score, igt,
                                       preferred_element_type=f32))              # (Bb, G, X)

        # ---- single full-width output store (no masked column stores) ----
        parts_g = [rec, sub, vuu, kuu]
        if w_pad > w_raw:
            parts_g.append(jnp.zeros((Bb, G, w_pad - w_raw), f32))
        row_g = jnp.concatenate(parts_g, axis=-1)                                 # (Bb, G, w_pad)

        parts_x = [igt]
        if w_pad > nc:
            parts_x.append(jnp.zeros((Bb, X, w_pad - nc), f32))
        row_x = jnp.concatenate(parts_x, axis=-1)                                 # (Bb, X, w_pad)

        parts = [row_g, row_x]
        if r_out > G + X:
            parts.append(jnp.zeros((Bb, r_out - (G + X), w_pad), f32))
        slab_ref[...] = jnp.concatenate(parts, axis=1)                            # (Bb, r_out, w_pad)

    return kernel


# ---------------------------------------------------------------------------
# one-time parameter preparation (hoisted out of the hot path)
# ---------------------------------------------------------------------------
def prepare_params(params):
    """Split/reshape the PyTorch-layout params once; no per-call transposes needed."""
    nc = params["ps_w3"].shape[0]
    G = params["ph_w3"].shape[0]
    ps_w1, ph_w1 = params["ps_w1"], params["ph_w1"]
    weights = (
        # PS: W1 split over cat([prefer(nc), social(G)], dim=1); biases as row vectors
        ps_w1[:, :nc], ps_w1[:, nc:], params["ps_b1"][None, :],
        params["ps_w2"], params["ps_b2"][None, :], params["ps_w3"],
        # PH: W1 split over cat([prefer.T(G), II(msi)], dim=1); biases as row vectors
        ph_w1[:, :G], ph_w1[:, G:], params["ph_b1"][None, :],
        params["ph_w2"], params["ph_b2"][None, :], params["ph_w3"],
    )
    weights = tuple(jnp.asarray(w, jnp.float32) for w in weights)
    # merge_UU / merge_KU are Conv2d(2,1,1): [w0, w1, bias] each -> 6 scalars in SMEM
    merge = jnp.concatenate([params["uu"], params["ku"]]).astype(jnp.float32)
    return weights, merge


# ---------------------------------------------------------------------------
# wrapper-side input packing: one row-blocked, 128-lane slab per sample
# ---------------------------------------------------------------------------
def _pack_inputs(sections, W_in):
    offs, padded, row = [], [], 0
    for s in sections:
        _, r, w = s.shape
        r8 = _round_up(r, 8)
        offs.append(row)
        if w < W_in:
            s = jnp.pad(s, ((0, 0), (0, 0), (0, W_in - w)))
        if r8 > r:
            s = jnp.pad(s, ((0, 0), (0, r8 - r), (0, 0)))
        padded.append(s)
        row += r8
    return jnp.concatenate(padded, axis=1).astype(jnp.float32), tuple(offs), row


# ---------------------------------------------------------------------------
# batched forward (B independent Recommender forwards, B_blk per grid step)
# ---------------------------------------------------------------------------
def recommender_forward_batched(Vuser, Vitem, Kuser, Kitem, SubstituteGroupScore,
                                Vscore, Kscore, II, prepared, block_b=None):
    del Vitem, Kitem                      # unused, exactly like the PyTorch forward
    weights, merge = prepared
    B, G, du = Vuser.shape
    nc, X = SubstituteGroupScore.shape[1], SubstituteGroupScore.shape[2]
    msi = II.shape[2]

    # batch block: big enough to amortize per-step overhead, but keep >=2 grid steps
    # (v7x has 2 TensorCores); cap at 32 samples/step.
    if block_b is None:
        block_b = 1 if B <= 1 else min(32, pl.cdiv(B, 2))
    nblk = pl.cdiv(B, block_b)
    B_pad = nblk * block_b

    def pad_batch(x):
        if x.shape[0] == B_pad:
            return x
        return jnp.pad(x, ((0, B_pad - x.shape[0]),) + ((0, 0),) * (x.ndim - 1))

    W_in = _round_up(max(du, X, nc, msi), 128)
    data, row_off, R_in = _pack_inputs(
        [pad_batch(Vuser), pad_batch(Kuser), pad_batch(Vscore),
         pad_batch(Kscore), pad_batch(SubstituteGroupScore), pad_batch(II)], W_in)

    w_raw = X + nc + 2 * G
    w_pad = _round_up(max(w_raw, nc), 128)
    r_out = _round_up(G + X, 8)

    kernel = _make_kernel(Bb=block_b, G=G, nc=nc, X=X, msi=msi, du=du,
                          row_off=row_off, w_pad=w_pad, r_out=r_out)

    data_spec = pl.BlockSpec((block_b, R_in, W_in), lambda b: (b, 0, 0))
    weight_specs = [pl.BlockSpec(w.shape, lambda b, n=w.ndim: (0,) * n) for w in weights]
    smem_spec = pl.BlockSpec(memory_space=pltpu.MemorySpace.SMEM)
    out_spec = pl.BlockSpec((block_b, r_out, w_pad), lambda b: (b, 0, 0))

    slab = pl.pallas_call(
        kernel,
        grid=(nblk,),
        out_shape=jax.ShapeDtypeStruct((B_pad, r_out, w_pad), jnp.float32),
        in_specs=[data_spec] + weight_specs + [smem_spec],
        out_specs=out_spec,
        compiler_params=pltpu.CompilerParams(dimension_semantics=("parallel",)),
    )(data, *weights, merge)

    rec = slab[:B, :G, 0:X]
    sub = slab[:B, :G, X:X + nc]
    vuu = slab[:B, :G, X + nc:X + nc + G]
    kuu = slab[:B, :G, X + nc + G:X + nc + 2 * G]
    igt = slab[:B, G:G + X, 0:nc]
    return rec, sub, igt, vuu, kuu


def recommender_forward(Vuser, Vitem, Kuser, Kitem, SubstituteGroupScore,
                        Vscore, Kscore, II, prepared):
    """Single-sample convenience wrapper (B=1), same returns as the module."""
    outs = recommender_forward_batched(
        Vuser[None], Vitem[None], Kuser[None], Kitem[None],
        SubstituteGroupScore[None], Vscore[None], Kscore[None], II[None], prepared)
    return tuple(o[0] for o in outs)


# ---------------------------------------------------------------------------
# deterministic parameter init (shapes follow the module __init__)
# ---------------------------------------------------------------------------
def init_params(key, data_channels, n_classes, max_group_member, max_scene_item):
    dc, G, msi = data_channels, max_group_member, max_scene_item
    ks = jax.random.split(key, 12)

    def w(k, shape, scale=0.1):
        return scale * jax.random.normal(k, shape, jnp.float32)

    return dict(
        uu=w(ks[0], (3,)),                       # merge_UU: Conv2d(2,1,1) -> [w0,w1,b]
        ku=w(ks[1], (3,)),                       # merge_KU
        ps_w1=w(ks[2], (dc, n_classes + G)), ps_b1=w(ks[3], (dc,)),
        ps_w2=w(ks[4], (dc, dc)),            ps_b2=w(ks[5], (dc,)),
        ps_w3=w(ks[6], (n_classes, dc)),     # bias=False
        ph_w1=w(ks[7], (dc, G + msi)),       ph_b1=w(ks[8], (dc,)),
        ph_w2=w(ks[9], (dc, dc)),            ph_b2=w(ks[10], (dc,)),
        ph_w3=w(ks[11], (G, dc)),            # bias=False
    )


# ---------------------------------------------------------------------------
# plain-JAX reference of the PyTorch forward (for correctness check)
# ---------------------------------------------------------------------------
def reference_forward(Vuser, Vitem, Kuser, Kitem, SGS, Vscore, Kscore, II, p):
    del Vitem, Kitem
    hi = lax.Precision.HIGHEST

    def softmax_rows(x):
        e = jnp.exp(x - jnp.max(x, axis=1, keepdims=True))
        return e / jnp.sum(e, axis=1, keepdims=True)

    def leaky(x):
        return jnp.where(x > 0, x, 0.1 * x)

    def norm(x):
        n = jnp.sqrt(jnp.sum(x * x, axis=1, keepdims=True))
        n = jnp.where(n == 0, 1.0, n)
        return x / n

    VUU = jnp.dot(Vuser, Vuser.T, precision=hi)
    KUU = jnp.dot(Kuser, Kuser.T, precision=hi)
    ig = softmax_rows(SGS)
    prefer = Kscore - jnp.dot(Vscore, ig.T, precision=hi)
    social = p["uu"][0] * VUU + p["uu"][1] * KUU + p["uu"][2]
    x = jnp.concatenate([prefer, social], axis=1)
    h = leaky(jnp.dot(x, p["ps_w1"].T, precision=hi) + p["ps_b1"])
    h = leaky(jnp.dot(h, p["ps_w2"].T, precision=hi) + p["ps_b2"])
    ps = jnp.dot(h, p["ps_w3"].T, precision=hi)
    y = jnp.concatenate([prefer.T, II], axis=1)
    g = leaky(jnp.dot(y, p["ph_w1"].T, precision=hi) + p["ph_b1"])
    g = leaky(jnp.dot(g, p["ph_w2"].T, precision=hi) + p["ph_b2"])
    ph = jnp.dot(g, p["ph_w3"].T, precision=hi).T
    ps, ph = norm(ps), norm(ph)
    score = p["ku"][0] * ps + p["ku"][1] * ph + p["ku"][2]
    rec = softmax_rows(jnp.dot(score, ig, precision=hi))
    return rec, softmax_rows(score), ig.T, VUU, KUU


# ---------------------------------------------------------------------------
if __name__ == "__main__":
    # batch of 8 independent forward passes -> 2 grid steps of 4 samples each.
    #   G = max_group_member = 8, n_classes = 32, X = substitute groups = 8,
    #   max_scene_item = 8, data_channels = 32, user-embedding dim = 16
    B, G, nc, X, msi, dc, du = 8, 8, 32, 8, 8, 32, 16

    key = jax.random.PRNGKey(0)
    k = jax.random.split(key, 8)
    Vuser = 0.1 * jax.random.normal(k[0], (B, G, du), jnp.float32)
    Kuser = 0.1 * jax.random.normal(k[1], (B, G, du), jnp.float32)
    Vitem = 0.1 * jax.random.normal(k[2], (B, nc, du), jnp.float32)   # unused by forward
    Kitem = 0.1 * jax.random.normal(k[3], (B, nc, du), jnp.float32)   # unused by forward
    SGS = jax.random.normal(k[4], (B, nc, X), jnp.float32)            # SubstituteGroupScore
    Vscore = 0.1 * jax.random.normal(k[5], (B, G, X), jnp.float32)
    Kscore = 0.1 * jax.random.normal(k[6], (B, G, nc), jnp.float32)
    II = 0.1 * jax.random.normal(k[7], (B, nc, msi), jnp.float32)

    params = init_params(jax.random.PRNGKey(42), dc, nc, G, msi)
    prepared = prepare_params(params)          # one-time weight prep (hoisted)

    fwd = jax.jit(recommender_forward_batched)
    outs = fwd(Vuser, Vitem, Kuser, Kitem, SGS, Vscore, Kscore, II, prepared)
    outs = jax.block_until_ready(outs)

    ref_fn = lambda vu, vi, ku, ki, s, vs, kc, ii: reference_forward(
        vu, vi, ku, ki, s, vs, kc, ii, params)
    refs = jax.vmap(ref_fn)(Vuser, Vitem, Kuser, Kitem, SGS, Vscore, Kscore, II)

    names = ("Recommended_m", "Substitute_m", "ItemGroups_m.T", "VUU", "KUU")
    for name, o, r in zip(names, outs, refs):
        assert o.shape == r.shape, (name, o.shape, r.shape)
        assert bool(jnp.all(jnp.isfinite(o))), name
        err = float(jnp.max(jnp.abs(o - r)))
        assert err < 5e-3, (name, err)

    print("KERNEL_OK")
</pallas_src>

<mosaic_0001>
module attributes {stable_mosaic.version = 11 : i64} {
  func.func @kernel(%arg0: i32, %arg1: memref<4x96x128xf32, #tpu.memory_space<vmem>>, %arg2: memref<32x32xf32, #tpu.memory_space<vmem>>, %arg3: memref<32x8xf32, #tpu.memory_space<vmem>>, %arg4: memref<1x32xf32, #tpu.memory_space<vmem>>, %arg5: memref<32x32xf32, #tpu.memory_space<vmem>>, %arg6: memref<1x32xf32, #tpu.memory_space<vmem>>, %arg7: memref<32x32xf32, #tpu.memory_space<vmem>>, %arg8: memref<32x8xf32, #tpu.memory_space<vmem>>, %arg9: memref<32x8xf32, #tpu.memory_space<vmem>>, %arg10: memref<1x32xf32, #tpu.memory_space<vmem>>, %arg11: memref<32x32xf32, #tpu.memory_space<vmem>>, %arg12: memref<1x32xf32, #tpu.memory_space<vmem>>, %arg13: memref<8x32xf32, #tpu.memory_space<vmem>>, %arg14: memref<6xf32, #tpu.memory_space<smem>>, %arg15: memref<4x16x128xf32, #tpu.memory_space<vmem>>) attributes {dimension_semantics = [#tpu.dimension_semantics<parallel>], iteration_bounds = array<i64: 2>, scalar_prefetch = 0 : i64, scratch_operands = 0 : i64, tpu.core_type = #tpu.core_type<tc>, window_params = [{transform_indices = @transform_0, window_bounds = array<i64: 4, 96, 128>}, {pipeline_mode = #tpu.pipeline_mode<synchronous>, transform_indices = @transform_1, window_bounds = array<i64: 32, 32>}, {pipeline_mode = #tpu.pipeline_mode<synchronous>, transform_indices = @transform_2, window_bounds = array<i64: 32, 8>}, {pipeline_mode = #tpu.pipeline_mode<synchronous>, transform_indices = @transform_3, window_bounds = array<i64: 1, 32>}, {pipeline_mode = #tpu.pipeline_mode<synchronous>, transform_indices = @transform_4, window_bounds = array<i64: 32, 32>}, {pipeline_mode = #tpu.pipeline_mode<synchronous>, transform_indices = @transform_5, window_bounds = array<i64: 1, 32>}, {pipeline_mode = #tpu.pipeline_mode<synchronous>, transform_indices = @transform_6, window_bounds = array<i64: 32, 32>}, {pipeline_mode = #tpu.pipeline_mode<synchronous>, transform_indices = @transform_7, window_bounds = array<i64: 32, 8>}, {pipeline_mode = #tpu.pipeline_mode<synchronous>, transform_indices = @transform_8, window_bounds = array<i64: 32, 8>}, {pipeline_mode = #tpu.pipeline_mode<synchronous>, transform_indices = @transform_9, window_bounds = array<i64: 1, 32>}, {pipeline_mode = #tpu.pipeline_mode<synchronous>, transform_indices = @transform_10, window_bounds = array<i64: 32, 32>}, {pipeline_mode = #tpu.pipeline_mode<synchronous>, transform_indices = @transform_11, window_bounds = array<i64: 1, 32>}, {pipeline_mode = #tpu.pipeline_mode<synchronous>, transform_indices = @transform_12, window_bounds = array<i64: 8, 32>}, {transform_indices = @transform_13, window_bounds = array<i64: 6>}, {transform_indices = @transform_14, window_bounds = array<i64: 4, 16, 128>}]} {
    %c0 = arith.constant 0 : index
    %c0_0 = arith.constant 0 : index
    %c0_1 = arith.constant 0 : index
    %0 = vector.load %arg1[%c0, %c0_0, %c0_1] : memref<4x96x128xf32, #tpu.memory_space<vmem>>, vector<4x8x16xf32>
    %c0_2 = arith.constant 0 : index
    %c8 = arith.constant 8 : index
    %c0_3 = arith.constant 0 : index
    %1 = vector.load %arg1[%c0_2, %c8, %c0_3] : memref<4x96x128xf32, #tpu.memory_space<vmem>>, vector<4x8x16xf32>
    %c0_4 = arith.constant 0 : index
    %c16 = arith.constant 16 : index
    %c0_5 = arith.constant 0 : index
    %2 = vector.load %arg1[%c0_4, %c16, %c0_5] : memref<4x96x128xf32, #tpu.memory_space<vmem>>, vector<4x8x8xf32>
    %c0_6 = arith.constant 0 : index
    %c24 = arith.constant 24 : index
    %c0_7 = arith.constant 0 : index
    %3 = vector.load %arg1[%c0_6, %c24, %c0_7] : memref<4x96x128xf32, #tpu.memory_space<vmem>>, vector<4x8x32xf32>
    %c0_8 = arith.constant 0 : index
    %c32 = arith.constant 32 : index
    %c0_9 = arith.constant 0 : index
    %4 = vector.load %arg1[%c0_8, %c32, %c0_9] : memref<4x96x128xf32, #tpu.memory_space<vmem>>, vector<4x32x8xf32>
    %c0_10 = arith.constant 0 : index
    %c64 = arith.constant 64 : index
    %c0_11 = arith.constant 0 : index
    %5 = vector.load %arg1[%c0_10, %c64, %c0_11] : memref<4x96x128xf32, #tpu.memory_space<vmem>>, vector<4x32x8xf32>
    "tpu.trace_start"() <{level = 10 : i32, message = "bgd,bhd->bgh"}> : () -> ()
    %cst = arith.constant dense<0.000000e+00> : vector<4x8x8xf32>
    %6 = tpu.matmul %0, %0, %cst {dimension_numbers = #tpu.dot_dimension_numbers<[2], [2], [1], [1], [0, 0, 0, 1, 1, 1], [0], [0]>} : vector<4x8x16xf32>, vector<4x8x16xf32>, vector<4x8x8xf32> -> vector<4x8x8xf32>
    %cst_12 = arith.constant dense<0.000000e+00> : vector<4x8x8xf32>
    %7 = tpu.matmul %1, %1, %cst_12 {dimension_numbers = #tpu.dot_dimension_numbers<[2], [2], [1], [1], [0, 0, 0, 1, 1, 1], [0], [0]>} : vector<4x8x16xf32>, vector<4x8x16xf32>, vector<4x8x8xf32> -> vector<4x8x8xf32>
    "tpu.trace_stop"() : () -> ()
    %cst_13 = arith.constant dense<0xFF800000> : vector<4x32xf32>
    %8 = vector.multi_reduction <maximumf>, %4, %cst_13 [2] : vector<4x32x8xf32> to vector<4x32xf32>
    %9 = vector.shape_cast %8 : vector<4x32xf32> to vector<4x32x1xf32>
    %10 = vector.broadcast %9 : vector<4x32x1xf32> to vector<4x32x8xf32>
    %11 = arith.subf %4, %10 : vector<4x32x8xf32>
    %12 = math.exp %11 : vector<4x32x8xf32>
    %cst_14 = arith.constant dense<0.000000e+00> : vector<4x32xf32>
    %13 = vector.multi_reduction <add>, %12, %cst_14 [2] : vector<4x32x8xf32> to vector<4x32xf32>
    %14 = vector.shape_cast %13 : vector<4x32xf32> to vector<4x32x1xf32>
    %15 = tpu.reciprocal %14 {approx = true} : vector<4x32x1xf32> -> vector<4x32x1xf32>
    %16 = vector.broadcast %15 : vector<4x32x1xf32> to vector<4x32x8xf32>
    %17 = arith.mulf %12, %16 : vector<4x32x8xf32>
    %18 = tpu.transpose %17, [0, 2, 1] : vector<4x32x8xf32> -> vector<4x8x32xf32>
    "tpu.trace_start"() <{level = 10 : i32, message = "bgx,bcx->bgc"}> : () -> ()
    %cst_15 = arith.constant dense<0.000000e+00> : vector<4x8x32xf32>
    %19 = tpu.matmul %2, %17, %cst_15 {dimension_numbers = #tpu.dot_dimension_numbers<[2], [2], [1], [1], [0, 0, 0, 1, 1, 1], [0], [0]>} : vector<4x8x8xf32>, vector<4x32x8xf32>, vector<4x8x32xf32> -> vector<4x8x32xf32>
    "tpu.trace_stop"() : () -> ()
    %20 = arith.subf %3, %19 : vector<4x8x32xf32>
    %c0_16 = arith.constant 0 : index
    %21 = memref.load %arg14[%c0_16] : memref<6xf32, #tpu.memory_space<smem>>
    %22 = vector.broadcast %21 : f32 to vector<4x8x8xf32>
    %23 = arith.mulf %22, %6 : vector<4x8x8xf32>
    %c1 = arith.constant 1 : index
    %24 = memref.load %arg14[%c1] : memref<6xf32, #tpu.memory_space<smem>>
    %25 = vector.broadcast %24 : f32 to vector<4x8x8xf32>
    %26 = arith.mulf %25, %7 : vector<4x8x8xf32>
    %27 = arith.addf %23, %26 : vector<4x8x8xf32>
    %c2 = arith.constant 2 : index
    %28 = memref.load %arg14[%c2] : memref<6xf32, #tpu.memory_space<smem>>
    %29 = vector.broadcast %28 : f32 to vector<4x8x8xf32>
    %30 = arith.addf %27, %29 : vector<4x8x8xf32>
    %31 = vector.shape_cast %20 : vector<4x8x32xf32> to vector<32x32xf32>
    %32 = vector.shape_cast %30 : vector<4x8x8xf32> to vector<32x8xf32>
    %c0_17 = arith.constant 0 : index
    %c0_18 = arith.constant 0 : index
    %33 = vector.load %arg2[%c0_17, %c0_18] : memref<32x32xf32, #tpu.memory_space<vmem>>, vector<32x32xf32>
    %cst_19 = arith.constant dense<0.000000e+00> : vector<32x32xf32>
    %34 = tpu.matmul %31, %33, %cst_19 {dimension_numbers = #tpu.dot_dimension_numbers<[1], [1], [0], [0], [0, 0, 1, 0], [], []>} : vector<32x32xf32>, vector<32x32xf32>, vector<32x32xf32> -> vector<32x32xf32>
    %c0_20 = arith.constant 0 : index
    %c0_21 = arith.constant 0 : index
    %35 = vector.load %arg3[%c0_20, %c0_21] : memref<32x8xf32, #tpu.memory_space<vmem>>, vector<32x8xf32>
    %cst_22 = arith.constant dense<0.000000e+00> : vector<32x32xf32>
    %36 = tpu.matmul %32, %35, %cst_22 {dimension_numbers = #tpu.dot_dimension_numbers<[1], [1], [0], [0], [0, 0, 1, 0], [], []>} : vector<32x8xf32>, vector<32x8xf32>, vector<32x32xf32> -> vector<32x32xf32>
    %37 = arith.addf %34, %36 : vector<32x32xf32>
    %c0_23 = arith.constant 0 : index
    %c0_24 = arith.constant 0 : index
    %38 = vector.load %arg4[%c0_23, %c0_24] : memref<1x32xf32, #tpu.memory_space<vmem>>, vector<1x32xf32>
    %39 = vector.broadcast %38 : vector<1x32xf32> to vector<32x32xf32>
    %40 = arith.addf %37, %39 : vector<32x32xf32>
    %cst_25 = arith.constant 0.000000e+00 : f32
    %41 = vector.broadcast %cst_25 : f32 to vector<32x32xf32>
    %42 = arith.cmpf ogt, %40, %41 : vector<32x32xf32>
    %cst_26 = arith.constant 1.000000e-01 : f32
    %43 = vector.broadcast %cst_26 : f32 to vector<32x32xf32>
    %44 = arith.mulf %43, %40 : vector<32x32xf32>
    %45 = arith.select %42, %40, %44 : vector<32x32xi1>, vector<32x32xf32>
    %c0_27 = arith.constant 0 : index
    %c0_28 = arith.constant 0 : index
    %46 = vector.load %arg5[%c0_27, %c0_28] : memref<32x32xf32, #tpu.memory_space<vmem>>, vector<32x32xf32>
    %cst_29 = arith.constant dense<0.000000e+00> : vector<32x32xf32>
    %47 = tpu.matmul %45, %46, %cst_29 {dimension_numbers = #tpu.dot_dimension_numbers<[1], [1], [0], [0], [0, 0, 1, 0], [], []>} : vector<32x32xf32>, vector<32x32xf32>, vector<32x32xf32> -> vector<32x32xf32>
    %c0_30 = arith.constant 0 : index
    %c0_31 = arith.constant 0 : index
    %48 = vector.load %arg6[%c0_30, %c0_31] : memref<1x32xf32, #tpu.memory_space<vmem>>, vector<1x32xf32>
    %49 = vector.broadcast %48 : vector<1x32xf32> to vector<32x32xf32>
    %50 = arith.addf %47, %49 : vector<32x32xf32>
    %cst_32 = arith.constant 0.000000e+00 : f32
    %51 = vector.broadcast %cst_32 : f32 to vector<32x32xf32>
    %52 = arith.cmpf ogt, %50, %51 : vector<32x32xf32>
    %cst_33 = arith.constant 1.000000e-01 : f32
    %53 = vector.broadcast %cst_33 : f32 to vector<32x32xf32>
    %54 = arith.mulf %53, %50 : vector<32x32xf32>
    %55 = arith.select %52, %50, %54 : vector<32x32xi1>, vector<32x32xf32>
    %c0_34 = arith.constant 0 : index
    %c0_35 = arith.constant 0 : index
    %56 = vector.load %arg7[%c0_34, %c0_35] : memref<32x32xf32, #tpu.memory_space<vmem>>, vector<32x32xf32>
    %cst_36 = arith.constant dense<0.000000e+00> : vector<32x32xf32>
    %57 = tpu.matmul %55, %56, %cst_36 {dimension_numbers = #tpu.dot_dimension_numbers<[1], [1], [0], [0], [0, 0, 1, 0], [], []>} : vector<32x32xf32>, vector<32x32xf32>, vector<32x32xf32> -> vector<32x32xf32>
    %58 = vector.shape_cast %57 : vector<32x32xf32> to vector<4x8x32xf32>
    %59 = tpu.transpose %20, [0, 2, 1] : vector<4x8x32xf32> -> vector<4x32x8xf32>
    %60 = vector.shape_cast %59 : vector<4x32x8xf32> to vector<128x8xf32>
    %61 = vector.shape_cast %5 : vector<4x32x8xf32> to vector<128x8xf32>
    %c0_37 = arith.constant 0 : index
    %c0_38 = arith.constant 0 : index
    %62 = vector.load %arg8[%c0_37, %c0_38] : memref<32x8xf32, #tpu.memory_space<vmem>>, vector<32x8xf32>
    %cst_39 = arith.constant dense<0.000000e+00> : vector<128x32xf32>
    %63 = tpu.matmul %60, %62, %cst_39 {dimension_numbers = #tpu.dot_dimension_numbers<[1], [1], [0], [0], [0, 0, 1, 0], [], []>} : vector<128x8xf32>, vector<32x8xf32>, vector<128x32xf32> -> vector<128x32xf32>
    %c0_40 = arith.constant 0 : index
    %c0_41 = arith.constant 0 : index
    %64 = vector.load %arg9[%c0_40, %c0_41] : memref<32x8xf32, #tpu.memory_space<vmem>>, vector<32x8xf32>
    %cst_42 = arith.constant dense<0.000000e+00> : vector<128x32xf32>
    %65 = tpu.matmul %61, %64, %cst_42 {dimension_numbers = #tpu.dot_dimension_numbers<[1], [1], [0], [0], [0, 0, 1, 0], [], []>} : vector<128x8xf32>, vector<32x8xf32>, vector<128x32xf32> -> vector<128x32xf32>
    %66 = arith.addf %63, %65 : vector<128x32xf32>
    %c0_43 = arith.constant 0 : index
    %c0_44 = arith.constant 0 : index
    %67 = vector.load %arg10[%c0_43, %c0_44] : memref<1x32xf32, #tpu.memory_space<vmem>>, vector<1x32xf32>
    %68 = vector.broadcast %67 : vector<1x32xf32> to vector<128x32xf32>
    %69 = arith.addf %66, %68 : vector<128x32xf32>
    %cst_45 = arith.constant 0.000000e+00 : f32
    %70 = vector.broadcast %cst_45 : f32 to vector<128x32xf32>
    %71 = arith.cmpf ogt, %69, %70 : vector<128x32xf32>
    %cst_46 = arith.constant 1.000000e-01 : f32
    %72 = vector.broadcast %cst_46 : f32 to vector<128x32xf32>
    %73 = arith.mulf %72, %69 : vector<128x32xf32>
    %74 = arith.select %71, %69, %73 : vector<128x32xi1>, vector<128x32xf32>
    %c0_47 = arith.constant 0 : index
    %c0_48 = arith.constant 0 : index
    %75 = vector.load %arg11[%c0_47, %c0_48] : memref<32x32xf32, #tpu.memory_space<vmem>>, vector<32x32xf32>
    %cst_49 = arith.constant dense<0.000000e+00> : vector<128x32xf32>
    %76 = tpu.matmul %74, %75, %cst_49 {dimension_numbers = #tpu.dot_dimension_numbers<[1], [1], [0], [0], [0, 0, 1, 0], [], []>} : vector<128x32xf32>, vector<32x32xf32>, vector<128x32xf32> -> vector<128x32xf32>
    %c0_50 = arith.constant 0 : index
    %c0_51 = arith.constant 0 : index
    %77 = vector.load %arg12[%c0_50, %c0_51] : memref<1x32xf32, #tpu.memory_space<vmem>>, vector<1x32xf32>
    %78 = vector.broadcast %77 : vector<1x32xf32> to vector<128x32xf32>
    %79 = arith.addf %76, %78 : vector<128x32xf32>
    %cst_52 = arith.constant 0.000000e+00 : f32
    %80 = vector.broadcast %cst_52 : f32 to vector<128x32xf32>
    %81 = arith.cmpf ogt, %79, %80 : vector<128x32xf32>
    %cst_53 = arith.constant 1.000000e-01 : f32
    %82 = vector.broadcast %cst_53 : f32 to vector<128x32xf32>
    %83 = arith.mulf %82, %79 : vector<128x32xf32>
    %84 = arith.select %81, %79, %83 : vector<128x32xi1>, vector<128x32xf32>
    %c0_54 = arith.constant 0 : index
    %c0_55 = arith.constant 0 : index
    %85 = vector.load %arg13[%c0_54, %c0_55] : memref<8x32xf32, #tpu.memory_space<vmem>>, vector<8x32xf32>
    %cst_56 = arith.constant dense<0.000000e+00> : vector<128x8xf32>
    %86 = tpu.matmul %84, %85, %cst_56 {dimension_numbers = #tpu.dot_dimension_numbers<[1], [1], [0], [0], [0, 0, 1, 0], [], []>} : vector<128x32xf32>, vector<8x32xf32>, vector<128x8xf32> -> vector<128x8xf32>
    %87 = vector.shape_cast %86 : vector<128x8xf32> to vector<4x32x8xf32>
    %88 = tpu.transpose %87, [0, 2, 1] : vector<4x32x8xf32> -> vector<4x8x32xf32>
    %89 = arith.mulf %58, %58 : vector<4x8x32xf32>
    %cst_57 = arith.constant dense<0.000000e+00> : vector<4x8xf32>
    %90 = vector.multi_reduction <add>, %89, %cst_57 [2] : vector<4x8x32xf32> to vector<4x8xf32>
    %91 = vector.shape_cast %90 : vector<4x8xf32> to vector<4x8x1xf32>
    %cst_58 = arith.constant 0.000000e+00 : f32
    %92 = vector.broadcast %cst_58 : f32 to vector<4x8x1xf32>
    %93 = arith.cmpf oeq, %91, %92 : vector<4x8x1xf32>
    %cst_59 = arith.constant 1.000000e+00 : f32
    %94 = vector.broadcast %cst_59 : f32 to vector<4x8x1xf32>
    %95 = arith.select %93, %94, %91 : vector<4x8x1xi1>, vector<4x8x1xf32>
    %96 = math.rsqrt %95 : vector<4x8x1xf32>
    %97 = vector.broadcast %96 : vector<4x8x1xf32> to vector<4x8x32xf32>
    %98 = arith.mulf %58, %97 : vector<4x8x32xf32>
    %99 = arith.mulf %88, %88 : vector<4x8x32xf32>
    %cst_60 = arith.constant dense<0.000000e+00> : vector<4x8xf32>
    %100 = vector.multi_reduction <add>, %99, %cst_60 [2] : vector<4x8x32xf32> to vector<4x8xf32>
    %101 = vector.shape_cast %100 : vector<4x8xf32> to vector<4x8x1xf32>
    %cst_61 = arith.constant 0.000000e+00 : f32
    %102 = vector.broadcast %cst_61 : f32 to vector<4x8x1xf32>
    %103 = arith.cmpf oeq, %101, %102 : vector<4x8x1xf32>
    %cst_62 = arith.constant 1.000000e+00 : f32
    %104 = vector.broadcast %cst_62 : f32 to vector<4x8x1xf32>
    %105 = arith.select %103, %104, %101 : vector<4x8x1xi1>, vector<4x8x1xf32>
    %106 = math.rsqrt %105 : vector<4x8x1xf32>
    %107 = vector.broadcast %106 : vector<4x8x1xf32> to vector<4x8x32xf32>
    %108 = arith.mulf %88, %107 : vector<4x8x32xf32>
    %c3 = arith.constant 3 : index
    %109 = memref.load %arg14[%c3] : memref<6xf32, #tpu.memory_space<smem>>
    %110 = vector.broadcast %109 : f32 to vector<4x8x32xf32>
    %111 = arith.mulf %110, %98 : vector<4x8x32xf32>
    %c4 = arith.constant 4 : index
    %112 = memref.load %arg14[%c4] : memref<6xf32, #tpu.memory_space<smem>>
    %113 = vector.broadcast %112 : f32 to vector<4x8x32xf32>
    %114 = arith.mulf %113, %108 : vector<4x8x32xf32>
    %115 = arith.addf %111, %114 : vector<4x8x32xf32>
    %c5 = arith.constant 5 : index
    %116 = memref.load %arg14[%c5] : memref<6xf32, #tpu.memory_space<smem>>
    %117 = vector.broadcast %116 : f32 to vector<4x8x32xf32>
    %118 = arith.addf %115, %117 : vector<4x8x32xf32>
    %cst_63 = arith.constant dense<0xFF800000> : vector<4x8xf32>
    %119 = vector.multi_reduction <maximumf>, %118, %cst_63 [2] : vector<4x8x32xf32> to vector<4x8xf32>
    %120 = vector.shape_cast %119 : vector<4x8xf32> to vector<4x8x1xf32>
    %121 = vector.broadcast %120 : vector<4x8x1xf32> to vector<4x8x32xf32>
    %122 = arith.subf %118, %121 : vector<4x8x32xf32>
    %123 = math.exp %122 : vector<4x8x32xf32>
    %cst_64 = arith.constant dense<0.000000e+00> : vector<4x8xf32>
    %124 = vector.multi_reduction <add>, %123, %cst_64 [2] : vector<4x8x32xf32> to vector<4x8xf32>
    %125 = vector.shape_cast %124 : vector<4x8xf32> to vector<4x8x1xf32>
    %126 = tpu.reciprocal %125 {approx = true} : vector<4x8x1xf32> -> vector<4x8x1xf32>
    %127 = vector.broadcast %126 : vector<4x8x1xf32> to vector<4x8x32xf32>
    %128 = arith.mulf %123, %127 : vector<4x8x32xf32>
    "tpu.trace_start"() <{level = 10 : i32, message = "bgc,bxc->bgx"}> : () -> ()
    %cst_65 = arith.constant dense<0.000000e+00> : vector<4x8x8xf32>
    %129 = tpu.matmul %118, %18, %cst_65 {dimension_numbers = #tpu.dot_dimension_numbers<[2], [2], [1], [1], [0, 0, 0, 1, 1, 1], [0], [0]>} : vector<4x8x32xf32>, vector<4x8x32xf32>, vector<4x8x8xf32> -> vector<4x8x8xf32>
    "tpu.trace_stop"() : () -> ()
    %cst_66 = arith.constant dense<0xFF800000> : vector<4x8xf32>
    %130 = vector.multi_reduction <maximumf>, %129, %cst_66 [2] : vector<4x8x8xf32> to vector<4x8xf32>
    %131 = vector.shape_cast %130 : vector<4x8xf32> to vector<4x8x1xf32>
    %132 = vector.broadcast %131 : vector<4x8x1xf32> to vector<4x8x8xf32>
    %133 = arith.subf %129, %132 : vector<4x8x8xf32>
    %134 = math.exp %133 : vector<4x8x8xf32>
    %cst_67 = arith.constant dense<0.000000e+00> : vector<4x8xf32>
    %135 = vector.multi_reduction <add>, %134, %cst_67 [2] : vector<4x8x8xf32> to vector<4x8xf32>
    %136 = vector.shape_cast %135 : vector<4x8xf32> to vector<4x8x1xf32>
    %137 = tpu.reciprocal %136 {approx = true} : vector<4x8x1xf32> -> vector<4x8x1xf32>
    %138 = vector.broadcast %137 : vector<4x8x1xf32> to vector<4x8x8xf32>
    %139 = arith.mulf %134, %138 : vector<4x8x8xf32>
    %cst_68 = arith.constant 0.000000e+00 : f32
    %140 = vector.broadcast %cst_68 : f32 to vector<4x8x72xf32>
    %141 = tpu.concatenate %139, %128, %6, %7, %140 in 2 : vector<4x8x8xf32>, vector<4x8x32xf32>, vector<4x8x8xf32>, vector<4x8x8xf32>, vector<4x8x72xf32> -> vector<4x8x128xf32>
    %cst_69 = arith.constant 0.000000e+00 : f32
    %142 = vector.broadcast %cst_69 : f32 to vector<4x8x96xf32>
    %143 = tpu.concatenate %18, %142 in 2 : vector<4x8x32xf32>, vector<4x8x96xf32> -> vector<4x8x128xf32>
    %144 = tpu.concatenate %141, %143 in 1 : vector<4x8x128xf32>, vector<4x8x128xf32> -> vector<4x16x128xf32>
    %c0_70 = arith.constant 0 : index
    %c0_71 = arith.constant 0 : index
    %c0_72 = arith.constant 0 : index
    %145 = vector.load %arg15[%c0_70, %c0_71, %c0_72] : memref<4x16x128xf32, #tpu.memory_space<vmem>>, vector<4x16x128xf32>
    tpu.vector_store %arg15[%c0_70, %c0_71, %c0_72], %144 {strides = array<i32>} : memref<4x16x128xf32, #tpu.memory_space<vmem>>, vector<4x16x128xf32>,
    return
  }
  func.func @transform_0(%arg0: i32) -> (i32, i32, i32) {
    %c0_i32 = arith.constant 0 : i32
    %c0_i32_0 = arith.constant 0 : i32
    %c0_i32_1 = arith.constant 0 : i32
    return %arg0, %c0_i32, %c0_i32_0 : i32, i32, i32
  }
  func.func @transform_1(%arg0: i32) -> (i32, i32) {
    %c0_i32 = arith.constant 0 : i32
    %c0_i32_0 = arith.constant 0 : i32
    %c0_i32_1 = arith.constant 0 : i32
    return %c0_i32, %c0_i32_0 : i32, i32
  }
  func.func @transform_2(%arg0: i32) -> (i32, i32) {
    %c0_i32 = arith.constant 0 : i32
    %c0_i32_0 = arith.constant 0 : i32
    %c0_i32_1 = arith.constant 0 : i32
    return %c0_i32, %c0_i32_0 : i32, i32
  }
  func.func @transform_3(%arg0: i32) -> (i32, i32) {
    %c0_i32 = arith.constant 0 : i32
    %c0_i32_0 = arith.constant 0 : i32
    %c0_i32_1 = arith.constant 0 : i32
    return %c0_i32, %c0_i32_0 : i32, i32
  }
  func.func @transform_4(%arg0: i32) -> (i32, i32) {
    %c0_i32 = arith.constant 0 : i32
    %c0_i32_0 = arith.constant 0 : i32
    %c0_i32_1 = arith.constant 0 : i32
    return %c0_i32, %c0_i32_0 : i32, i32
  }
  func.func @transform_5(%arg0: i32) -> (i32, i32) {
    %c0_i32 = arith.constant 0 : i32
    %c0_i32_0 = arith.constant 0 : i32
    %c0_i32_1 = arith.constant 0 : i32
    return %c0_i32, %c0_i32_0 : i32, i32
  }
  func.func @transform_6(%arg0: i32) -> (i32, i32) {
    %c0_i32 = arith.constant 0 : i32
    %c0_i32_0 = arith.constant 0 : i32
    %c0_i32_1 = arith.constant 0 : i32
    return %c0_i32, %c0_i32_0 : i32, i32
  }
  func.func @transform_7(%arg0: i32) -> (i32, i32) {
    %c0_i32 = arith.constant 0 : i32
    %c0_i32_0 = arith.constant 0 : i32
    %c0_i32_1 = arith.constant 0 : i32
    return %c0_i32, %c0_i32_0 : i32, i32
  }
  func.func @transform_8(%arg0: i32) -> (i32, i32) {
    %c0_i32 = arith.constant 0 : i32
    %c0_i32_0 = arith.constant 0 : i32
    %c0_i32_1 = arith.constant 0 : i32
    return %c0_i32, %c0_i32_0 : i32, i32
  }
  func.func @transform_9(%arg0: i32) -> (i32, i32) {
    %c0_i32 = arith.constant 0 : i32
    %c0_i32_0 = arith.constant 0 : i32
    %c0_i32_1 = arith.constant 0 : i32
    return %c0_i32, %c0_i32_0 : i32, i32
  }
  func.func @transform_10(%arg0: i32) -> (i32, i32) {
    %c0_i32 = arith.constant 0 : i32
    %c0_i32_0 = arith.constant 0 : i32
    %c0_i32_1 = arith.constant 0 : i32
    return %c0_i32, %c0_i32_0 : i32, i32
  }
  func.func @transform_11(%arg0: i32) -> (i32, i32) {
    %c0_i32 = arith.constant 0 : i32
    %c0_i32_0 = arith.constant 0 : i32
    %c0_i32_1 = arith.constant 0 : i32
    return %c0_i32, %c0_i32_0 : i32, i32
  }
  func.func @transform_12(%arg0: i32) -> (i32, i32) {
    %c0_i32 = arith.constant 0 : i32
    %c0_i32_0 = arith.constant 0 : i32
    %c0_i32_1 = arith.constant 0 : i32
    return %c0_i32, %c0_i32_0 : i32, i32
  }
  func.func @transform_13(%arg0: i32) -> i32 {
    %c0_i32 = arith.constant 0 : i32
    %c0_i32_0 = arith.constant 0 : i32
    return %c0_i32 : i32
  }
  func.func @transform_14(%arg0: i32) -> (i32, i32, i32) {
    %c0_i32 = arith.constant 0 : i32
    %c0_i32_0 = arith.constant 0 : i32
    %c0_i32_1 = arith.constant 0 : i32
    return %arg0, %c0_i32, %c0_i32_0 : i32, i32, i32
  }
}

</mosaic_0001>

<llo_original>
// kernel: recommender_forward_batched.1
$region0: #{recommender_forward_batched.1}
  #allocation0 [shape = 'u32[]', space=smem, size = 0x4, offset = 0x4, fixed_abs, tag = 'smem constant byte address 0x4 - core index']
  #allocation1 [shape = 'u32[144,128]{1,0:T(1,128)}', space=vmem, size = 0x12000, scoped, tag = 'internal scratch']
  %s0 = inlined_call_operand.vmem [shape: f32[8,96,128], index: 0, kind: input, shape index: {}]
  %s1 = inlined_call_operand.vmem [shape: f32[32,32], index: 1, kind: input, shape index: {}]
  %s2 = inlined_call_operand.vmem [shape: f32[32,8], index: 2, kind: input, shape index: {}]
  %s3 = inlined_call_operand.vmem [shape: f32[1,32], index: 3, kind: input, shape index: {}]
  %s4 = inlined_call_operand.vmem [shape: f32[32,32], index: 4, kind: input, shape index: {}]
  %s5 = inlined_call_operand.vmem [shape: f32[1,32], index: 5, kind: input, shape index: {}]
  %s6 = inlined_call_operand.vmem [shape: f32[32,32], index: 6, kind: input, shape index: {}]
  %s7 = inlined_call_operand.vmem [shape: f32[32,8], index: 7, kind: input, shape index: {}]
  %s8 = inlined_call_operand.vmem [shape: f32[32,8], index: 8, kind: input, shape index: {}]
  %s9 = inlined_call_operand.vmem [shape: f32[1,32], index: 9, kind: input, shape index: {}]
  %s10 = inlined_call_operand.vmem [shape: f32[32,32], index: 10, kind: input, shape index: {}]
  %s11 = inlined_call_operand.vmem [shape: f32[1,32], index: 11, kind: input, shape index: {}]
  %s12 = inlined_call_operand.vmem [shape: f32[8,32], index: 12, kind: input, shape index: {}]
  %s13 = inlined_call_operand.vmem [shape: f32[6], index: 13, kind: input, shape index: {}]
  %s14 = inlined_call_operand.vmem [shape: f32[8,16,128], index: 14, kind: output, shape index: {}]
  %s15 = sld [smem:[#allocation0]]
  $region93: #{recommender_forward_batched.1} parent=0
    _
  %s17 = ssub.s32 1, %s15
  %s18 = scalar_select 0, %s17, %s15
  $region1: #{recommender_forward_batched.1} parent=0
    #allocation2 [shape = 'u8[512]{0}', space=smem, size = 0x200, scoped, tag = 'input window, operand 13, single buffered']
    #allocation3 [shape = 's32[2]{0}', space=sflag, size = 0x8, scoped, tag = 'scoped memory for recommender_forward_batched.1']
    %19 = vsyncpa [#allocation3], 0
    loop: start=0, step=1, limit=4
    $region2: #{recommender_forward_batched.1} parent=1 // loop_pre_header
      _
    $region3: #{recommender_forward_batched.1} parent=1 // loop_header
      %s21 = sphi 0, %s25
      %p22 = scmp.ge.s32.totalorder %s21, 4
      %s31 = sphi 0, %s33
      %s34 = sphi 0, %s31
      %s35 = sphi 0, %s34
      %s51 = sphi 0, %s35
      %s55 = sphi 0, %s55
      %s57 = sphi 0, %s55
      %s58 = sphi 0, %s57
      %s72 = sphi 0, %s58
      %s76 = sphi 0, %s76
      %s78 = sphi 0, %s76
      %s79 = sphi 0, %s78
      %s93 = sphi 0, %s79
      %s97 = sphi 0, %s97
      %s99 = sphi 0, %s97
      %s100 = sphi 0, %s99
      %s114 = sphi 0, %s100
      %s118 = sphi 0, %s118
      %s120 = sphi 0, %s118
      %s121 = sphi 0, %s120
      %s135 = sphi 0, %s121
      %s139 = sphi 0, %s139
      %s141 = sphi 0, %s139
      %s142 = sphi 0, %s141
      %s156 = sphi 0, %s142
      %s160 = sphi 0, %s160
      %s162 = sphi 0, %s160
      %s163 = sphi 0, %s162
      %s177 = sphi 0, %s163
      %s181 = sphi 0, %s181
      %s183 = sphi 0, %s181
      %s184 = sphi 0, %s183
      %s198 = sphi 0, %s184
      %s202 = sphi 0, %s202
      %s204 = sphi 0, %s202
      %s205 = sphi 0, %s204
      %s219 = sphi 0, %s205
      %s223 = sphi 0, %s223
      %s225 = sphi 0, %s223
      %s226 = sphi 0, %s225
      %s240 = sphi 0, %s226
      %s244 = sphi 0, %s244
      %s246 = sphi 0, %s244
      %s247 = sphi 0, %s246
      %s261 = sphi 0, %s247
      %s265 = sphi 0, %s265
      %s267 = sphi 0, %s265
      %s268 = sphi 0, %s267
      %s282 = sphi 0, %s268
      %s286 = sphi 0, %s286
      %s288 = sphi 0, %s286
      %s289 = sphi 0, %s288
      %s303 = sphi 0, %s289
      %s307 = sphi 0, %s307
      %s309 = sphi 0, %s307
      %s310 = sphi 0, %s309
      %s324 = sphi 0, %s310
      %s330 = sphi 0, %s332
      %s333 = sphi 0, %s330
      %s334 = sphi 0, %s333
      %s350 = sphi 0, %s334
    $region4: #{recommender_forward_batched.1} parent=1 // loop_header_branch
      %24 = sbr.rel (%p22) target = $region8
    $region5: #{recommender_forward_batched.1} parent=1 // loop_body
      %s26 = ssub.s32 %s21, 1
      %s27 = ssub.s32 %s21, 2
      %s28 = sadd.s32 %s21, 1
      %s29 = ssub.s32 %s21, %s28
      %p30 = scmp.eq.s32.totalorder %s29, 0
      %s32 = sadd.s32 %s31, 1
      %s33 = scalar_select %p30, %s31, %s32
      %p36 = pneg %p30
      %p37 = scmp.eq.s32.totalorder %s21, 1
      %p38 = por %p36, %p37
      %p39 = scmp.ne.s32.totalorder %s31, %s34
      %p40 = scmp.eq.s32.totalorder %s21, 0
      %p41 = por %p39, %p40
      %p42 = scmp.ne.s32.totalorder %s31, %s34
      %p43 = scmp.eq.s32.totalorder %s26, 1
      %p44 = por %p42, %p43
      %p45 = scmp.ne.s32.totalorder %s34, %s35
      %p46 = scmp.eq.s32.totalorder %s26, 0
      %p47 = por %p45, %p46
      %p48 = scmp.ne.s32.totalorder %s34, %s35
      %p49 = scmp.eq.s32.totalorder %s27, 1
      %p50 = por %p48, %p49
      %p52 = scmp.ne.s32.totalorder %s35, %s51
      %p53 = scmp.eq.s32.totalorder %s27, 0
      %p54 = por %p52, %p53
      %s56 = sadd.s32 %s55, 1
      %p59 = scmp.eq.s32.totalorder %s21, 1
      %p60 = scmp.ne.s32.totalorder %s55, %s57
      %p61 = scmp.eq.s32.totalorder %s21, 0
      %p62 = por %p60, %p61
      %p63 = scmp.ne.s32.totalorder %s55, %s57
      %p64 = scmp.eq.s32.totalorder %s26, 1
      %p65 = por %p63, %p64
      %p66 = scmp.ne.s32.totalorder %s57, %s58
      %p67 = scmp.eq.s32.totalorder %s26, 0
      %p68 = por %p66, %p67
      %p69 = scmp.ne.s32.totalorder %s57, %s58
      %p70 = scmp.eq.s32.totalorder %s27, 1
      %p71 = por %p69, %p70
      %p73 = scmp.ne.s32.totalorder %s58, %s72
      %p74 = scmp.eq.s32.totalorder %s27, 0
      %p75 = por %p73, %p74
      %s77 = sadd.s32 %s76, 1
      %p80 = scmp.eq.s32.totalorder %s21, 1
      %p81 = scmp.ne.s32.totalorder %s76, %s78
      %p82 = scmp.eq.s32.totalorder %s21, 0
      %p83 = por %p81, %p82
      %p84 = scmp.ne.s32.totalorder %s76, %s78
      %p85 = scmp.eq.s32.totalorder %s26, 1
      %p86 = por %p84, %p85
      %p87 = scmp.ne.s32.totalorder %s78, %s79
      %p88 = scmp.eq.s32.totalorder %s26, 0
      %p89 = por %p87, %p88
      %p90 = scmp.ne.s32.totalorder %s78, %s79
      %p91 = scmp.eq.s32.totalorder %s27, 1
      %p92 = por %p90, %p91
      %p94 = scmp.ne.s32.totalorder %s79, %s93
      %p95 = scmp.eq.s32.totalorder %s27, 0
      %p96 = por %p94, %p95
      %s98 = sadd.s32 %s97, 1
      %p101 = scmp.eq.s32.totalorder %s21, 1
      %p102 = scmp.ne.s32.totalorder %s97, %s99
      %p103 = scmp.eq.s32.totalorder %s21, 0
      %p104 = por %p102, %p103
      %p105 = scmp.ne.s32.totalorder %s97, %s99
      %p106 = scmp.eq.s32.totalorder %s26, 1
      %p107 = por %p105, %p106
      %p108 = scmp.ne.s32.totalorder %s99, %s100
      %p109 = scmp.eq.s32.totalorder %s26, 0
      %p110 = por %p108, %p109
      %p111 = scmp.ne.s32.totalorder %s99, %s100
      %p112 = scmp.eq.s32.totalorder %s27, 1
      %p113 = por %p111, %p112
      %p115 = scmp.ne.s32.totalorder %s100, %s114
      %p116 = scmp.eq.s32.totalorder %s27, 0
      %p117 = por %p115, %p116
      %s119 = sadd.s32 %s118, 1
      %p122 = scmp.eq.s32.totalorder %s21, 1
      %p123 = scmp.ne.s32.totalorder %s118, %s120
      %p124 = scmp.eq.s32.totalorder %s21, 0
      %p125 = por %p123, %p124
      %p126 = scmp.ne.s32.totalorder %s118, %s120
      %p127 = scmp.eq.s32.totalorder %s26, 1
      %p128 = por %p126, %p127
      %p129 = scmp.ne.s32.totalorder %s120, %s121
      %p130 = scmp.eq.s32.totalorder %s26, 0
      %p131 = por %p129, %p130
      %p132 = scmp.ne.s32.totalorder %s120, %s121
      %p133 = scmp.eq.s32.totalorder %s27, 1
      %p134 = por %p132, %p133
      %p136 = scmp.ne.s32.totalorder %s121, %s135
      %p137 = scmp.eq.s32.totalorder %s27, 0
      %p138 = por %p136, %p137
      %s140 = sadd.s32 %s139, 1
      %p143 = scmp.eq.s32.totalorder %s21, 1
      %p144 = scmp.ne.s32.totalorder %s139, %s141
      %p145 = scmp.eq.s32.totalorder %s21, 0
      %p146 = por %p144, %p145
      %p147 = scmp.ne.s32.totalorder %s139, %s141
      %p148 = scmp.eq.s32.totalorder %s26, 1
      %p149 = por %p147, %p148
      %p150 = scmp.ne.s32.totalorder %s141, %s142
      %p151 = scmp.eq.s32.totalorder %s26, 0
      %p152 = por %p150, %p151
      %p153 = scmp.ne.s32.totalorder %s141, %s142
      %p154 = scmp.eq.s32.totalorder %s27, 1
      %p155 = por %p153, %p154
      %p157 = scmp.ne.s32.totalorder %s142, %s156
      %p158 = scmp.eq.s32.totalorder %s27, 0
      %p159 = por %p157, %p158
      %s161 = sadd.s32 %s160, 1
      %p164 = scmp.eq.s32.totalorder %s21, 1
      %p165 = scmp.ne.s32.totalorder %s160, %s162
      %p166 = scmp.eq.s32.totalorder %s21, 0
      %p167 = por %p165, %p166
      %p168 = scmp.ne.s32.totalorder %s160, %s162
      %p169 = scmp.eq.s32.totalorder %s26, 1
      %p170 = por %p168, %p169
      %p171 = scmp.ne.s32.totalorder %s162, %s163
      %p172 = scmp.eq.s32.totalorder %s26, 0
      %p173 = por %p171, %p172
      %p174 = scmp.ne.s32.totalorder %s162, %s163
      %p175 = scmp.eq.s32.totalorder %s27, 1
      %p176 = por %p174, %p175
      %p178 = scmp.ne.s32.totalorder %s163, %s177
      %p179 = scmp.eq.s32.totalorder %s27, 0
      %p180 = por %p178, %p179
      %s182 = sadd.s32 %s181, 1
      %p185 = scmp.eq.s32.totalorder %s21, 1
      %p186 = scmp.ne.s32.totalorder %s181, %s183
      %p187 = scmp.eq.s32.totalorder %s21, 0
      %p188 = por %p186, %p187
      %p189 = scmp.ne.s32.totalorder %s181, %s183
      %p190 = scmp.eq.s32.totalorder %s26, 1
      %p191 = por %p189, %p190
      %p192 = scmp.ne.s32.totalorder %s183, %s184
      %p193 = scmp.eq.s32.totalorder %s26, 0
      %p194 = por %p192, %p193
      %p195 = scmp.ne.s32.totalorder %s183, %s184
      %p196 = scmp.eq.s32.totalorder %s27, 1
      %p197 = por %p195, %p196
      %p199 = scmp.ne.s32.totalorder %s184, %s198
      %p200 = scmp.eq.s32.totalorder %s27, 0
      %p201 = por %p199, %p200
      %s203 = sadd.s32 %s202, 1
      %p206 = scmp.eq.s32.totalorder %s21, 1
      %p207 = scmp.ne.s32.totalorder %s202, %s204
      %p208 = scmp.eq.s32.totalorder %s21, 0
      %p209 = por %p207, %p208
      %p210 = scmp.ne.s32.totalorder %s202, %s204
      %p211 = scmp.eq.s32.totalorder %s26, 1
      %p212 = por %p210, %p211
      %p213 = scmp.ne.s32.totalorder %s204, %s205
      %p214 = scmp.eq.s32.totalorder %s26, 0
      %p215 = por %p213, %p214
      %p216 = scmp.ne.s32.totalorder %s204, %s205
      %p217 = scmp.eq.s32.totalorder %s27, 1
      %p218 = por %p216, %p217
      %p220 = scmp.ne.s32.totalorder %s205, %s219
      %p221 = scmp.eq.s32.totalorder %s27, 0
      %p222 = por %p220, %p221
      %s224 = sadd.s32 %s223, 1
      %p227 = scmp.eq.s32.totalorder %s21, 1
      %p228 = scmp.ne.s32.totalorder %s223, %s225
      %p229 = scmp.eq.s32.totalorder %s21, 0
      %p230 = por %p228, %p229
      %p231 = scmp.ne.s32.totalorder %s223, %s225
      %p232 = scmp.eq.s32.totalorder %s26, 1
      %p233 = por %p231, %p232
      %p234 = scmp.ne.s32.totalorder %s225, %s226
      %p235 = scmp.eq.s32.totalorder %s26, 0
      %p236 = por %p234, %p235
      %p237 = scmp.ne.s32.totalorder %s225, %s226
      %p238 = scmp.eq.s32.totalorder %s27, 1
      %p239 = por %p237, %p238
      %p241 = scmp.ne.s32.totalorder %s226, %s240
      %p242 = scmp.eq.s32.totalorder %s27, 0
      %p243 = por %p241, %p242
      %s245 = sadd.s32 %s244, 1
      %p248 = scmp.eq.s32.totalorder %s21, 1
      %p249 = scmp.ne.s32.totalorder %s244, %s246
      %p250 = scmp.eq.s32.totalorder %s21, 0
      %p251 = por %p249, %p250
      %p252 = scmp.ne.s32.totalorder %s244, %s246
      %p253 = scmp.eq.s32.totalorder %s26, 1
      %p254 = por %p252, %p253
      %p255 = scmp.ne.s32.totalorder %s246, %s247
      %p256 = scmp.eq.s32.totalorder %s26, 0
      %p257 = por %p255, %p256
      %p258 = scmp.ne.s32.totalorder %s246, %s247
      %p259 = scmp.eq.s32.totalorder %s27, 1
      %p260 = por %p258, %p259
      %p262 = scmp.ne.s32.totalorder %s247, %s261
      %p263 = scmp.eq.s32.totalorder %s27, 0
      %p264 = por %p262, %p263
      %s266 = sadd.s32 %s265, 1
      %p269 = scmp.eq.s32.totalorder %s21, 1
      %p270 = scmp.ne.s32.totalorder %s265, %s267
      %p271 = scmp.eq.s32.totalorder %s21, 0
      %p272 = por %p270, %p271
      %p273 = scmp.ne.s32.totalorder %s265, %s267
      %p274 = scmp.eq.s32.totalorder %s26, 1
      %p275 = por %p273, %p274
      %p276 = scmp.ne.s32.totalorder %s267, %s268
      %p277 = scmp.eq.s32.totalorder %s26, 0
      %p278 = por %p276, %p277
      %p279 = scmp.ne.s32.totalorder %s267, %s268
      %p280 = scmp.eq.s32.totalorder %s27, 1
      %p281 = por %p279, %p280
      %p283 = scmp.ne.s32.totalorder %s268, %s282
      %p284 = scmp.eq.s32.totalorder %s27, 0
      %p285 = por %p283, %p284
      %s287 = sadd.s32 %s286, 1
      %p290 = scmp.eq.s32.totalorder %s21, 1
      %p291 = scmp.ne.s32.totalorder %s286, %s288
      %p292 = scmp.eq.s32.totalorder %s21, 0
      %p293 = por %p291, %p292
      %p294 = scmp.ne.s32.totalorder %s286, %s288
      %p295 = scmp.eq.s32.totalorder %s26, 1
      %p296 = por %p294, %p295
      %p297 = scmp.ne.s32.totalorder %s288, %s289
      %p298 = scmp.eq.s32.totalorder %s26, 0
      %p299 = por %p297, %p298
      %p300 = scmp.ne.s32.totalorder %s288, %s289
      %p301 = scmp.eq.s32.totalorder %s27, 1
      %p302 = por %p300, %p301
      %p304 = scmp.ne.s32.totalorder %s289, %s303
      %p305 = scmp.eq.s32.totalorder %s27, 0
      %p306 = por %p304, %p305
      %s308 = sadd.s32 %s307, 1
      %p311 = scmp.eq.s32.totalorder %s21, 1
      %p312 = scmp.ne.s32.totalorder %s307, %s309
      %p313 = scmp.eq.s32.totalorder %s21, 0
      %p314 = por %p312, %p313
      %p315 = scmp.ne.s32.totalorder %s307, %s309
      %p316 = scmp.eq.s32.totalorder %s26, 1
      %p317 = por %p315, %p316
      %p318 = scmp.ne.s32.totalorder %s309, %s310
      %p319 = scmp.eq.s32.totalorder %s26, 0
      %p320 = por %p318, %p319
      %p321 = scmp.ne.s32.totalorder %s309, %s310
      %p322 = scmp.eq.s32.totalorder %s27, 1
      %p323 = por %p321, %p322
      %p325 = scmp.ne.s32.totalorder %s310, %s324
      %p326 = scmp.eq.s32.totalorder %s27, 0
      %p327 = por %p325, %p326
      %s328 = ssub.s32 %s21, %s28
      %p329 = scmp.eq.s32.totalorder %s328, 0
      %s331 = sadd.s32 %s330, 1
      %s332 = scalar_select %p329, %s330, %s331
      %p335 = pneg %p329
      %p336 = scmp.eq.s32.totalorder %s21, 1
      %p337 = por %p335, %p336
      %p338 = scmp.ne.s32.totalorder %s330, %s333
      %p339 = scmp.eq.s32.totalorder %s21, 0
      %p340 = por %p338, %p339
      %p341 = scmp.ne.s32.totalorder %s330, %s333
      %p342 = scmp.eq.s32.totalorder %s26, 1
      %p343 = por %p341, %p342
      %p344 = scmp.ne.s32.totalorder %s333, %s334
      %p345 = scmp.eq.s32.totalorder %s26, 0
      %p346 = por %p344, %p345
      %p347 = scmp.ne.s32.totalorder %s333, %s334
      %p348 = scmp.eq.s32.totalorder %s27, 1
      %p349 = por %p347, %p348
      %p351 = scmp.ne.s32.totalorder %s334, %s350
      %p352 = scmp.eq.s32.totalorder %s27, 0
      %p353 = por %p351, %p352
      %p354 = scmp.le.s32.totalorder 1, %s21
      %p355 = scmp.lt.s32.totalorder %s21, 3
      %p356 = pnand %p354, %p355
      %p357 = pneg %p356
      // Predicated region
      $region9: #{recommender_forward_batched.1} parent=5 // pred_check
        _
      $region10: #{recommender_forward_batched.1} parent=5 // pred_check_branch
        %359 = sbr.rel (%p356) target = $region12
      $region11: #{recommender_forward_batched.1} parent=5 // pred_region
        %s360 = ssub.s32 %s21, 1
        // Predicated region
        $region13: #{recommender_forward_batched.1} parent=11 // pred_check
          %p361 = pneg %p68
        $region14: #{recommender_forward_batched.1} parent=11 // pred_check_branch
          %363 = sbr.rel (%p361) target = $region16
        $region15: #{recommender_forward_batched.1} parent=11 // pred_region
          _
        $region16: #{recommender_forward_batched.1} parent=11 // pred_fallthru
          _
        // Predicated region
        $region17: #{recommender_forward_batched.1} parent=11 // pred_check
          %p364 = pneg %p89
        $region18: #{recommender_forward_batched.1} parent=11 // pred_check_branch
          %366 = sbr.rel (%p364) target = $region20
        $region19: #{recommender_forward_batched.1} parent=11 // pred_region
          _
        $region20: #{recommender_forward_batched.1} parent=11 // pred_fallthru
          _
        // Predicated region
        $region21: #{recommender_forward_batched.1} parent=11 // pred_check
          %p367 = pneg %p110
        $region22: #{recommender_forward_batched.1} parent=11 // pred_check_branch
          %369 = sbr.rel (%p367) target = $region24
        $region23: #{recommender_forward_batched.1} parent=11 // pred_region
          _
        $region24: #{recommender_forward_batched.1} parent=11 // pred_fallthru
          _
        // Predicated region
        $region25: #{recommender_forward_batched.1} parent=11 // pred_check
          %p370 = pneg %p131
        $region26: #{recommender_forward_batched.1} parent=11 // pred_check_branch
          %372 = sbr.rel (%p370) target = $region28
        $region27: #{recommender_forward_batched.1} parent=11 // pred_region
          _
        $region28: #{recommender_forward_batched.1} parent=11 // pred_fallthru
          _
        // Predicated region
        $region29: #{recommender_forward_batched.1} parent=11 // pred_check
          %p373 = pneg %p152
        $region30: #{recommender_forward_batched.1} parent=11 // pred_check_branch
          %375 = sbr.rel (%p373) target = $region32
        $region31: #{recommender_forward_batched.1} parent=11 // pred_region
          _
        $region32: #{recommender_forward_batched.1} parent=11 // pred_fallthru
          _
        // Predicated region
        $region33: #{recommender_forward_batched.1} parent=11 // pred_check
          %p376 = pneg %p173
        $region34: #{recommender_forward_batched.1} parent=11 // pred_check_branch
          %378 = sbr.rel (%p376) target = $region36
        $region35: #{recommender_forward_batched.1} parent=11 // pred_region
          _
        $region36: #{recommender_forward_batched.1} parent=11 // pred_fallthru
          _
        // Predicated region
        $region37: #{recommender_forward_batched.1} parent=11 // pred_check
          %p379 = pneg %p194
        $region38: #{recommender_forward_batched.1} parent=11 // pred_check_branch
          %381 = sbr.rel (%p379) target = $region40
        $region39: #{recommender_forward_batched.1} parent=11 // pred_region
          _
        $region40: #{recommender_forward_batched.1} parent=11 // pred_fallthru
          _
        // Predicated region
        $region41: #{recommender_forward_batched.1} parent=11 // pred_check
          %p382 = pneg %p215
        $region42: #{recommender_forward_batched.1} parent=11 // pred_check_branch
          %384 = sbr.rel (%p382) target = $region44
        $region43: #{recommender_forward_batched.1} parent=11 // pred_region
          _
        $region44: #{recommender_forward_batched.1} parent=11 // pred_fallthru
          _
        // Predicated region
        $region45: #{recommender_forward_batched.1} parent=11 // pred_check
          %p385 = pneg %p236
        $region46: #{recommender_forward_batched.1} parent=11 // pred_check_branch
          %387 = sbr.rel (%p385) target = $region48
        $region47: #{recommender_forward_batched.1} parent=11 // pred_region
          _
        $region48: #{recommender_forward_batched.1} parent=11 // pred_fallthru
          _
        // Predicated region
        $region49: #{recommender_forward_batched.1} parent=11 // pred_check
          %p388 = pneg %p257
        $region50: #{recommender_forward_batched.1} parent=11 // pred_check_branch
          %390 = sbr.rel (%p388) target = $region52
        $region51: #{recommender_forward_batched.1} parent=11 // pred_region
          _
        $region52: #{recommender_forward_batched.1} parent=11 // pred_fallthru
          _
        // Predicated region
        $region53: #{recommender_forward_batched.1} parent=11 // pred_check
          %p391 = pneg %p278
        $region54: #{recommender_forward_batched.1} parent=11 // pred_check_branch
          %393 = sbr.rel (%p391) target = $region56
        $region55: #{recommender_forward_batched.1} parent=11 // pred_region
          _
        $region56: #{recommender_forward_batched.1} parent=11 // pred_fallthru
          _
        // Predicated region
        $region57: #{recommender_forward_batched.1} parent=11 // pred_check
          %p394 = pneg %p299
        $region58: #{recommender_forward_batched.1} parent=11 // pred_check_branch
          %396 = sbr.rel (%p394) target = $region60
        $region59: #{recommender_forward_batched.1} parent=11 // pred_region
          _
        $region60: #{recommender_forward_batched.1} parent=11 // pred_fallthru
          _
        // Predicated region
        $region61: #{recommender_forward_batched.1} parent=11 // pred_check
          %p397 = pneg %p320
        $region62: #{recommender_forward_batched.1} parent=11 // pred_check_branch
          %399 = sbr.rel (%p397) target = $region64
        $region63: #{recommender_forward_batched.1} parent=11 // pred_region
          %s401 = ssub.s32 16, 16
          %402 = vsyncadd [#allocation3], %s401
          %s404 = sshll.u32 %s13, 4
          %s405 = int_to_ptr.vmem [resolvable:$true] %s404
          %407 = dma.vmem_to_smem %s405, 16, [#allocation2], [#allocation3]
        $region64: #{recommender_forward_batched.1} parent=11 // pred_fallthru
          _
      $region12: #{recommender_forward_batched.1} parent=5 // pred_fallthru
        _
      %p408 = scmp.lt.s32.totalorder %s21, 2
      // Predicated region
      $region65: #{recommender_forward_batched.1} parent=5 // pred_check
        %p409 = pneg %p408
      $region66: #{recommender_forward_batched.1} parent=5 // pred_check_branch
        %411 = sbr.rel (%p409) target = $region68
      $region67: #{recommender_forward_batched.1} parent=5 // pred_region
        // Predicated region
        $region69: #{recommender_forward_batched.1} parent=67 // pred_check
          %p412 = pneg %p41
        $region70: #{recommender_forward_batched.1} parent=67 // pred_check_branch
          %414 = sbr.rel (%p412) target = $region72
        $region71: #{recommender_forward_batched.1} parent=67 // pred_region
          %s415 = smul.u32 4, %s21
          %p416 = scmp.lt.s32.totalorder %s415, 7
          %s417 = scalar_select %p416, %s415, 7
          %s418 = smul.addr %s417, 12
          %s419 = smul.addr %s418, 8
          %s420 = scalar_lea.vmem %s0, %s419
          %s421 = smul.u32 4, %s21
        $region72: #{recommender_forward_batched.1} parent=67 // pred_fallthru
          _
      $region68: #{recommender_forward_batched.1} parent=5 // pred_fallthru
        _
      %p422 = scmp.le.s32.totalorder 1, %s21
      %p423 = scmp.lt.s32.totalorder %s21, 3
      %p424 = pnand %p422, %p423
      %p425 = pneg %p424
      // Predicated region
      $region73: #{recommender_forward_batched.1} parent=5 // pred_check
        _
      $region74: #{recommender_forward_batched.1} parent=5 // pred_check_branch
        %427 = sbr.rel (%p424) target = $region76
      $region75: #{recommender_forward_batched.1} parent=5 // pred_region
        %s428 = ssub.s32 %s21, 1
        // Predicated region
        $region77: #{recommender_forward_batched.1} parent=75 // pred_check
          %p429 = pneg %p320
        $region78: #{recommender_forward_batched.1} parent=75 // pred_check_branch
          %431 = sbr.rel (%p429) target = $region80
        $region79: #{recommender_forward_batched.1} parent=75 // pred_region
          %432 = dma.done [#allocation3], 16
        $region80: #{recommender_forward_batched.1} parent=75 // pred_fallthru
          _
        %433 = sfence
        %s434 = smul.u32 4, %s26
        %p435 = scmp.lt.s32.totalorder %s434, 7
        %s436 = scalar_select %p435, %s434, 7
        %s437 = smul.addr %s436, 12
        %s438 = smul.addr %s437, 8
        %s439 = scalar_lea.vmem %s0, %s438
        %p440 = pneg %p47
        %p441 = pneg %p44
        %p442 = pneg %p68
        %p443 = pneg %p65
        %p444 = pneg %p89
        %p445 = pneg %p86
        %p446 = pneg %p110
        %p447 = pneg %p107
        %p448 = pneg %p131
        %p449 = pneg %p128
        %p450 = pneg %p152
        %p451 = pneg %p149
        %p452 = pneg %p173
        %p453 = pneg %p170
        %p454 = pneg %p194
        %p455 = pneg %p191
        %p456 = pneg %p215
        %p457 = pneg %p212
        %p458 = pneg %p236
        %p459 = pneg %p233
        %p460 = pneg %p257
        %p461 = pneg %p254
        %p462 = pneg %p278
        %p463 = pneg %p275
        %p464 = pneg %p299
        %p465 = pneg %p296
        %p466 = pneg %p320
        %p467 = pneg %p317
        %p468 = pneg %p346
        %p469 = pneg %p343
        %s470 = smul.u32 4, %s26
        %p471 = scmp.lt.s32.totalorder %s470, 7
        %s472 = scalar_select %p471, %s470, 7
        %s473 = smul.addr %s472, 2
        %s474 = smul.addr %s473, 8
        %s475 = scalar_lea.vmem %s14, %s474
        %s476 = smul.u32 4, %s26
        %p477 = scmp.lt.s32.totalorder %s476, 7
        %s478 = scalar_select %p477, %s476, 7
        %s479 = smul.addr %s478, 12
        %s480 = smul.addr %s479, 8
        %s481 = scalar_lea.vmem %s0, %s480
        %s482 = smul.u32 4, %s26
        %s483 = smul.u32 4, %s26
        %p484 = scmp.lt.s32.totalorder %s483, 7
        %s485 = scalar_select %p484, %s483, 7
        %s486 = smul.addr %s485, 2
        %s487 = smul.addr %s486, 8
        %s488 = scalar_lea.vmem %s14, %s487
        %s489 = smul.u32 4, %s26
        %v490 = vld [vmem:[%s481] sm:$0xff]
        %v491 = vld [vmem:[%s481 + $0x60] sm:$0xff]
        %v492 = vld [vmem:[%s481 + $0xc0] sm:$0xff]
        %v493 = vld [vmem:[%s481 + $0x120] sm:$0xff]
        %v494 = vld [vmem:[%s481 + $0x8] sm:$0xff]
        %v495 = vld [vmem:[%s481 + $0x68] sm:$0xff]
        %v496 = vld [vmem:[%s481 + $0xc8] sm:$0xff]
        %v497 = vld [vmem:[%s481 + $0x128] sm:$0xff]
        %v498 = vld [vmem:[%s481 + $0x10] sm:$0xff]
        %v499 = vld [vmem:[%s481 + $0x70] sm:$0xff]
        %v500 = vld [vmem:[%s481 + $0xd0] sm:$0xff]
        %v501 = vld [vmem:[%s481 + $0x130] sm:$0xff]
        %v502 = vld [vmem:[%s481 + $0x18] sm:$0xff]
        %v503 = vld [vmem:[%s481 + $0x78] sm:$0xff]
        %v504 = vld [vmem:[%s481 + $0xd8] sm:$0xff]
        %v505 = vld [vmem:[%s481 + $0x138] sm:$0xff]
        %v506 = vld [vmem:[%s481 + $0x20] sm:$0xff]
        %v507 = vld [vmem:[%s481 + $0x28] sm:$0xff]
        %v508 = vld [vmem:[%s481 + $0x30] sm:$0xff]
        %v509 = vld [vmem:[%s481 + $0x38] sm:$0xff]
        %v510 = vld [vmem:[%s481 + $0x80] sm:$0xff]
        %v511 = vld [vmem:[%s481 + $0x88] sm:$0xff]
        %v512 = vld [vmem:[%s481 + $0x90] sm:$0xff]
        %v513 = vld [vmem:[%s481 + $0x98] sm:$0xff]
        %v514 = vld [vmem:[%s481 + $0xe0] sm:$0xff]
        %v515 = vld [vmem:[%s481 + $0xe8] sm:$0xff]
        %v516 = vld [vmem:[%s481 + $0xf0] sm:$0xff]
        %v517 = vld [vmem:[%s481 + $0xf8] sm:$0xff]
        %v518 = vld [vmem:[%s481 + $0x140] sm:$0xff]
        %v519 = vld [vmem:[%s481 + $0x148] sm:$0xff]
        %v520 = vld [vmem:[%s481 + $0x150] sm:$0xff]
        %v521 = vld [vmem:[%s481 + $0x158] sm:$0xff]
        %v522 = vld [vmem:[%s481 + $0x40] sm:$0xff]
        %v523 = vld [vmem:[%s481 + $0x48] sm:$0xff]
        %v524 = vld [vmem:[%s481 + $0x50] sm:$0xff]
        %v525 = vld [vmem:[%s481 + $0x58] sm:$0xff]
        %v526 = vld [vmem:[%s481 + $0xa0] sm:$0xff]
        %v527 = vld [vmem:[%s481 + $0xa8] sm:$0xff]
        %v528 = vld [vmem:[%s481 + $0xb0] sm:$0xff]
        %v529 = vld [vmem:[%s481 + $0xb8] sm:$0xff]
        %v530 = vld [vmem:[%s481 + $0x100] sm:$0xff]
        %v531 = vld [vmem:[%s481 + $0x108] sm:$0xff]
        %v532 = vld [vmem:[%s481 + $0x110] sm:$0xff]
        %v533 = vld [vmem:[%s481 + $0x118] sm:$0xff]
        %v534 = vld [vmem:[%s481 + $0x160] sm:$0xff]
        %v535 = vld [vmem:[%s481 + $0x168] sm:$0xff]
        %v536 = vld [vmem:[%s481 + $0x170] sm:$0xff]
        %v537 = vld [vmem:[%s481 + $0x178] sm:$0xff]
        %vm538 = vcmask 130048
        %v540 = vsel %vm538, %v490, 0
        %542 = vmatprep.subr.mxu0 0.0
        %543 = vmatpush1.xpose.msra.mxu0 0.0
        %544 = vmatprep.subr.mxu0 0.0
        %545 = vmatpush1.xpose.msra.mxu0 0.0
        %546 = vmatprep.subr.mxu0 0.0
        %547 = vmatpush1.xpose.msra.mxu0 0.0
        %548 = vmatprep.subr.mxu0 0.0
        %549 = vmatpush1.xpose.msra.mxu0 0.0
        %550 = vmatprep.subr.mxu0 0.0
        %551 = vmatpush1.xpose.msra.mxu0 0.0
        %552 = vmatprep.subr.mxu0 0.0
        %553 = vmatpush1.xpose.msra.mxu0 0.0
        %554 = vmatprep.subr.mxu0 0.0
        %555 = vmatpush1.xpose.msra.mxu0 0.0
        %556 = vmatprep.subr.mxu0 0.0
        %557 = vmatpush1.xpose.msra.mxu0 0.0
        %558 = vmatprep.subr.mxu0 0.0
        %559 = vmatpush1.xpose.msra.mxu0 0.0
        %560 = vmatprep.subr.mxu0 0.0
        %561 = vmatpush1.xpose.msra.mxu0 0.0
        %562 = vmatprep.subr.mxu0 0.0
        %563 = vmatpush1.xpose.msra.mxu0 0.0
        %564 = vmatprep.subr.mxu0 0.0
        %565 = vmatpush1.xpose.msra.mxu0 0.0
        %566 = vmatprep.subr.mxu0 0.0
        %567 = vmatpush1.xpose.msra.mxu0 0.0
        %568 = vmatprep.subr.mxu0 0.0
        %569 = vmatpush1.xpose.msra.mxu0 0.0
        %570 = vmatprep.subr.mxu0 0.0
        %571 = vmatpush1.xpose.msra.mxu0 0.0
        %572 = vmatprep.subr.mxu0 0.0
        %573 = vmatpush1.xpose.msra.mxu0 %v540
        %574 = vmatprep.subr.mxu0 0.0
        %575 = vmatpush2.xpose.msra.mxu0 0.0
        %576 = vmatprep.subr.mxu0 0.0
        %577 = vmatpush2.xpose.msra.mxu0 0.0
        %578 = vmatprep.subr.mxu0 0.0
        %579 = vmatpush2.xpose.msra.mxu0 0.0
        %580 = vmatprep.subr.mxu0 0.0
        %581 = vmatpush2.xpose.msra.mxu0 0.0
        %582 = vmatprep.subr.mxu0 0.0
        %583 = vmatpush2.xpose.msra.mxu0 0.0
        %584 = vmatprep.subr.mxu0 0.0
        %585 = vmatpush2.xpose.msra.mxu0 0.0
        %586 = vmatprep.subr.mxu0 0.0
        %587 = vmatpush2.xpose.msra.mxu0 0.0
        %588 = vmatprep.subr.mxu0 0.0
        %589 = vmatpush2.xpose.msra.mxu0 0.0
        %590 = vmatprep.subr.mxu0 0.0
        %591 = vmatpush2.xpose.msra.mxu0 0.0
        %592 = vmatprep.subr.mxu0 0.0
        %593 = vmatpush2.xpose.msra.mxu0 0.0
        %594 = vmatprep.subr.mxu0 0.0
        %595 = vmatpush2.xpose.msra.mxu0 0.0
        %596 = vmatprep.subr.mxu0 0.0
        %597 = vmatpush2.xpose.msra.mxu0 0.0
        %598 = vmatprep.subr.mxu0 0.0
        %599 = vmatpush2.xpose.msra.mxu0 0.0
        %600 = vmatprep.subr.mxu0 0.0
        %601 = vmatpush2.xpose.msra.mxu0 0.0
        %602 = vmatprep.subr.mxu0 0.0
        %603 = vmatpush2.xpose.msra.mxu0 0.0
        %604 = vmatprep.subr.mxu0 0.0
        %605 = vmatpush2.xpose.msra.mxu0 0.0
        %606 = vmatprep.mubr.f32.mxu0 0.0
        %607 = vmatmul.mubr.f32.gmra.mxu0 %v540
        %v608 = vpop.f32.mrf.mxu0
        %v609 = vadd.f32 0.0, %v608
        %v610 = vpop.f32.mrf.mxu0
        %611 = vdwg.mxu0
        %v613 = vsel %vm538, %v491, 0
        %615 = vmatprep.subr.mxu0 0.0
        %616 = vmatpush1.xpose.msra.mxu0 0.0
        %617 = vmatprep.subr.mxu0 0.0
        %618 = vmatpush1.xpose.msra.mxu0 0.0
        %619 = vmatprep.subr.mxu0 0.0
        %620 = vmatpush1.xpose.msra.mxu0 0.0
        %621 = vmatprep.subr.mxu0 0.0
        %622 = vmatpush1.xpose.msra.mxu0 0.0
        %623 = vmatprep.subr.mxu0 0.0
        %624 = vmatpush1.xpose.msra.mxu0 0.0
        %625 = vmatprep.subr.mxu0 0.0
        %626 = vmatpush1.xpose.msra.mxu0 0.0
        %627 = vmatprep.subr.mxu0 0.0
        %628 = vmatpush1.xpose.msra.mxu0 0.0
        %629 = vmatprep.subr.mxu0 0.0
        %630 = vmatpush1.xpose.msra.mxu0 0.0
        %631 = vmatprep.subr.mxu0 0.0
        %632 = vmatpush1.xpose.msra.mxu0 0.0
        %633 = vmatprep.subr.mxu0 0.0
        %634 = vmatpush1.xpose.msra.mxu0 0.0
        %635 = vmatprep.subr.mxu0 0.0
        %636 = vmatpush1.xpose.msra.mxu0 0.0
        %637 = vmatprep.subr.mxu0 0.0
        %638 = vmatpush1.xpose.msra.mxu0 0.0
        %639 = vmatprep.subr.mxu0 0.0
        %640 = vmatpush1.xpose.msra.mxu0 0.0
        %641 = vmatprep.subr.mxu0 0.0
        %642 = vmatpush1.xpose.msra.mxu0 0.0
        %643 = vmatprep.subr.mxu0 0.0
        %644 = vmatpush1.xpose.msra.mxu0 0.0
        %645 = vmatprep.subr.mxu0 0.0
        %646 = vmatpush1.xpose.msra.mxu0 %v613
        %647 = vmatprep.subr.mxu0 0.0
        %648 = vmatpush2.xpose.msra.mxu0 0.0
        %649 = vmatprep.subr.mxu0 0.0
        %650 = vmatpush2.xpose.msra.mxu0 0.0
        %651 = vmatprep.subr.mxu0 0.0
        %652 = vmatpush2.xpose.msra.mxu0 0.0
        %653 = vmatprep.subr.mxu0 0.0
        %654 = vmatpush2.xpose.msra.mxu0 0.0
        %655 = vmatprep.subr.mxu0 0.0
        %656 = vmatpush2.xpose.msra.mxu0 0.0
        %657 = vmatprep.subr.mxu0 0.0
        %658 = vmatpush2.xpose.msra.mxu0 0.0
        %659 = vmatprep.subr.mxu0 0.0
        %660 = vmatpush2.xpose.msra.mxu0 0.0
        %661 = vmatprep.subr.mxu0 0.0
        %662 = vmatpush2.xpose.msra.mxu0 0.0
        %663 = vmatprep.subr.mxu0 0.0
        %664 = vmatpush2.xpose.msra.mxu0 0.0
        %665 = vmatprep.subr.mxu0 0.0
        %666 = vmatpush2.xpose.msra.mxu0 0.0
        %667 = vmatprep.subr.mxu0 0.0
        %668 = vmatpush2.xpose.msra.mxu0 0.0
        %669 = vmatprep.subr.mxu0 0.0
        %670 = vmatpush2.xpose.msra.mxu0 0.0
        %671 = vmatprep.subr.mxu0 0.0
        %672 = vmatpush2.xpose.msra.mxu0 0.0
        %673 = vmatprep.subr.mxu0 0.0
        %674 = vmatpush2.xpose.msra.mxu0 0.0
        %675 = vmatprep.subr.mxu0 0.0
        %676 = vmatpush2.xpose.msra.mxu0 0.0
        %677 = vmatprep.subr.mxu0 0.0
        %678 = vmatpush2.xpose.msra.mxu0 0.0
        %679 = vmatprep.mubr.f32.mxu0 0.0
        %680 = vmatmul.mubr.f32.gmra.mxu0 %v613
        %v681 = vpop.f32.mrf.mxu0
        %v682 = vadd.f32 0.0, %v681
        %v683 = vpop.f32.mrf.mxu0
        %684 = vdwg.mxu0
        %v686 = vsel %vm538, %v492, 0
        %688 = vmatprep.subr.mxu0 0.0
        %689 = vmatpush1.xpose.msra.mxu0 0.0
        %690 = vmatprep.subr.mxu0 0.0
        %691 = vmatpush1.xpose.msra.mxu0 0.0
        %692 = vmatprep.subr.mxu0 0.0
        %693 = vmatpush1.xpose.msra.mxu0 0.0
        %694 = vmatprep.subr.mxu0 0.0
        %695 = vmatpush1.xpose.msra.mxu0 0.0
        %696 = vmatprep.subr.mxu0 0.0
        %697 = vmatpush1.xpose.msra.mxu0 0.0
        %698 = vmatprep.subr.mxu0 0.0
        %699 = vmatpush1.xpose.msra.mxu0 0.0
        %700 = vmatprep.subr.mxu0 0.0
        %701 = vmatpush1.xpose.msra.mxu0 0.0
        %702 = vmatprep.subr.mxu0 0.0
        %703 = vmatpush1.xpose.msra.mxu0 0.0
        %704 = vmatprep.subr.mxu0 0.0
        %705 = vmatpush1.xpose.msra.mxu0 0.0
        %706 = vmatprep.subr.mxu0 0.0
        %707 = vmatpush1.xpose.msra.mxu0 0.0
        %708 = vmatprep.subr.mxu0 0.0
        %709 = vmatpush1.xpose.msra.mxu0 0.0
        %710 = vmatprep.subr.mxu0 0.0
        %711 = vmatpush1.xpose.msra.mxu0 0.0
        %712 = vmatprep.subr.mxu0 0.0
        %713 = vmatpush1.xpose.msra.mxu0 0.0
        %714 = vmatprep.subr.mxu0 0.0
        %715 = vmatpush1.xpose.msra.mxu0 0.0
        %716 = vmatprep.subr.mxu0 0.0
        %717 = vmatpush1.xpose.msra.mxu0 0.0
        %718 = vmatprep.subr.mxu0 0.0
        %719 = vmatpush1.xpose.msra.mxu0 %v686
        %720 = vmatprep.subr.mxu0 0.0
        %721 = vmatpush2.xpose.msra.mxu0 0.0
        %722 = vmatprep.subr.mxu0 0.0
        %723 = vmatpush2.xpose.msra.mxu0 0.0
        %724 = vmatprep.subr.mxu0 0.0
        %725 = vmatpush2.xpose.msra.mxu0 0.0
        %726 = vmatprep.subr.mxu0 0.0
        %727 = vmatpush2.xpose.msra.mxu0 0.0
        %728 = vmatprep.subr.mxu0 0.0
        %729 = vmatpush2.xpose.msra.mxu0 0.0
        %730 = vmatprep.subr.mxu0 0.0
        %731 = vmatpush2.xpose.msra.mxu0 0.0
        %732 = vmatprep.subr.mxu0 0.0
        %733 = vmatpush2.xpose.msra.mxu0 0.0
        %734 = vmatprep.subr.mxu0 0.0
        %735 = vmatpush2.xpose.msra.mxu0 0.0
        %736 = vmatprep.subr.mxu0 0.0
        %737 = vmatpush2.xpose.msra.mxu0 0.0
        %738 = vmatprep.subr.mxu0 0.0
        %739 = vmatpush2.xpose.msra.mxu0 0.0
        %740 = vmatprep.subr.mxu0 0.0
        %741 = vmatpush2.xpose.msra.mxu0 0.0
        %742 = vmatprep.subr.mxu0 0.0
        %743 = vmatpush2.xpose.msra.mxu0 0.0
        %744 = vmatprep.subr.mxu0 0.0
        %745 = vmatpush2.xpose.msra.mxu0 0.0
        %746 = vmatprep.subr.mxu0 0.0
        %747 = vmatpush2.xpose.msra.mxu0 0.0
        %748 = vmatprep.subr.mxu0 0.0
        %749 = vmatpush2.xpose.msra.mxu0 0.0
        %750 = vmatprep.subr.mxu0 0.0
        %751 = vmatpush2.xpose.msra.mxu0 0.0
        %752 = vmatprep.mubr.f32.mxu0 0.0
        %753 = vmatmul.mubr.f32.gmra.mxu0 %v686
        %v754 = vpop.f32.mrf.mxu0
        %v755 = vadd.f32 0.0, %v754
        %v756 = vpop.f32.mrf.mxu0
        %757 = vdwg.mxu0
        %v759 = vsel %vm538, %v493, 0
        %761 = vmatprep.subr.mxu0 0.0
        %762 = vmatpush1.xpose.msra.mxu0 0.0
        %763 = vmatprep.subr.mxu0 0.0
        %764 = vmatpush1.xpose.msra.mxu0 0.0
        %765 = vmatprep.subr.mxu0 0.0
        %766 = vmatpush1.xpose.msra.mxu0 0.0
        %767 = vmatprep.subr.mxu0 0.0
        %768 = vmatpush1.xpose.msra.mxu0 0.0
        %769 = vmatprep.subr.mxu0 0.0
        %770 = vmatpush1.xpose.msra.mxu0 0.0
        %771 = vmatprep.subr.mxu0 0.0
        %772 = vmatpush1.xpose.msra.mxu0 0.0
        %773 = vmatprep.subr.mxu0 0.0
        %774 = vmatpush1.xpose.msra.mxu0 0.0
        %775 = vmatprep.subr.mxu0 0.0
        %776 = vmatpush1.xpose.msra.mxu0 0.0
        %777 = vmatprep.subr.mxu0 0.0
        %778 = vmatpush1.xpose.msra.mxu0 0.0
        %779 = vmatprep.subr.mxu0 0.0
        %780 = vmatpush1.xpose.msra.mxu0 0.0
        %781 = vmatprep.subr.mxu0 0.0
        %782 = vmatpush1.xpose.msra.mxu0 0.0
        %783 = vmatprep.subr.mxu0 0.0
        %784 = vmatpush1.xpose.msra.mxu0 0.0
        %785 = vmatprep.subr.mxu0 0.0
        %786 = vmatpush1.xpose.msra.mxu0 0.0
        %787 = vmatprep.subr.mxu0 0.0
        %788 = vmatpush1.xpose.msra.mxu0 0.0
        %789 = vmatprep.subr.mxu0 0.0
        %790 = vmatpush1.xpose.msra.mxu0 0.0
        %791 = vmatprep.subr.mxu0 0.0
        %792 = vmatpush1.xpose.msra.mxu0 %v759
        %793 = vmatprep.subr.mxu0 0.0
        %794 = vmatpush2.xpose.msra.mxu0 0.0
        %795 = vmatprep.subr.mxu0 0.0
        %796 = vmatpush2.xpose.msra.mxu0 0.0
        %797 = vmatprep.subr.mxu0 0.0
        %798 = vmatpush2.xpose.msra.mxu0 0.0
        %799 = vmatprep.subr.mxu0 0.0
        %800 = vmatpush2.xpose.msra.mxu0 0.0
        %801 = vmatprep.subr.mxu0 0.0
        %802 = vmatpush2.xpose.msra.mxu0 0.0
        %803 = vmatprep.subr.mxu0 0.0
        %804 = vmatpush2.xpose.msra.mxu0 0.0
        %805 = vmatprep.subr.mxu0 0.0
        %806 = vmatpush2.xpose.msra.mxu0 0.0
        %807 = vmatprep.subr.mxu0 0.0
        %808 = vmatpush2.xpose.msra.mxu0 0.0
        %809 = vmatprep.subr.mxu0 0.0
        %810 = vmatpush2.xpose.msra.mxu0 0.0
        %811 = vmatprep.subr.mxu0 0.0
        %812 = vmatpush2.xpose.msra.mxu0 0.0
        %813 = vmatprep.subr.mxu0 0.0
        %814 = vmatpush2.xpose.msra.mxu0 0.0
        %815 = vmatprep.subr.mxu0 0.0
        %816 = vmatpush2.xpose.msra.mxu0 0.0
        %817 = vmatprep.subr.mxu0 0.0
        %818 = vmatpush2.xpose.msra.mxu0 0.0
        %819 = vmatprep.subr.mxu0 0.0
        %820 = vmatpush2.xpose.msra.mxu0 0.0
        %821 = vmatprep.subr.mxu0 0.0
        %822 = vmatpush2.xpose.msra.mxu0 0.0
        %823 = vmatprep.subr.mxu0 0.0
        %824 = vmatpush2.xpose.msra.mxu0 0.0
        %825 = vmatprep.mubr.f32.mxu0 0.0
        %826 = vmatmul.mubr.f32.gmra.mxu0 %v759
        %v827 = vpop.f32.mrf.mxu0
        %v828 = vadd.f32 0.0, %v827
        %v829 = vpop.f32.mrf.mxu0
        %830 = vdwg.mxu0
        %v832 = vsel %vm538, %v494, 0
        %834 = vmatprep.subr.mxu0 0.0
        %835 = vmatpush1.xpose.msra.mxu0 0.0
        %836 = vmatprep.subr.mxu0 0.0
        %837 = vmatpush1.xpose.msra.mxu0 0.0
        %838 = vmatprep.subr.mxu0 0.0
        %839 = vmatpush1.xpose.msra.mxu0 0.0
        %840 = vmatprep.subr.mxu0 0.0
        %841 = vmatpush1.xpose.msra.mxu0 0.0
        %842 = vmatprep.subr.mxu0 0.0
        %843 = vmatpush1.xpose.msra.mxu0 0.0
        %844 = vmatprep.subr.mxu0 0.0
        %845 = vmatpush1.xpose.msra.mxu0 0.0
        %846 = vmatprep.subr.mxu0 0.0
        %847 = vmatpush1.xpose.msra.mxu0 0.0
        %848 = vmatprep.subr.mxu0 0.0
        %849 = vmatpush1.xpose.msra.mxu0 0.0
        %850 = vmatprep.subr.mxu0 0.0
        %851 = vmatpush1.xpose.msra.mxu0 0.0
        %852 = vmatprep.subr.mxu0 0.0
        %853 = vmatpush1.xpose.msra.mxu0 0.0
        %854 = vmatprep.subr.mxu0 0.0
        %855 = vmatpush1.xpose.msra.mxu0 0.0
        %856 = vmatprep.subr.mxu0 0.0
        %857 = vmatpush1.xpose.msra.mxu0 0.0
        %858 = vmatprep.subr.mxu0 0.0
        %859 = vmatpush1.xpose.msra.mxu0 0.0
        %860 = vmatprep.subr.mxu0 0.0
        %861 = vmatpush1.xpose.msra.mxu0 0.0
        %862 = vmatprep.subr.mxu0 0.0
        %863 = vmatpush1.xpose.msra.mxu0 0.0
        %864 = vmatprep.subr.mxu0 0.0
        %865 = vmatpush1.xpose.msra.mxu0 %v832
        %866 = vmatprep.subr.mxu0 0.0
        %867 = vmatpush2.xpose.msra.mxu0 0.0
        %868 = vmatprep.subr.mxu0 0.0
        %869 = vmatpush2.xpose.msra.mxu0 0.0
        %870 = vmatprep.subr.mxu0 0.0
        %871 = vmatpush2.xpose.msra.mxu0 0.0
        %872 = vmatprep.subr.mxu0 0.0
        %873 = vmatpush2.xpose.msra.mxu0 0.0
        %874 = vmatprep.subr.mxu0 0.0
        %875 = vmatpush2.xpose.msra.mxu0 0.0
        %876 = vmatprep.subr.mxu0 0.0
        %877 = vmatpush2.xpose.msra.mxu0 0.0
        %878 = vmatprep.subr.mxu0 0.0
        %879 = vmatpush2.xpose.msra.mxu0 0.0
        %880 = vmatprep.subr.mxu0 0.0
        %881 = vmatpush2.xpose.msra.mxu0 0.0
        %882 = vmatprep.subr.mxu0 0.0
        %883 = vmatpush2.xpose.msra.mxu0 0.0
        %884 = vmatprep.subr.mxu0 0.0
        %885 = vmatpush2.xpose.msra.mxu0 0.0
        %886 = vmatprep.subr.mxu0 0.0
        %887 = vmatpush2.xpose.msra.mxu0 0.0
        %888 = vmatprep.subr.mxu0 0.0
        %889 = vmatpush2.xpose.msra.mxu0 0.0
        %890 = vmatprep.subr.mxu0 0.0
        %891 = vmatpush2.xpose.msra.mxu0 0.0
        %892 = vmatprep.subr.mxu0 0.0
        %893 = vmatpush2.xpose.msra.mxu0 0.0
        %894 = vmatprep.subr.mxu0 0.0
        %895 = vmatpush2.xpose.msra.mxu0 0.0
        %896 = vmatprep.subr.mxu0 0.0
        %897 = vmatpush2.xpose.msra.mxu0 0.0
        %898 = vmatprep.mubr.f32.mxu0 0.0
        %899 = vmatmul.mubr.f32.gmra.mxu0 %v832
        %v900 = vpop.f32.mrf.mxu0
        %v901 = vadd.f32 0.0, %v900
        %v902 = vpop.f32.mrf.mxu0
        %903 = vdwg.mxu0
        %v905 = vsel %vm538, %v495, 0
        %907 = vmatprep.subr.mxu0 0.0
        %908 = vmatpush1.xpose.msra.mxu0 0.0
        %909 = vmatprep.subr.mxu0 0.0
        %910 = vmatpush1.xpose.msra.mxu0 0.0
        %911 = vmatprep.subr.mxu0 0.0
        %912 = vmatpush1.xpose.msra.mxu0 0.0
        %913 = vmatprep.subr.mxu0 0.0
        %914 = vmatpush1.xpose.msra.mxu0 0.0
        %915 = vmatprep.subr.mxu0 0.0
        %916 = vmatpush1.xpose.msra.mxu0 0.0
        %917 = vmatprep.subr.mxu0 0.0
        %918 = vmatpush1.xpose.msra.mxu0 0.0
        %919 = vmatprep.subr.mxu0 0.0
        %920 = vmatpush1.xpose.msra.mxu0 0.0
        %921 = vmatprep.subr.mxu0 0.0
        %922 = vmatpush1.xpose.msra.mxu0 0.0
        %923 = vmatprep.subr.mxu0 0.0
        %924 = vmatpush1.xpose.msra.mxu0 0.0
        %925 = vmatprep.subr.mxu0 0.0
        %926 = vmatpush1.xpose.msra.mxu0 0.0
        %927 = vmatprep.subr.mxu0 0.0
        %928 = vmatpush1.xpose.msra.mxu0 0.0
        %929 = vmatprep.subr.mxu0 0.0
        %930 = vmatpush1.xpose.msra.mxu0 0.0
        %931 = vmatprep.subr.mxu0 0.0
        %932 = vmatpush1.xpose.msra.mxu0 0.0
        %933 = vmatprep.subr.mxu0 0.0
        %934 = vmatpush1.xpose.msra.mxu0 0.0
        %935 = vmatprep.subr.mxu0 0.0
        %936 = vmatpush1.xpose.msra.mxu0 0.0
        %937 = vmatprep.subr.mxu0 0.0
        %938 = vmatpush1.xpose.msra.mxu0 %v905
        %939 = vmatprep.subr.mxu0 0.0
        %940 = vmatpush2.xpose.msra.mxu0 0.0
        %941 = vmatprep.subr.mxu0 0.0
        %942 = vmatpush2.xpose.msra.mxu0 0.0
        %943 = vmatprep.subr.mxu0 0.0
        %944 = vmatpush2.xpose.msra.mxu0 0.0
        %945 = vmatprep.subr.mxu0 0.0
        %946 = vmatpush2.xpose.msra.mxu0 0.0
        %947 = vmatprep.subr.mxu0 0.0
        %948 = vmatpush2.xpose.msra.mxu0 0.0
        %949 = vmatprep.subr.mxu0 0.0
        %950 = vmatpush2.xpose.msra.mxu0 0.0
        %951 = vmatprep.subr.mxu0 0.0
        %952 = vmatpush2.xpose.msra.mxu0 0.0
        %953 = vmatprep.subr.mxu0 0.0
        %954 = vmatpush2.xpose.msra.mxu0 0.0
        %955 = vmatprep.subr.mxu0 0.0
        %956 = vmatpush2.xpose.msra.mxu0 0.0
        %957 = vmatprep.subr.mxu0 0.0
        %958 = vmatpush2.xpose.msra.mxu0 0.0
        %959 = vmatprep.subr.mxu0 0.0
        %960 = vmatpush2.xpose.msra.mxu0 0.0
        %961 = vmatprep.subr.mxu0 0.0
        %962 = vmatpush2.xpose.msra.mxu0 0.0
        %963 = vmatprep.subr.mxu0 0.0
        %964 = vmatpush2.xpose.msra.mxu0 0.0
        %965 = vmatprep.subr.mxu0 0.0
        %966 = vmatpush2.xpose.msra.mxu0 0.0
        %967 = vmatprep.subr.mxu0 0.0
        %968 = vmatpush2.xpose.msra.mxu0 0.0
        %969 = vmatprep.subr.mxu0 0.0
        %970 = vmatpush2.xpose.msra.mxu0 0.0
        %971 = vmatprep.mubr.f32.mxu0 0.0
        %972 = vmatmul.mubr.f32.gmra.mxu0 %v905
        %v973 = vpop.f32.mrf.mxu0
        %v974 = vadd.f32 0.0, %v973
        %v975 = vpop.f32.mrf.mxu0
        %976 = vdwg.mxu0
        %v978 = vsel %vm538, %v496, 0
        %980 = vmatprep.subr.mxu0 0.0
        %981 = vmatpush1.xpose.msra.mxu0 0.0
        %982 = vmatprep.subr.mxu0 0.0
        %983 = vmatpush1.xpose.msra.mxu0 0.0
        %984 = vmatprep.subr.mxu0 0.0
        %985 = vmatpush1.xpose.msra.mxu0 0.0
        %986 = vmatprep.subr.mxu0 0.0
        %987 = vmatpush1.xpose.msra.mxu0 0.0
        %988 = vmatprep.subr.mxu0 0.0
        %989 = vmatpush1.xpose.msra.mxu0 0.0
        %990 = vmatprep.subr.mxu0 0.0
        %991 = vmatpush1.xpose.msra.mxu0 0.0
        %992 = vmatprep.subr.mxu0 0.0
        %993 = vmatpush1.xpose.msra.mxu0 0.0
        %994 = vmatprep.subr.mxu0 0.0
        %995 = vmatpush1.xpose.msra.mxu0 0.0
        %996 = vmatprep.subr.mxu0 0.0
        %997 = vmatpush1.xpose.msra.mxu0 0.0
        %998 = vmatprep.subr.mxu0 0.0
        %999 = vmatpush1.xpose.msra.mxu0 0.0
        %1000 = vmatprep.subr.mxu0 0.0
        %1001 = vmatpush1.xpose.msra.mxu0 0.0
        %1002 = vmatprep.subr.mxu0 0.0
        %1003 = vmatpush1.xpose.msra.mxu0 0.0
        %1004 = vmatprep.subr.mxu0 0.0
        %1005 = vmatpush1.xpose.msra.mxu0 0.0
        %1006 = vmatprep.subr.mxu0 0.0
        %1007 = vmatpush1.xpose.msra.mxu0 0.0
        %1008 = vmatprep.subr.mxu0 0.0
        %1009 = vmatpush1.xpose.msra.mxu0 0.0
        %1010 = vmatprep.subr.mxu0 0.0
        %1011 = vmatpush1.xpose.msra.mxu0 %v978
        %1012 = vmatprep.subr.mxu0 0.0
        %1013 = vmatpush2.xpose.msra.mxu0 0.0
        %1014 = vmatprep.subr.mxu0 0.0
        %1015 = vmatpush2.xpose.msra.mxu0 0.0
        %1016 = vmatprep.subr.mxu0 0.0
        %1017 = vmatpush2.xpose.msra.mxu0 0.0
        %1018 = vmatprep.subr.mxu0 0.0
        %1019 = vmatpush2.xpose.msra.mxu0 0.0
        %1020 = vmatprep.subr.mxu0 0.0
        %1021 = vmatpush2.xpose.msra.mxu0 0.0
        %1022 = vmatprep.subr.mxu0 0.0
        %1023 = vmatpush2.xpose.msra.mxu0 0.0
        %1024 = vmatprep.subr.mxu0 0.0
        %1025 = vmatpush2.xpose.msra.mxu0 0.0
        %1026 = vmatprep.subr.mxu0 0.0
        %1027 = vmatpush2.xpose.msra.mxu0 0.0
        %1028 = vmatprep.subr.mxu0 0.0
        %1029 = vmatpush2.xpose.msra.mxu0 0.0
        %1030 = vmatprep.subr.mxu0 0.0
        %1031 = vmatpush2.xpose.msra.mxu0 0.0
        %1032 = vmatprep.subr.mxu0 0.0
        %1033 = vmatpush2.xpose.msra.mxu0 0.0
        %1034 = vmatprep.subr.mxu0 0.0
        %1035 = vmatpush2.xpose.msra.mxu0 0.0
        %1036 = vmatprep.subr.mxu0 0.0
        %1037 = vmatpush2.xpose.msra.mxu0 0.0
        %1038 = vmatprep.subr.mxu0 0.0
        %1039 = vmatpush2.xpose.msra.mxu0 0.0
        %1040 = vmatprep.subr.mxu0 0.0
        %1041 = vmatpush2.xpose.msra.mxu0 0.0
        %1042 = vmatprep.subr.mxu0 0.0
        %1043 = vmatpush2.xpose.msra.mxu0 0.0
        %1044 = vmatprep.mubr.f32.mxu0 0.0
        %1045 = vmatmul.mubr.f32.gmra.mxu0 %v978
        %v1046 = vpop.f32.mrf.mxu0
        %v1047 = vadd.f32 0.0, %v1046
        %v1048 = vpop.f32.mrf.mxu0
        %1049 = vdwg.mxu0
        %v1051 = vsel %vm538, %v497, 0
        %1053 = vmatprep.subr.mxu0 0.0
        %1054 = vmatpush1.xpose.msra.mxu0 0.0
        %1055 = vmatprep.subr.mxu0 0.0
        %1056 = vmatpush1.xpose.msra.mxu0 0.0
        %1057 = vmatprep.subr.mxu0 0.0
        %1058 = vmatpush1.xpose.msra.mxu0 0.0
        %1059 = vmatprep.subr.mxu0 0.0
        %1060 = vmatpush1.xpose.msra.mxu0 0.0
        %1061 = vmatprep.subr.mxu0 0.0
        %1062 = vmatpush1.xpose.msra.mxu0 0.0
        %1063 = vmatprep.subr.mxu0 0.0
        %1064 = vmatpush1.xpose.msra.mxu0 0.0
        %1065 = vmatprep.subr.mxu0 0.0
        %1066 = vmatpush1.xpose.msra.mxu0 0.0
        %1067 = vmatprep.subr.mxu0 0.0
        %1068 = vmatpush1.xpose.msra.mxu0 0.0
        %1069 = vmatprep.subr.mxu0 0.0
        %1070 = vmatpush1.xpose.msra.mxu0 0.0
        %1071 = vmatprep.subr.mxu0 0.0
        %1072 = vmatpush1.xpose.msra.mxu0 0.0
        %1073 = vmatprep.subr.mxu0 0.0
        %1074 = vmatpush1.xpose.msra.mxu0 0.0
        %1075 = vmatprep.subr.mxu0 0.0
        %1076 = vmatpush1.xpose.msra.mxu0 0.0
        %1077 = vmatprep.subr.mxu0 0.0
        %1078 = vmatpush1.xpose.msra.mxu0 0.0
        %1079 = vmatprep.subr.mxu0 0.0
        %1080 = vmatpush1.xpose.msra.mxu0 0.0
        %1081 = vmatprep.subr.mxu0 0.0
        %1082 = vmatpush1.xpose.msra.mxu0 0.0
        %1083 = vmatprep.subr.mxu0 0.0
        %1084 = vmatpush1.xpose.msra.mxu0 %v1051
        %1085 = vmatprep.subr.mxu0 0.0
        %1086 = vmatpush2.xpose.msra.mxu0 0.0
        %1087 = vmatprep.subr.mxu0 0.0
        %1088 = vmatpush2.xpose.msra.mxu0 0.0
        %1089 = vmatprep.subr.mxu0 0.0
        %1090 = vmatpush2.xpose.msra.mxu0 0.0
        %1091 = vmatprep.subr.mxu0 0.0
        %1092 = vmatpush2.xpose.msra.mxu0 0.0
        %1093 = vmatprep.subr.mxu0 0.0
        %1094 = vmatpush2.xpose.msra.mxu0 0.0
        %1095 = vmatprep.subr.mxu0 0.0
        %1096 = vmatpush2.xpose.msra.mxu0 0.0
        %1097 = vmatprep.subr.mxu0 0.0
        %1098 = vmatpush2.xpose.msra.mxu0 0.0
        %1099 = vmatprep.subr.mxu0 0.0
        %1100 = vmatpush2.xpose.msra.mxu0 0.0
        %1101 = vmatprep.subr.mxu0 0.0
        %1102 = vmatpush2.xpose.msra.mxu0 0.0
        %1103 = vmatprep.subr.mxu0 0.0
        %1104 = vmatpush2.xpose.msra.mxu0 0.0
        %1105 = vmatprep.subr.mxu0 0.0
        %1106 = vmatpush2.xpose.msra.mxu0 0.0
        %1107 = vmatprep.subr.mxu0 0.0
        %1108 = vmatpush2.xpose.msra.mxu0 0.0
        %1109 = vmatprep.subr.mxu0 0.0
        %1110 = vmatpush2.xpose.msra.mxu0 0.0
        %1111 = vmatprep.subr.mxu0 0.0
        %1112 = vmatpush2.xpose.msra.mxu0 0.0
        %1113 = vmatprep.subr.mxu0 0.0
        %1114 = vmatpush2.xpose.msra.mxu0 0.0
        %1115 = vmatprep.subr.mxu0 0.0
        %1116 = vmatpush2.xpose.msra.mxu0 0.0
        %1117 = vmatprep.mubr.f32.mxu0 0.0
        %1118 = vmatmul.mubr.f32.gmra.mxu0 %v1051
        %v1119 = vpop.f32.mrf.mxu0
        %v1120 = vadd.f32 0.0, %v1119
        %v1121 = vpop.f32.mrf.mxu0
        %1122 = vdwg.mxu0
        %vm1123 = vcmask 64512
        %v1124 = vsel %vm1123, %v506, -inf
        %1125 = vmax.xlane.f32.xlu0 %v1124
        %v1126 = vpop.xlane.xlu0 %1125
        %v1127 = vsel %vm1123, %v507, -inf
        %1128 = vmax.xlane.f32.xlu0 %v1127
        %v1129 = vpop.xlane.xlu0 %1128
        %v1130 = vsel %vm1123, %v508, -inf
        %1131 = vmax.xlane.f32.xlu0 %v1130
        %v1132 = vpop.xlane.xlu0 %1131
        %v1133 = vsel %vm1123, %v509, -inf
        %1134 = vmax.xlane.f32.xlu0 %v1133
        %v1135 = vpop.xlane.xlu0 %1134
        %v1136 = vsel %vm1123, %v510, -inf
        %1137 = vmax.xlane.f32.xlu0 %v1136
        %v1138 = vpop.xlane.xlu0 %1137
        %v1139 = vsel %vm1123, %v511, -inf
        %1140 = vmax.xlane.f32.xlu0 %v1139
        %v1141 = vpop.xlane.xlu0 %1140
        %v1142 = vsel %vm1123, %v512, -inf
        %1143 = vmax.xlane.f32.xlu0 %v1142
        %v1144 = vpop.xlane.xlu0 %1143
        %v1145 = vsel %vm1123, %v513, -inf
        %1146 = vmax.xlane.f32.xlu0 %v1145
        %v1147 = vpop.xlane.xlu0 %1146
        %v1148 = vsel %vm1123, %v514, -inf
        %1149 = vmax.xlane.f32.xlu0 %v1148
        %v1150 = vpop.xlane.xlu0 %1149
        %v1151 = vsel %vm1123, %v515, -inf
        %1152 = vmax.xlane.f32.xlu0 %v1151
        %v1153 = vpop.xlane.xlu0 %1152
        %v1154 = vsel %vm1123, %v516, -inf
        %1155 = vmax.xlane.f32.xlu0 %v1154
        %v1156 = vpop.xlane.xlu0 %1155
        %v1157 = vsel %vm1123, %v517, -inf
        %1158 = vmax.xlane.f32.xlu0 %v1157
        %v1159 = vpop.xlane.xlu0 %1158
        %v1160 = vsel %vm1123, %v518, -inf
        %1161 = vmax.xlane.f32.xlu0 %v1160
        %v1162 = vpop.xlane.xlu0 %1161
        %v1163 = vsel %vm1123, %v519, -inf
        %1164 = vmax.xlane.f32.xlu0 %v1163
        %v1165 = vpop.xlane.xlu0 %1164
        %v1166 = vsel %vm1123, %v520, -inf
        %1167 = vmax.xlane.f32.xlu0 %v1166
        %v1168 = vpop.xlane.xlu0 %1167
        %v1169 = vsel %vm1123, %v521, -inf
        %1170 = vmax.xlane.f32.xlu0 %v1169
        %v1171 = vpop.xlane.xlu0 %1170
        %v1172 = vsub.f32 %v506, %v1126
        %v1173 = vsub.f32 %v507, %v1129
        %v1174 = vsub.f32 %v508, %v1132
        %v1175 = vsub.f32 %v509, %v1135
        %v1176 = vsub.f32 %v510, %v1138
        %v1177 = vsub.f32 %v511, %v1141
        %v1178 = vsub.f32 %v512, %v1144
        %v1179 = vsub.f32 %v513, %v1147
        %v1180 = vsub.f32 %v514, %v1150
        %v1181 = vsub.f32 %v515, %v1153
        %v1182 = vsub.f32 %v516, %v1156
        %v1183 = vsub.f32 %v517, %v1159
        %v1184 = vsub.f32 %v518, %v1162
        %v1185 = vsub.f32 %v519, %v1165
        %v1186 = vsub.f32 %v520, %v1168
        %v1187 = vsub.f32 %v521, %v1171
        %v1188 = vmul.f32 %v1172, 1.442695
        %v1189 = vpow.pop %v1188
        %v1190 = vmul.f32 %v1173, 1.442695
        %v1191 = vpow.pop %v1190
        %v1192 = vmul.f32 %v1174, 1.442695
        %v1193 = vpow.pop %v1192
        %v1194 = vmul.f32 %v1175, 1.442695
        %v1195 = vpow.pop %v1194
        %v1196 = vmul.f32 %v1176, 1.442695
        %v1197 = vpow.pop %v1196
        %v1198 = vmul.f32 %v1177, 1.442695
        %v1199 = vpow.pop %v1198
        %v1200 = vmul.f32 %v1178, 1.442695
        %v1201 = vpow.pop %v1200
        %v1202 = vmul.f32 %v1179, 1.442695
        %v1203 = vpow.pop %v1202
        %v1204 = vmul.f32 %v1180, 1.442695
        %v1205 = vpow.pop %v1204
        %v1206 = vmul.f32 %v1181, 1.442695
        %v1207 = vpow.pop %v1206
        %v1208 = vmul.f32 %v1182, 1.442695
        %v1209 = vpow.pop %v1208
        %v1210 = vmul.f32 %v1183, 1.442695
        %v1211 = vpow.pop %v1210
        %v1212 = vmul.f32 %v1184, 1.442695
        %v1213 = vpow.pop %v1212
        %v1214 = vmul.f32 %v1185, 1.442695
        %v1215 = vpow.pop %v1214
        %v1216 = vmul.f32 %v1186, 1.442695
        %v1217 = vpow.pop %v1216
        %v1218 = vmul.f32 %v1187, 1.442695
        %v1219 = vpow.pop %v1218
        %v1220 = vsel %vm1123, %v1189, 0.0
        %1221 = vadd.xlane.f32.xlu0 %v1220
        %v1222 = vpop.xlane.xlu0 %1221
        %v1223 = vsel %vm1123, %v1191, 0.0
        %1224 = vadd.xlane.f32.xlu0 %v1223
        %v1225 = vpop.xlane.xlu0 %1224
        %v1226 = vsel %vm1123, %v1193, 0.0
        %1227 = vadd.xlane.f32.xlu0 %v1226
        %v1228 = vpop.xlane.xlu0 %1227
        %v1229 = vsel %vm1123, %v1195, 0.0
        %1230 = vadd.xlane.f32.xlu0 %v1229
        %v1231 = vpop.xlane.xlu0 %1230
        %v1232 = vsel %vm1123, %v1197, 0.0
        %1233 = vadd.xlane.f32.xlu0 %v1232
        %v1234 = vpop.xlane.xlu0 %1233
        %v1235 = vsel %vm1123, %v1199, 0.0
        %1236 = vadd.xlane.f32.xlu0 %v1235
        %v1237 = vpop.xlane.xlu0 %1236
        %v1238 = vsel %vm1123, %v1201, 0.0
        %1239 = vadd.xlane.f32.xlu0 %v1238
        %v1240 = vpop.xlane.xlu0 %1239
        %v1241 = vsel %vm1123, %v1203, 0.0
        %1242 = vadd.xlane.f32.xlu0 %v1241
        %v1243 = vpop.xlane.xlu0 %1242
        %v1244 = vsel %vm1123, %v1205, 0.0
        %1245 = vadd.xlane.f32.xlu0 %v1244
        %v1246 = vpop.xlane.xlu0 %1245
        %v1247 = vsel %vm1123, %v1207, 0.0
        %1248 = vadd.xlane.f32.xlu0 %v1247
        %v1249 = vpop.xlane.xlu0 %1248
        %v1250 = vsel %vm1123, %v1209, 0.0
        %1251 = vadd.xlane.f32.xlu0 %v1250
        %v1252 = vpop.xlane.xlu0 %1251
        %v1253 = vsel %vm1123, %v1211, 0.0
        %1254 = vadd.xlane.f32.xlu0 %v1253
        %v1255 = vpop.xlane.xlu0 %1254
        %v1256 = vsel %vm1123, %v1213, 0.0
        %1257 = vadd.xlane.f32.xlu0 %v1256
        %v1258 = vpop.xlane.xlu0 %1257
        %v1259 = vsel %vm1123, %v1215, 0.0
        %1260 = vadd.xlane.f32.xlu0 %v1259
        %v1261 = vpop.xlane.xlu0 %1260
        %v1262 = vsel %vm1123, %v1217, 0.0
        %1263 = vadd.xlane.f32.xlu0 %v1262
        %v1264 = vpop.xlane.xlu0 %1263
        %v1265 = vsel %vm1123, %v1219, 0.0
        %1266 = vadd.xlane.f32.xlu0 %v1265
        %v1267 = vpop.xlane.xlu0 %1266
        %v1268 = vrcp.pop %v1222
        %v1269 = vrcp.pop %v1225
        %v1270 = vrcp.pop %v1228
        %v1271 = vrcp.pop %v1231
        %v1272 = vrcp.pop %v1234
        %v1273 = vrcp.pop %v1237
        %v1274 = vrcp.pop %v1240
        %v1275 = vrcp.pop %v1243
        %v1276 = vrcp.pop %v1246
        %v1277 = vrcp.pop %v1249
        %v1278 = vrcp.pop %v1252
        %v1279 = vrcp.pop %v1255
        %v1280 = vrcp.pop %v1258
        %v1281 = vrcp.pop %v1261
        %v1282 = vrcp.pop %v1264
        %v1283 = vrcp.pop %v1267
        %v1284 = vmul.f32 %v1189, %v1268
        %v1285 = vmul.f32 %v1191, %v1269
        %v1286 = vmul.f32 %v1193, %v1270
        %v1287 = vmul.f32 %v1195, %v1271
        %v1288 = vmul.f32 %v1197, %v1272
        %v1289 = vmul.f32 %v1199, %v1273
        %v1290 = vmul.f32 %v1201, %v1274
        %v1291 = vmul.f32 %v1203, %v1275
        %v1292 = vmul.f32 %v1205, %v1276
        %v1293 = vmul.f32 %v1207, %v1277
        %v1294 = vmul.f32 %v1209, %v1278
        %v1295 = vmul.f32 %v1211, %v1279
        %v1296 = vmul.f32 %v1213, %v1280
        %v1297 = vmul.f32 %v1215, %v1281
        %v1298 = vmul.f32 %v1217, %v1282
        %v1299 = vmul.f32 %v1219, %v1283
        %1300 = vxpose.xlu0.b32.start [1/16] %v1284, 128
        %1301 = vxpose.xlu0.b32.cont [2/16] %v1285, 128
        %1302 = vxpose.xlu0.b32.cont [3/16] %v1286, 128
        %1303 = vxpose.xlu0.b32.cont [4/16] %v1287, 128
        %1304 = vxpose.xlu0.b32.cont [5/16] 0.0, 128
        %1305 = vxpose.xlu0.b32.cont [6/16] 0.0, 128
        %1306 = vxpose.xlu0.b32.cont [7/16] 0.0, 128
        %1307 = vxpose.xlu0.b32.cont [8/16] 0.0, 128
        %1308 = vxpose.xlu0.b32.cont [9/16] 0.0, 128
        %1309 = vxpose.xlu0.b32.cont [10/16] 0.0, 128
        %1310 = vxpose.xlu0.b32.cont [11/16] 0.0, 128
        %1311 = vxpose.xlu0.b32.cont [12/16] 0.0, 128
        %1312 = vxpose.xlu0.b32.cont [13/16] 0.0, 128
        %1313 = vxpose.xlu0.b32.cont [14/16] 0.0, 128
        %1314 = vxpose.xlu0.b32.cont [15/16] 0.0, 128
        %1315 = vxpose.xlu0.b32.end [16/16] 0.0, 128
        %v1316 = vpop.trf.xlu0
        %v1317 = vpop.trf.xlu0
        %v1318 = vpop.trf.xlu0
        %v1319 = vpop.trf.xlu0
        %v1320 = vpop.trf.xlu0
        %v1321 = vpop.trf.xlu0
        %v1322 = vpop.trf.xlu0
        %v1323 = vpop.trf.xlu0
        %v1324 = vpop.trf.xlu0
        %v1325 = vpop.trf.xlu0
        %v1326 = vpop.trf.xlu0
        %v1327 = vpop.trf.xlu0
        %v1328 = vpop.trf.xlu0
        %v1329 = vpop.trf.xlu0
        %v1330 = vpop.trf.xlu0
        %v1331 = vpop.trf.xlu0
        %1332 = vxpose.xlu0.b32.start [1/16] %v1288, 128
        %1333 = vxpose.xlu0.b32.cont [2/16] %v1289, 128
        %1334 = vxpose.xlu0.b32.cont [3/16] %v1290, 128
        %1335 = vxpose.xlu0.b32.cont [4/16] %v1291, 128
        %1336 = vxpose.xlu0.b32.cont [5/16] 0.0, 128
        %1337 = vxpose.xlu0.b32.cont [6/16] 0.0, 128
        %1338 = vxpose.xlu0.b32.cont [7/16] 0.0, 128
        %1339 = vxpose.xlu0.b32.cont [8/16] 0.0, 128
        %1340 = vxpose.xlu0.b32.cont [9/16] 0.0, 128
        %1341 = vxpose.xlu0.b32.cont [10/16] 0.0, 128
        %1342 = vxpose.xlu0.b32.cont [11/16] 0.0, 128
        %1343 = vxpose.xlu0.b32.cont [12/16] 0.0, 128
        %1344 = vxpose.xlu0.b32.cont [13/16] 0.0, 128
        %1345 = vxpose.xlu0.b32.cont [14/16] 0.0, 128
        %1346 = vxpose.xlu0.b32.cont [15/16] 0.0, 128
        %1347 = vxpose.xlu0.b32.end [16/16] 0.0, 128
        %v1348 = vpop.trf.xlu0
        %v1349 = vpop.trf.xlu0
        %v1350 = vpop.trf.xlu0
        %v1351 = vpop.trf.xlu0
        %v1352 = vpop.trf.xlu0
        %v1353 = vpop.trf.xlu0
        %v1354 = vpop.trf.xlu0
        %v1355 = vpop.trf.xlu0
        %v1356 = vpop.trf.xlu0
        %v1357 = vpop.trf.xlu0
        %v1358 = vpop.trf.xlu0
        %v1359 = vpop.trf.xlu0
        %v1360 = vpop.trf.xlu0
        %v1361 = vpop.trf.xlu0
        %v1362 = vpop.trf.xlu0
        %v1363 = vpop.trf.xlu0
        %1364 = vxpose.xlu0.b32.start [1/16] %v1292, 128
        %1365 = vxpose.xlu0.b32.cont [2/16] %v1293, 128
        %1366 = vxpose.xlu0.b32.cont [3/16] %v1294, 128
        %1367 = vxpose.xlu0.b32.cont [4/16] %v1295, 128
        %1368 = vxpose.xlu0.b32.cont [5/16] 0.0, 128
        %1369 = vxpose.xlu0.b32.cont [6/16] 0.0, 128
        %1370 = vxpose.xlu0.b32.cont [7/16] 0.0, 128
        %1371 = vxpose.xlu0.b32.cont [8/16] 0.0, 128
        %1372 = vxpose.xlu0.b32.cont [9/16] 0.0, 128
        %1373 = vxpose.xlu0.b32.cont [10/16] 0.0, 128
        %1374 = vxpose.xlu0.b32.cont [11/16] 0.0, 128
        %1375 = vxpose.xlu0.b32.cont [12/16] 0.0, 128
        %1376 = vxpose.xlu0.b32.cont [13/16] 0.0, 128
        %1377 = vxpose.xlu0.b32.cont [14/16] 0.0, 128
        %1378 = vxpose.xlu0.b32.cont [15/16] 0.0, 128
        %1379 = vxpose.xlu0.b32.end [16/16] 0.0, 128
        %v1380 = vpop.trf.xlu0
        %v1381 = vpop.trf.xlu0
        %v1382 = vpop.trf.xlu0
        %v1383 = vpop.trf.xlu0
        %v1384 = vpop.trf.xlu0
        %v1385 = vpop.trf.xlu0
        %v1386 = vpop.trf.xlu0
        %v1387 = vpop.trf.xlu0
        %v1388 = vpop.trf.xlu0
        %v1389 = vpop.trf.xlu0
        %v1390 = vpop.trf.xlu0
        %v1391 = vpop.trf.xlu0
        %v1392 = vpop.trf.xlu0
        %v1393 = vpop.trf.xlu0
        %v1394 = vpop.trf.xlu0
        %v1395 = vpop.trf.xlu0
        %1396 = vxpose.xlu0.b32.start [1/16] %v1296, 128
        %1397 = vxpose.xlu0.b32.cont [2/16] %v1297, 128
        %1398 = vxpose.xlu0.b32.cont [3/16] %v1298, 128
        %1399 = vxpose.xlu0.b32.cont [4/16] %v1299, 128
        %1400 = vxpose.xlu0.b32.cont [5/16] 0.0, 128
        %1401 = vxpose.xlu0.b32.cont [6/16] 0.0, 128
        %1402 = vxpose.xlu0.b32.cont [7/16] 0.0, 128
        %1403 = vxpose.xlu0.b32.cont [8/16] 0.0, 128
        %1404 = vxpose.xlu0.b32.cont [9/16] 0.0, 128
        %1405 = vxpose.xlu0.b32.cont [10/16] 0.0, 128
        %1406 = vxpose.xlu0.b32.cont [11/16] 0.0, 128
        %1407 = vxpose.xlu0.b32.cont [12/16] 0.0, 128
        %1408 = vxpose.xlu0.b32.cont [13/16] 0.0, 128
        %1409 = vxpose.xlu0.b32.cont [14/16] 0.0, 128
        %1410 = vxpose.xlu0.b32.cont [15/16] 0.0, 128
        %1411 = vxpose.xlu0.b32.end [16/16] 0.0, 128
        %v1412 = vpop.trf.xlu0
        %v1413 = vpop.trf.xlu0
        %v1414 = vpop.trf.xlu0
        %v1415 = vpop.trf.xlu0
        %v1416 = vpop.trf.xlu0
        %v1417 = vpop.trf.xlu0
        %v1418 = vpop.trf.xlu0
        %v1419 = vpop.trf.xlu0
        %v1420 = vpop.trf.xlu0
        %v1421 = vpop.trf.xlu0
        %v1422 = vpop.trf.xlu0
        %v1423 = vpop.trf.xlu0
        %v1424 = vpop.trf.xlu0
        %v1425 = vpop.trf.xlu0
        %v1426 = vpop.trf.xlu0
        %v1427 = vpop.trf.xlu0
        %v1429 = vsel %vm1123, %v498, 0
        %v1432 = vsel %vm1123, %v1284, 0
        %v1435 = vsel %vm1123, %v1285, 0
        %v1438 = vsel %vm1123, %v1286, 0
        %v1441 = vsel %vm1123, %v1287, 0
        %1443 = vmatprep.subr.mxu0 0.0
        %1444 = vmatpush1.xpose.msra.mxu0 0.0
        %1445 = vmatprep.subr.mxu0 0.0
        %1446 = vmatpush1.xpose.msra.mxu0 0.0
        %1447 = vmatprep.subr.mxu0 0.0
        %1448 = vmatpush1.xpose.msra.mxu0 0.0
        %1449 = vmatprep.subr.mxu0 0.0
        %1450 = vmatpush1.xpose.msra.mxu0 0.0
        %1451 = vmatprep.subr.mxu0 0.0
        %1452 = vmatpush1.xpose.msra.mxu0 0.0
        %1453 = vmatprep.subr.mxu0 0.0
        %1454 = vmatpush1.xpose.msra.mxu0 0.0
        %1455 = vmatprep.subr.mxu0 0.0
        %1456 = vmatpush1.xpose.msra.mxu0 0.0
        %1457 = vmatprep.subr.mxu0 0.0
        %1458 = vmatpush1.xpose.msra.mxu0 0.0
        %1459 = vmatprep.subr.mxu0 0.0
        %1460 = vmatpush1.xpose.msra.mxu0 0.0
        %1461 = vmatprep.subr.mxu0 0.0
        %1462 = vmatpush1.xpose.msra.mxu0 0.0
        %1463 = vmatprep.subr.mxu0 0.0
        %1464 = vmatpush1.xpose.msra.mxu0 0.0
        %1465 = vmatprep.subr.mxu0 0.0
        %1466 = vmatpush1.xpose.msra.mxu0 0.0
        %1467 = vmatprep.subr.mxu0 0.0
        %1468 = vmatpush1.xpose.msra.mxu0 %v1441
        %1469 = vmatprep.subr.mxu0 0.0
        %1470 = vmatpush1.xpose.msra.mxu0 %v1438
        %1471 = vmatprep.subr.mxu0 0.0
        %1472 = vmatpush1.xpose.msra.mxu0 %v1435
        %1473 = vmatprep.subr.mxu0 0.0
        %1474 = vmatpush1.xpose.msra.mxu0 %v1432
        %1475 = vmatprep.subr.mxu0 0.0
        %1476 = vmatpush2.xpose.msra.mxu0 0.0
        %1477 = vmatprep.subr.mxu0 0.0
        %1478 = vmatpush2.xpose.msra.mxu0 0.0
        %1479 = vmatprep.subr.mxu0 0.0
        %1480 = vmatpush2.xpose.msra.mxu0 0.0
        %1481 = vmatprep.subr.mxu0 0.0
        %1482 = vmatpush2.xpose.msra.mxu0 0.0
        %1483 = vmatprep.subr.mxu0 0.0
        %1484 = vmatpush2.xpose.msra.mxu0 0.0
        %1485 = vmatprep.subr.mxu0 0.0
        %1486 = vmatpush2.xpose.msra.mxu0 0.0
        %1487 = vmatprep.subr.mxu0 0.0
        %1488 = vmatpush2.xpose.msra.mxu0 0.0
        %1489 = vmatprep.subr.mxu0 0.0
        %1490 = vmatpush2.xpose.msra.mxu0 0.0
        %1491 = vmatprep.subr.mxu0 0.0
        %1492 = vmatpush2.xpose.msra.mxu0 0.0
        %1493 = vmatprep.subr.mxu0 0.0
        %1494 = vmatpush2.xpose.msra.mxu0 0.0
        %1495 = vmatprep.subr.mxu0 0.0
        %1496 = vmatpush2.xpose.msra.mxu0 0.0
        %1497 = vmatprep.subr.mxu0 0.0
        %1498 = vmatpush2.xpose.msra.mxu0 0.0
        %1499 = vmatprep.subr.mxu0 0.0
        %1500 = vmatpush2.xpose.msra.mxu0 0.0
        %1501 = vmatprep.subr.mxu0 0.0
        %1502 = vmatpush2.xpose.msra.mxu0 0.0
        %1503 = vmatprep.subr.mxu0 0.0
        %1504 = vmatpush2.xpose.msra.mxu0 0.0
        %1505 = vmatprep.subr.mxu0 0.0
        %1506 = vmatpush2.xpose.msra.mxu0 0.0
        %1507 = vmatprep.mubr.f32.mxu0 0.0
        %1508 = vmatmul.mubr.f32.gmra.mxu0 %v1429
        %v1509 = vpop.f32.mrf.mxu0
        %v1510 = vadd.f32 0.0, %v1509
        %v1511 = vpop.f32.mrf.mxu0
        %1512 = vdwg.mxu0
        %v1514 = vsel %vm1123, %v499, 0
        %v1517 = vsel %vm1123, %v1288, 0
        %v1520 = vsel %vm1123, %v1289, 0
        %v1523 = vsel %vm1123, %v1290, 0
        %v1526 = vsel %vm1123, %v1291, 0
        %1528 = vmatprep.subr.mxu0 0.0
        %1529 = vmatpush1.xpose.msra.mxu0 0.0
        %1530 = vmatprep.subr.mxu0 0.0
        %1531 = vmatpush1.xpose.msra.mxu0 0.0
        %1532 = vmatprep.subr.mxu0 0.0
        %1533 = vmatpush1.xpose.msra.mxu0 0.0
        %1534 = vmatprep.subr.mxu0 0.0
        %1535 = vmatpush1.xpose.msra.mxu0 0.0
        %1536 = vmatprep.subr.mxu0 0.0
        %1537 = vmatpush1.xpose.msra.mxu0 0.0
        %1538 = vmatprep.subr.mxu0 0.0
        %1539 = vmatpush1.xpose.msra.mxu0 0.0
        %1540 = vmatprep.subr.mxu0 0.0
        %1541 = vmatpush1.xpose.msra.mxu0 0.0
        %1542 = vmatprep.subr.mxu0 0.0
        %1543 = vmatpush1.xpose.msra.mxu0 0.0
        %1544 = vmatprep.subr.mxu0 0.0
        %1545 = vmatpush1.xpose.msra.mxu0 0.0
        %1546 = vmatprep.subr.mxu0 0.0
        %1547 = vmatpush1.xpose.msra.mxu0 0.0
        %1548 = vmatprep.subr.mxu0 0.0
        %1549 = vmatpush1.xpose.msra.mxu0 0.0
        %1550 = vmatprep.subr.mxu0 0.0
        %1551 = vmatpush1.xpose.msra.mxu0 0.0
        %1552 = vmatprep.subr.mxu0 0.0
        %1553 = vmatpush1.xpose.msra.mxu0 %v1526
        %1554 = vmatprep.subr.mxu0 0.0
        %1555 = vmatpush1.xpose.msra.mxu0 %v1523
        %1556 = vmatprep.subr.mxu0 0.0
        %1557 = vmatpush1.xpose.msra.mxu0 %v1520
        %1558 = vmatprep.subr.mxu0 0.0
        %1559 = vmatpush1.xpose.msra.mxu0 %v1517
        %1560 = vmatprep.subr.mxu0 0.0
        %1561 = vmatpush2.xpose.msra.mxu0 0.0
        %1562 = vmatprep.subr.mxu0 0.0
        %1563 = vmatpush2.xpose.msra.mxu0 0.0
        %1564 = vmatprep.subr.mxu0 0.0
        %1565 = vmatpush2.xpose.msra.mxu0 0.0
        %1566 = vmatprep.subr.mxu0 0.0
        %1567 = vmatpush2.xpose.msra.mxu0 0.0
        %1568 = vmatprep.subr.mxu0 0.0
        %1569 = vmatpush2.xpose.msra.mxu0 0.0
        %1570 = vmatprep.subr.mxu0 0.0
        %1571 = vmatpush2.xpose.msra.mxu0 0.0
        %1572 = vmatprep.subr.mxu0 0.0
        %1573 = vmatpush2.xpose.msra.mxu0 0.0
        %1574 = vmatprep.subr.mxu0 0.0
        %1575 = vmatpush2.xpose.msra.mxu0 0.0
        %1576 = vmatprep.subr.mxu0 0.0
        %1577 = vmatpush2.xpose.msra.mxu0 0.0
        %1578 = vmatprep.subr.mxu0 0.0
        %1579 = vmatpush2.xpose.msra.mxu0 0.0
        %1580 = vmatprep.subr.mxu0 0.0
        %1581 = vmatpush2.xpose.msra.mxu0 0.0
        %1582 = vmatprep.subr.mxu0 0.0
        %1583 = vmatpush2.xpose.msra.mxu0 0.0
        %1584 = vmatprep.subr.mxu0 0.0
        %1585 = vmatpush2.xpose.msra.mxu0 0.0
        %1586 = vmatprep.subr.mxu0 0.0
        %1587 = vmatpush2.xpose.msra.mxu0 0.0
        %1588 = vmatprep.subr.mxu0 0.0
        %1589 = vmatpush2.xpose.msra.mxu0 0.0
        %1590 = vmatprep.subr.mxu0 0.0
        %1591 = vmatpush2.xpose.msra.mxu0 0.0
        %1592 = vmatprep.mubr.f32.mxu0 0.0
        %1593 = vmatmul.mubr.f32.gmra.mxu0 %v1514
        %v1594 = vpop.f32.mrf.mxu0
        %v1595 = vadd.f32 0.0, %v1594
        %v1596 = vpop.f32.mrf.mxu0
        %1597 = vdwg.mxu0
        %v1599 = vsel %vm1123, %v500, 0
        %v1602 = vsel %vm1123, %v1292, 0
        %v1605 = vsel %vm1123, %v1293, 0
        %v1608 = vsel %vm1123, %v1294, 0
        %v1611 = vsel %vm1123, %v1295, 0
        %1613 = vmatprep.subr.mxu0 0.0
        %1614 = vmatpush1.xpose.msra.mxu0 0.0
        %1615 = vmatprep.subr.mxu0 0.0
        %1616 = vmatpush1.xpose.msra.mxu0 0.0
        %1617 = vmatprep.subr.mxu0 0.0
        %1618 = vmatpush1.xpose.msra.mxu0 0.0
        %1619 = vmatprep.subr.mxu0 0.0
        %1620 = vmatpush1.xpose.msra.mxu0 0.0
        %1621 = vmatprep.subr.mxu0 0.0
        %1622 = vmatpush1.xpose.msra.mxu0 0.0
        %1623 = vmatprep.subr.mxu0 0.0
        %1624 = vmatpush1.xpose.msra.mxu0 0.0
        %1625 = vmatprep.subr.mxu0 0.0
        %1626 = vmatpush1.xpose.msra.mxu0 0.0
        %1627 = vmatprep.subr.mxu0 0.0
        %1628 = vmatpush1.xpose.msra.mxu0 0.0
        %1629 = vmatprep.subr.mxu0 0.0
        %1630 = vmatpush1.xpose.msra.mxu0 0.0
        %1631 = vmatprep.subr.mxu0 0.0
        %1632 = vmatpush1.xpose.msra.mxu0 0.0
        %1633 = vmatprep.subr.mxu0 0.0
        %1634 = vmatpush1.xpose.msra.mxu0 0.0
        %1635 = vmatprep.subr.mxu0 0.0
        %1636 = vmatpush1.xpose.msra.mxu0 0.0
        %1637 = vmatprep.subr.mxu0 0.0
        %1638 = vmatpush1.xpose.msra.mxu0 %v1611
        %1639 = vmatprep.subr.mxu0 0.0
        %1640 = vmatpush1.xpose.msra.mxu0 %v1608
        %1641 = vmatprep.subr.mxu0 0.0
        %1642 = vmatpush1.xpose.msra.mxu0 %v1605
        %1643 = vmatprep.subr.mxu0 0.0
        %1644 = vmatpush1.xpose.msra.mxu0 %v1602
        %1645 = vmatprep.subr.mxu0 0.0
        %1646 = vmatpush2.xpose.msra.mxu0 0.0
        %1647 = vmatprep.subr.mxu0 0.0
        %1648 = vmatpush2.xpose.msra.mxu0 0.0
        %1649 = vmatprep.subr.mxu0 0.0
        %1650 = vmatpush2.xpose.msra.mxu0 0.0
        %1651 = vmatprep.subr.mxu0 0.0
        %1652 = vmatpush2.xpose.msra.mxu0 0.0
        %1653 = vmatprep.subr.mxu0 0.0
        %1654 = vmatpush2.xpose.msra.mxu0 0.0
        %1655 = vmatprep.subr.mxu0 0.0
        %1656 = vmatpush2.xpose.msra.mxu0 0.0
        %1657 = vmatprep.subr.mxu0 0.0
        %1658 = vmatpush2.xpose.msra.mxu0 0.0
        %1659 = vmatprep.subr.mxu0 0.0
        %1660 = vmatpush2.xpose.msra.mxu0 0.0
        %1661 = vmatprep.subr.mxu0 0.0
        %1662 = vmatpush2.xpose.msra.mxu0 0.0
        %1663 = vmatprep.subr.mxu0 0.0
        %1664 = vmatpush2.xpose.msra.mxu0 0.0
        %1665 = vmatprep.subr.mxu0 0.0
        %1666 = vmatpush2.xpose.msra.mxu0 0.0
        %1667 = vmatprep.subr.mxu0 0.0
        %1668 = vmatpush2.xpose.msra.mxu0 0.0
        %1669 = vmatprep.subr.mxu0 0.0
        %1670 = vmatpush2.xpose.msra.mxu0 0.0
        %1671 = vmatprep.subr.mxu0 0.0
        %1672 = vmatpush2.xpose.msra.mxu0 0.0
        %1673 = vmatprep.subr.mxu0 0.0
        %1674 = vmatpush2.xpose.msra.mxu0 0.0
        %1675 = vmatprep.subr.mxu0 0.0
        %1676 = vmatpush2.xpose.msra.mxu0 0.0
        %1677 = vmatprep.mubr.f32.mxu0 0.0
        %1678 = vmatmul.mubr.f32.gmra.mxu0 %v1599
        %v1679 = vpop.f32.mrf.mxu0
        %v1680 = vadd.f32 0.0, %v1679
        %v1681 = vpop.f32.mrf.mxu0
        %1682 = vdwg.mxu0
        %v1684 = vsel %vm1123, %v501, 0
        %v1687 = vsel %vm1123, %v1296, 0
        %v1690 = vsel %vm1123, %v1297, 0
        %v1693 = vsel %vm1123, %v1298, 0
        %v1696 = vsel %vm1123, %v1299, 0
        %1698 = vmatprep.subr.mxu0 0.0
        %1699 = vmatpush1.xpose.msra.mxu0 0.0
        %1700 = vmatprep.subr.mxu0 0.0
        %1701 = vmatpush1.xpose.msra.mxu0 0.0
        %1702 = vmatprep.subr.mxu0 0.0
        %1703 = vmatpush1.xpose.msra.mxu0 0.0
        %1704 = vmatprep.subr.mxu0 0.0
        %1705 = vmatpush1.xpose.msra.mxu0 0.0
        %1706 = vmatprep.subr.mxu0 0.0
        %1707 = vmatpush1.xpose.msra.mxu0 0.0
        %1708 = vmatprep.subr.mxu0 0.0
        %1709 = vmatpush1.xpose.msra.mxu0 0.0
        %1710 = vmatprep.subr.mxu0 0.0
        %1711 = vmatpush1.xpose.msra.mxu0 0.0
        %1712 = vmatprep.subr.mxu0 0.0
        %1713 = vmatpush1.xpose.msra.mxu0 0.0
        %1714 = vmatprep.subr.mxu0 0.0
        %1715 = vmatpush1.xpose.msra.mxu0 0.0
        %1716 = vmatprep.subr.mxu0 0.0
        %1717 = vmatpush1.xpose.msra.mxu0 0.0
        %1718 = vmatprep.subr.mxu0 0.0
        %1719 = vmatpush1.xpose.msra.mxu0 0.0
        %1720 = vmatprep.subr.mxu0 0.0
        %1721 = vmatpush1.xpose.msra.mxu0 0.0
        %1722 = vmatprep.subr.mxu0 0.0
        %1723 = vmatpush1.xpose.msra.mxu0 %v1696
        %1724 = vmatprep.subr.mxu0 0.0
        %1725 = vmatpush1.xpose.msra.mxu0 %v1693
        %1726 = vmatprep.subr.mxu0 0.0
        %1727 = vmatpush1.xpose.msra.mxu0 %v1690
        %1728 = vmatprep.subr.mxu0 0.0
        %1729 = vmatpush1.xpose.msra.mxu0 %v1687
        %1730 = vmatprep.subr.mxu0 0.0
        %1731 = vmatpush2.xpose.msra.mxu0 0.0
        %1732 = vmatprep.subr.mxu0 0.0
        %1733 = vmatpush2.xpose.msra.mxu0 0.0
        %1734 = vmatprep.subr.mxu0 0.0
        %1735 = vmatpush2.xpose.msra.mxu0 0.0
        %1736 = vmatprep.subr.mxu0 0.0
        %1737 = vmatpush2.xpose.msra.mxu0 0.0
        %1738 = vmatprep.subr.mxu0 0.0
        %1739 = vmatpush2.xpose.msra.mxu0 0.0
        %1740 = vmatprep.subr.mxu0 0.0
        %1741 = vmatpush2.xpose.msra.mxu0 0.0
        %1742 = vmatprep.subr.mxu0 0.0
        %1743 = vmatpush2.xpose.msra.mxu0 0.0
        %1744 = vmatprep.subr.mxu0 0.0
        %1745 = vmatpush2.xpose.msra.mxu0 0.0
        %1746 = vmatprep.subr.mxu0 0.0
        %1747 = vmatpush2.xpose.msra.mxu0 0.0
        %1748 = vmatprep.subr.mxu0 0.0
        %1749 = vmatpush2.xpose.msra.mxu0 0.0
        %1750 = vmatprep.subr.mxu0 0.0
        %1751 = vmatpush2.xpose.msra.mxu0 0.0
        %1752 = vmatprep.subr.mxu0 0.0
        %1753 = vmatpush2.xpose.msra.mxu0 0.0
        %1754 = vmatprep.subr.mxu0 0.0
        %1755 = vmatpush2.xpose.msra.mxu0 0.0
        %1756 = vmatprep.subr.mxu0 0.0
        %1757 = vmatpush2.xpose.msra.mxu0 0.0
        %1758 = vmatprep.subr.mxu0 0.0
        %1759 = vmatpush2.xpose.msra.mxu0 0.0
        %1760 = vmatprep.subr.mxu0 0.0
        %1761 = vmatpush2.xpose.msra.mxu0 0.0
        %1762 = vmatprep.mubr.f32.mxu0 0.0
        %1763 = vmatmul.mubr.f32.gmra.mxu0 %v1684
        %v1764 = vpop.f32.mrf.mxu0
        %v1765 = vadd.f32 0.0, %v1764
        %v1766 = vpop.f32.mrf.mxu0
        %1767 = vdwg.mxu0
        %v1768 = vsub.f32 %v502, %v1510
        %v1769 = vsub.f32 %v503, %v1595
        %v1770 = vsub.f32 %v504, %v1680
        %v1771 = vsub.f32 %v505, %v1765
        %s1772 = sld [smem:[#allocation2]]
        %v1773 = vstv %s1772
        %v1774 = vmul.f32 %v1773, %v609
        %v1775 = vmul.f32 %v1773, %v682
        %v1776 = vmul.f32 %v1773, %v755
        %v1777 = vmul.f32 %v1773, %v828
        %s1778 = sld [smem:[#allocation2 + $0x1]]
        %v1779 = vstv %s1778
        %v1780 = vmul.f32 %v1779, %v901
        %v1781 = vmul.f32 %v1779, %v974
        %v1782 = vmul.f32 %v1779, %v1047
        %v1783 = vmul.f32 %v1779, %v1120
        %v1784 = vadd.f32 %v1774, %v1780
        %v1785 = vadd.f32 %v1775, %v1781
        %v1786 = vadd.f32 %v1776, %v1782
        %v1787 = vadd.f32 %v1777, %v1783
        %s1788 = sld [smem:[#allocation2 + $0x2]]
        %v1789 = vstv %s1788
        %v1790 = vadd.f32 %v1784, %v1789
        %v1791 = vadd.f32 %v1785, %v1789
        %v1792 = vadd.f32 %v1786, %v1789
        %v1793 = vadd.f32 %v1787, %v1789
        %v1794 = vld [vmem:[%s1] sm:$0xff]
        %v1795 = vld [vmem:[%s1 + $0x8] sm:$0xff]
        %v1796 = vld [vmem:[%s1 + $0x10] sm:$0xff]
        %v1797 = vld [vmem:[%s1 + $0x18] sm:$0xff]
        %v1798 = vld [vmem:[%s2] sm:$0xff]
        %v1799 = vld [vmem:[%s2 + $0x8] sm:$0xff]
        %v1800 = vld [vmem:[%s2 + $0x10] sm:$0xff]
        %v1801 = vld [vmem:[%s2 + $0x18] sm:$0xff]
        %v1803 = vsel %vm1123, %v1790, 0
        %v1806 = vsel %vm1123, %v1791, 0
        %v1809 = vsel %vm1123, %v1792, 0
        %v1812 = vsel %vm1123, %v1793, 0
        %v1815 = vsel %vm1123, %v1798, 0
        %v1818 = vsel %vm1123, %v1799, 0
        %v1821 = vsel %vm1123, %v1800, 0
        %v1824 = vsel %vm1123, %v1801, 0
        %1826 = vmatprep.subr.mxu0 0.0
        %1827 = vmatpush1.xpose.msra.mxu0 0.0
        %1828 = vmatprep.subr.mxu0 0.0
        %1829 = vmatpush1.xpose.msra.mxu0 0.0
        %1830 = vmatprep.subr.mxu0 0.0
        %1831 = vmatpush1.xpose.msra.mxu0 0.0
        %1832 = vmatprep.subr.mxu0 0.0
        %1833 = vmatpush1.xpose.msra.mxu0 0.0
        %1834 = vmatprep.subr.mxu0 0.0
        %1835 = vmatpush1.xpose.msra.mxu0 0.0
        %1836 = vmatprep.subr.mxu0 0.0
        %1837 = vmatpush1.xpose.msra.mxu0 0.0
        %1838 = vmatprep.subr.mxu0 0.0
        %1839 = vmatpush1.xpose.msra.mxu0 0.0
        %1840 = vmatprep.subr.mxu0 0.0
        %1841 = vmatpush1.xpose.msra.mxu0 0.0
        %1842 = vmatprep.subr.mxu0 0.0
        %1843 = vmatpush1.xpose.msra.mxu0 0.0
        %1844 = vmatprep.subr.mxu0 0.0
        %1845 = vmatpush1.xpose.msra.mxu0 0.0
        %1846 = vmatprep.subr.mxu0 0.0
        %1847 = vmatpush1.xpose.msra.mxu0 0.0
        %1848 = vmatprep.subr.mxu0 0.0
        %1849 = vmatpush1.xpose.msra.mxu0 0.0
        %1850 = vmatprep.subr.mxu0 0.0
        %1851 = vmatpush1.xpose.msra.mxu0 %v1824
        %1852 = vmatprep.subr.mxu0 0.0
        %1853 = vmatpush1.xpose.msra.mxu0 %v1821
        %1854 = vmatprep.subr.mxu0 0.0
        %1855 = vmatpush1.xpose.msra.mxu0 %v1818
        %1856 = vmatprep.subr.mxu0 0.0
        %1857 = vmatpush1.xpose.msra.mxu0 %v1815
        %1858 = vmatprep.subr.mxu0 0.0
        %1859 = vmatpush2.xpose.msra.mxu0 0.0
        %1860 = vmatprep.subr.mxu0 0.0
        %1861 = vmatpush2.xpose.msra.mxu0 0.0
        %1862 = vmatprep.subr.mxu0 0.0
        %1863 = vmatpush2.xpose.msra.mxu0 0.0
        %1864 = vmatprep.subr.mxu0 0.0
        %1865 = vmatpush2.xpose.msra.mxu0 0.0
        %1866 = vmatprep.subr.mxu0 0.0
        %1867 = vmatpush2.xpose.msra.mxu0 0.0
        %1868 = vmatprep.subr.mxu0 0.0
        %1869 = vmatpush2.xpose.msra.mxu0 0.0
        %1870 = vmatprep.subr.mxu0 0.0
        %1871 = vmatpush2.xpose.msra.mxu0 0.0
        %1872 = vmatprep.subr.mxu0 0.0
        %1873 = vmatpush2.xpose.msra.mxu0 0.0
        %1874 = vmatprep.subr.mxu0 0.0
        %1875 = vmatpush2.xpose.msra.mxu0 0.0
        %1876 = vmatprep.subr.mxu0 0.0
        %1877 = vmatpush2.xpose.msra.mxu0 0.0
        %1878 = vmatprep.subr.mxu0 0.0
        %1879 = vmatpush2.xpose.msra.mxu0 0.0
        %1880 = vmatprep.subr.mxu0 0.0
        %1881 = vmatpush2.xpose.msra.mxu0 0.0
        %1882 = vmatprep.subr.mxu0 0.0
        %1883 = vmatpush2.xpose.msra.mxu0 0.0
        %1884 = vmatprep.subr.mxu0 0.0
        %1885 = vmatpush2.xpose.msra.mxu0 0.0
        %1886 = vmatprep.subr.mxu0 0.0
        %1887 = vmatpush2.xpose.msra.mxu0 0.0
        %1888 = vmatprep.subr.mxu0 0.0
        %1889 = vmatpush2.xpose.msra.mxu0 0.0
        %1890 = vmatprep.mubr.f32.mxu0 0.0
        %1891 = vmatmul.mubr.f32.gmra.mxu0 %v1803
        %v1892 = vpop.f32.mrf.mxu0
        %v1893 = vadd.f32 0.0, %v1892
        %v1894 = vpop.f32.mrf.mxu0
        %1895 = vmatprep.mubr.f32.mxu0 0.0
        %1896 = vmatmul.mubr.f32.gmra.mxu0 %v1806
        %v1897 = vpop.f32.mrf.mxu0
        %v1898 = vadd.f32 0.0, %v1897
        %v1899 = vpop.f32.mrf.mxu0
        %1900 = vmatprep.mubr.f32.mxu0 0.0
        %1901 = vmatmul.mubr.f32.gmra.mxu0 %v1809
        %v1902 = vpop.f32.mrf.mxu0
        %v1903 = vadd.f32 0.0, %v1902
        %v1904 = vpop.f32.mrf.mxu0
        %1905 = vmatprep.mubr.f32.mxu0 0.0
        %1906 = vmatmul.mubr.f32.gmra.mxu0 %v1812
        %v1907 = vpop.f32.mrf.mxu0
        %v1908 = vadd.f32 0.0, %v1907
        %v1909 = vpop.f32.mrf.mxu0
        %1910 = vdwg.mxu0
        %vm1911 = vcmask 261120
        %v1913 = vsel %vm1911, %v1768, 0
        %v1916 = vsel %vm1911, %v1769, 0
        %v1919 = vsel %vm1911, %v1770, 0
        %v1922 = vsel %vm1911, %v1771, 0
        %v1925 = vsel %vm1911, %v1794, 0
        %v1928 = vsel %vm1911, %v1795, 0
        %v1931 = vsel %vm1911, %v1796, 0
        %v1934 = vsel %vm1911, %v1797, 0
        %1936 = vmatprep.subr.mxu0 0.0
        %1937 = vmatpush1.xpose.msra.mxu0 0.0
        %1938 = vmatprep.subr.mxu0 0.0
        %1939 = vmatpush1.xpose.msra.mxu0 0.0
        %1940 = vmatprep.subr.mxu0 0.0
        %1941 = vmatpush1.xpose.msra.mxu0 0.0
        %1942 = vmatprep.subr.mxu0 0.0
        %1943 = vmatpush1.xpose.msra.mxu0 0.0
        %1944 = vmatprep.subr.mxu0 0.0
        %1945 = vmatpush1.xpose.msra.mxu0 0.0
        %1946 = vmatprep.subr.mxu0 0.0
        %1947 = vmatpush1.xpose.msra.mxu0 0.0
        %1948 = vmatprep.subr.mxu0 0.0
        %1949 = vmatpush1.xpose.msra.mxu0 0.0
        %1950 = vmatprep.subr.mxu0 0.0
        %1951 = vmatpush1.xpose.msra.mxu0 0.0
        %1952 = vmatprep.subr.mxu0 0.0
        %1953 = vmatpush1.xpose.msra.mxu0 0.0
        %1954 = vmatprep.subr.mxu0 0.0
        %1955 = vmatpush1.xpose.msra.mxu0 0.0
        %1956 = vmatprep.subr.mxu0 0.0
        %1957 = vmatpush1.xpose.msra.mxu0 0.0
        %1958 = vmatprep.subr.mxu0 0.0
        %1959 = vmatpush1.xpose.msra.mxu0 0.0
        %1960 = vmatprep.subr.mxu0 0.0
        %1961 = vmatpush1.xpose.msra.mxu0 %v1934
        %1962 = vmatprep.subr.mxu0 0.0
        %1963 = vmatpush1.xpose.msra.mxu0 %v1931
        %1964 = vmatprep.subr.mxu0 0.0
        %1965 = vmatpush1.xpose.msra.mxu0 %v1928
        %1966 = vmatprep.subr.mxu0 0.0
        %1967 = vmatpush1.xpose.msra.mxu0 %v1925
        %1968 = vmatprep.subr.mxu0 0.0
        %1969 = vmatpush2.xpose.msra.mxu0 0.0
        %1970 = vmatprep.subr.mxu0 0.0
        %1971 = vmatpush2.xpose.msra.mxu0 0.0
        %1972 = vmatprep.subr.mxu0 0.0
        %1973 = vmatpush2.xpose.msra.mxu0 0.0
        %1974 = vmatprep.subr.mxu0 0.0
        %1975 = vmatpush2.xpose.msra.mxu0 0.0
        %1976 = vmatprep.subr.mxu0 0.0
        %1977 = vmatpush2.xpose.msra.mxu0 0.0
        %1978 = vmatprep.subr.mxu0 0.0
        %1979 = vmatpush2.xpose.msra.mxu0 0.0
        %1980 = vmatprep.subr.mxu0 0.0
        %1981 = vmatpush2.xpose.msra.mxu0 0.0
        %1982 = vmatprep.subr.mxu0 0.0
        %1983 = vmatpush2.xpose.msra.mxu0 0.0
        %1984 = vmatprep.subr.mxu0 0.0
        %1985 = vmatpush2.xpose.msra.mxu0 0.0
        %1986 = vmatprep.subr.mxu0 0.0
        %1987 = vmatpush2.xpose.msra.mxu0 0.0
        %1988 = vmatprep.subr.mxu0 0.0
        %1989 = vmatpush2.xpose.msra.mxu0 0.0
        %1990 = vmatprep.subr.mxu0 0.0
        %1991 = vmatpush2.xpose.msra.mxu0 0.0
        %1992 = vmatprep.subr.mxu0 0.0
        %1993 = vmatpush2.xpose.msra.mxu0 0.0
        %1994 = vmatprep.subr.mxu0 0.0
        %1995 = vmatpush2.xpose.msra.mxu0 0.0
        %1996 = vmatprep.subr.mxu0 0.0
        %1997 = vmatpush2.xpose.msra.mxu0 0.0
        %1998 = vmatprep.subr.mxu0 0.0
        %1999 = vmatpush2.xpose.msra.mxu0 0.0
        %2000 = vmatprep.mubr.f32.mxu0 0.0
        %2001 = vmatmul.mubr.f32.gmra.mxu0 %v1913
        %v2002 = vpop.f32.mrf.mxu0
        %v2003 = vadd.f32 %v1893, %v2002
        %v2004 = vpop.f32.mrf.mxu0
        %2005 = vmatprep.mubr.f32.mxu0 0.0
        %2006 = vmatmul.mubr.f32.gmra.mxu0 %v1916
        %v2007 = vpop.f32.mrf.mxu0
        %v2008 = vadd.f32 %v1898, %v2007
        %v2009 = vpop.f32.mrf.mxu0
        %2010 = vmatprep.mubr.f32.mxu0 0.0
        %2011 = vmatmul.mubr.f32.gmra.mxu0 %v1919
        %v2012 = vpop.f32.mrf.mxu0
        %v2013 = vadd.f32 %v1903, %v2012
        %v2014 = vpop.f32.mrf.mxu0
        %2015 = vmatprep.mubr.f32.mxu0 0.0
        %2016 = vmatmul.mubr.f32.gmra.mxu0 %v1922
        %v2017 = vpop.f32.mrf.mxu0
        %v2018 = vadd.f32 %v1908, %v2017
        %v2019 = vpop.f32.mrf.mxu0
        %2020 = vdwg.mxu0
        %v2021 = vld [vmem:[%s3] sm:$0x1]
        %v2023 = vlaneseq
        %v2024 = vshrl.u32 %v2023, 7
        %v2025 = vsub.s32 0, %v2024
        %v2026 = vrot.slane %v2021, %v2025
        %v2028 = vadd.f32 %v2003, %v2026
        %v2029 = vadd.f32 %v2008, %v2026
        %v2030 = vadd.f32 %v2013, %v2026
        %v2031 = vadd.f32 %v2018, %v2026
        %vm2032 = vcmp.gt.f32.partialorder %v2028, 0.0
        %vm2033 = vcmp.gt.f32.partialorder %v2029, 0.0
        %vm2034 = vcmp.gt.f32.partialorder %v2030, 0.0
        %vm2035 = vcmp.gt.f32.partialorder %v2031, 0.0
        %v2036 = vmul.f32 %v2028, 0.1
        %v2037 = vmul.f32 %v2029, 0.1
        %v2038 = vmul.f32 %v2030, 0.1
        %v2039 = vmul.f32 %v2031, 0.1
        %v2040 = vsel %vm2032, %v2028, %v2036
        %v2041 = vsel %vm2033, %v2029, %v2037
        %v2042 = vsel %vm2034, %v2030, %v2038
        %v2043 = vsel %vm2035, %v2031, %v2039
        %v2044 = vld [vmem:[%s4] sm:$0xff]
        %v2045 = vld [vmem:[%s4 + $0x8] sm:$0xff]
        %v2046 = vld [vmem:[%s4 + $0x10] sm:$0xff]
        %v2047 = vld [vmem:[%s4 + $0x18] sm:$0xff]
        %v2048 = vld [vmem:[%s5] sm:$0x1]
        %v2050 = vlaneseq
        %v2051 = vshrl.u32 %v2050, 7
        %v2052 = vsub.s32 0, %v2051
        %v2053 = vrot.slane %v2048, %v2052
        %v2056 = vsel %vm1911, %v2040, 0
        %v2059 = vsel %vm1911, %v2041, 0
        %v2062 = vsel %vm1911, %v2042, 0
        %v2065 = vsel %vm1911, %v2043, 0
        %v2068 = vsel %vm1911, %v2044, 0
        %v2071 = vsel %vm1911, %v2045, 0
        %v2074 = vsel %vm1911, %v2046, 0
        %v2077 = vsel %vm1911, %v2047, 0
        %2079 = vmatprep.subr.mxu0 0.0
        %2080 = vmatpush1.xpose.msra.mxu0 0.0
        %2081 = vmatprep.subr.mxu0 0.0
        %2082 = vmatpush1.xpose.msra.mxu0 0.0
        %2083 = vmatprep.subr.mxu0 0.0
        %2084 = vmatpush1.xpose.msra.mxu0 0.0
        %2085 = vmatprep.subr.mxu0 0.0
        %2086 = vmatpush1.xpose.msra.mxu0 0.0
        %2087 = vmatprep.subr.mxu0 0.0
        %2088 = vmatpush1.xpose.msra.mxu0 0.0
        %2089 = vmatprep.subr.mxu0 0.0
        %2090 = vmatpush1.xpose.msra.mxu0 0.0
        %2091 = vmatprep.subr.mxu0 0.0
        %2092 = vmatpush1.xpose.msra.mxu0 0.0
        %2093 = vmatprep.subr.mxu0 0.0
        %2094 = vmatpush1.xpose.msra.mxu0 0.0
        %2095 = vmatprep.subr.mxu0 0.0
        %2096 = vmatpush1.xpose.msra.mxu0 0.0
        %2097 = vmatprep.subr.mxu0 0.0
        %2098 = vmatpush1.xpose.msra.mxu0 0.0
        %2099 = vmatprep.subr.mxu0 0.0
        %2100 = vmatpush1.xpose.msra.mxu0 0.0
        %2101 = vmatprep.subr.mxu0 0.0
        %2102 = vmatpush1.xpose.msra.mxu0 0.0
        %2103 = vmatprep.subr.mxu0 0.0
        %2104 = vmatpush1.xpose.msra.mxu0 %v2077
        %2105 = vmatprep.subr.mxu0 0.0
        %2106 = vmatpush1.xpose.msra.mxu0 %v2074
        %2107 = vmatprep.subr.mxu0 0.0
        %2108 = vmatpush1.xpose.msra.mxu0 %v2071
        %2109 = vmatprep.subr.mxu0 0.0
        %2110 = vmatpush1.xpose.msra.mxu0 %v2068
        %2111 = vmatprep.subr.mxu0 0.0
        %2112 = vmatpush2.xpose.msra.mxu0 0.0
        %2113 = vmatprep.subr.mxu0 0.0
        %2114 = vmatpush2.xpose.msra.mxu0 0.0
        %2115 = vmatprep.subr.mxu0 0.0
        %2116 = vmatpush2.xpose.msra.mxu0 0.0
        %2117 = vmatprep.subr.mxu0 0.0
        %2118 = vmatpush2.xpose.msra.mxu0 0.0
        %2119 = vmatprep.subr.mxu0 0.0
        %2120 = vmatpush2.xpose.msra.mxu0 0.0
        %2121 = vmatprep.subr.mxu0 0.0
        %2122 = vmatpush2.xpose.msra.mxu0 0.0
        %2123 = vmatprep.subr.mxu0 0.0
        %2124 = vmatpush2.xpose.msra.mxu0 0.0
        %2125 = vmatprep.subr.mxu0 0.0
        %2126 = vmatpush2.xpose.msra.mxu0 0.0
        %2127 = vmatprep.subr.mxu0 0.0
        %2128 = vmatpush2.xpose.msra.mxu0 0.0
        %2129 = vmatprep.subr.mxu0 0.0
        %2130 = vmatpush2.xpose.msra.mxu0 0.0
        %2131 = vmatprep.subr.mxu0 0.0
        %2132 = vmatpush2.xpose.msra.mxu0 0.0
        %2133 = vmatprep.subr.mxu0 0.0
        %2134 = vmatpush2.xpose.msra.mxu0 0.0
        %2135 = vmatprep.subr.mxu0 0.0
        %2136 = vmatpush2.xpose.msra.mxu0 0.0
        %2137 = vmatprep.subr.mxu0 0.0
        %2138 = vmatpush2.xpose.msra.mxu0 0.0
        %2139 = vmatprep.subr.mxu0 0.0
        %2140 = vmatpush2.xpose.msra.mxu0 0.0
        %2141 = vmatprep.subr.mxu0 0.0
        %2142 = vmatpush2.xpose.msra.mxu0 0.0
        %2143 = vmatprep.mubr.f32.mxu0 0.0
        %2144 = vmatmul.mubr.f32.gmra.mxu0 %v2056
        %v2145 = vpop.f32.mrf.mxu0
        %v2146 = vadd.f32 %v2053, %v2145
        %v2147 = vpop.f32.mrf.mxu0
        %2148 = vmatprep.mubr.f32.mxu0 0.0
        %2149 = vmatmul.mubr.f32.gmra.mxu0 %v2059
        %v2150 = vpop.f32.mrf.mxu0
        %v2151 = vadd.f32 %v2053, %v2150
        %v2152 = vpop.f32.mrf.mxu0
        %2153 = vmatprep.mubr.f32.mxu0 0.0
        %2154 = vmatmul.mubr.f32.gmra.mxu0 %v2062
        %v2155 = vpop.f32.mrf.mxu0
        %v2156 = vadd.f32 %v2053, %v2155
        %v2157 = vpop.f32.mrf.mxu0
        %2158 = vmatprep.mubr.f32.mxu0 0.0
        %2159 = vmatmul.mubr.f32.gmra.mxu0 %v2065
        %v2160 = vpop.f32.mrf.mxu0
        %v2161 = vadd.f32 %v2053, %v2160
        %v2162 = vpop.f32.mrf.mxu0
        %2163 = vdwg.mxu0
        %vm2164 = vcmp.gt.f32.partialorder %v2146, 0.0
        %vm2165 = vcmp.gt.f32.partialorder %v2151, 0.0
        %vm2166 = vcmp.gt.f32.partialorder %v2156, 0.0
        %vm2167 = vcmp.gt.f32.partialorder %v2161, 0.0
        %v2168 = vmul.f32 %v2146, 0.1
        %v2169 = vmul.f32 %v2151, 0.1
        %v2170 = vmul.f32 %v2156, 0.1
        %v2171 = vmul.f32 %v2161, 0.1
        %v2172 = vsel %vm2164, %v2146, %v2168
        %v2173 = vsel %vm2165, %v2151, %v2169
        %v2174 = vsel %vm2166, %v2156, %v2170
        %v2175 = vsel %vm2167, %v2161, %v2171
        %v2176 = vld [vmem:[%s6] sm:$0xff]
        %v2177 = vld [vmem:[%s6 + $0x8] sm:$0xff]
        %v2178 = vld [vmem:[%s6 + $0x10] sm:$0xff]
        %v2179 = vld [vmem:[%s6 + $0x18] sm:$0xff]
        %v2181 = vsel %vm1911, %v2172, 0
        %v2184 = vsel %vm1911, %v2173, 0
        %v2187 = vsel %vm1911, %v2174, 0
        %v2190 = vsel %vm1911, %v2175, 0
        %v2193 = vsel %vm1911, %v2176, 0
        %v2196 = vsel %vm1911, %v2177, 0
        %v2199 = vsel %vm1911, %v2178, 0
        %v2202 = vsel %vm1911, %v2179, 0
        %2204 = vmatprep.subr.mxu0 0.0
        %2205 = vmatpush1.xpose.msra.mxu0 0.0
        %2206 = vmatprep.subr.mxu0 0.0
        %2207 = vmatpush1.xpose.msra.mxu0 0.0
        %2208 = vmatprep.subr.mxu0 0.0
        %2209 = vmatpush1.xpose.msra.mxu0 0.0
        %2210 = vmatprep.subr.mxu0 0.0
        %2211 = vmatpush1.xpose.msra.mxu0 0.0
        %2212 = vmatprep.subr.mxu0 0.0
        %2213 = vmatpush1.xpose.msra.mxu0 0.0
        %2214 = vmatprep.subr.mxu0 0.0
        %2215 = vmatpush1.xpose.msra.mxu0 0.0
        %2216 = vmatprep.subr.mxu0 0.0
        %2217 = vmatpush1.xpose.msra.mxu0 0.0
        %2218 = vmatprep.subr.mxu0 0.0
        %2219 = vmatpush1.xpose.msra.mxu0 0.0
        %2220 = vmatprep.subr.mxu0 0.0
        %2221 = vmatpush1.xpose.msra.mxu0 0.0
        %2222 = vmatprep.subr.mxu0 0.0
        %2223 = vmatpush1.xpose.msra.mxu0 0.0
        %2224 = vmatprep.subr.mxu0 0.0
        %2225 = vmatpush1.xpose.msra.mxu0 0.0
        %2226 = vmatprep.subr.mxu0 0.0
        %2227 = vmatpush1.xpose.msra.mxu0 0.0
        %2228 = vmatprep.subr.mxu0 0.0
        %2229 = vmatpush1.xpose.msra.mxu0 %v2202
        %2230 = vmatprep.subr.mxu0 0.0
        %2231 = vmatpush1.xpose.msra.mxu0 %v2199
        %2232 = vmatprep.subr.mxu0 0.0
        %2233 = vmatpush1.xpose.msra.mxu0 %v2196
        %2234 = vmatprep.subr.mxu0 0.0
        %2235 = vmatpush1.xpose.msra.mxu0 %v2193
        %2236 = vmatprep.subr.mxu0 0.0
        %2237 = vmatpush2.xpose.msra.mxu0 0.0
        %2238 = vmatprep.subr.mxu0 0.0
        %2239 = vmatpush2.xpose.msra.mxu0 0.0
        %2240 = vmatprep.subr.mxu0 0.0
        %2241 = vmatpush2.xpose.msra.mxu0 0.0
        %2242 = vmatprep.subr.mxu0 0.0
        %2243 = vmatpush2.xpose.msra.mxu0 0.0
        %2244 = vmatprep.subr.mxu0 0.0
        %2245 = vmatpush2.xpose.msra.mxu0 0.0
        %2246 = vmatprep.subr.mxu0 0.0
        %2247 = vmatpush2.xpose.msra.mxu0 0.0
        %2248 = vmatprep.subr.mxu0 0.0
        %2249 = vmatpush2.xpose.msra.mxu0 0.0
        %2250 = vmatprep.subr.mxu0 0.0
        %2251 = vmatpush2.xpose.msra.mxu0 0.0
        %2252 = vmatprep.subr.mxu0 0.0
        %2253 = vmatpush2.xpose.msra.mxu0 0.0
        %2254 = vmatprep.subr.mxu0 0.0
        %2255 = vmatpush2.xpose.msra.mxu0 0.0
        %2256 = vmatprep.subr.mxu0 0.0
        %2257 = vmatpush2.xpose.msra.mxu0 0.0
        %2258 = vmatprep.subr.mxu0 0.0
        %2259 = vmatpush2.xpose.msra.mxu0 0.0
        %2260 = vmatprep.subr.mxu0 0.0
        %2261 = vmatpush2.xpose.msra.mxu0 0.0
        %2262 = vmatprep.subr.mxu0 0.0
        %2263 = vmatpush2.xpose.msra.mxu0 0.0
        %2264 = vmatprep.subr.mxu0 0.0
        %2265 = vmatpush2.xpose.msra.mxu0 0.0
        %2266 = vmatprep.subr.mxu0 0.0
        %2267 = vmatpush2.xpose.msra.mxu0 0.0
        %2268 = vmatprep.mubr.f32.mxu0 0.0
        %2269 = vmatmul.mubr.f32.gmra.mxu0 %v2181
        %v2270 = vpop.f32.mrf.mxu0
        %v2271 = vadd.f32 0.0, %v2270
        %v2272 = vpop.f32.mrf.mxu0
        %2273 = vmatprep.mubr.f32.mxu0 0.0
        %2274 = vmatmul.mubr.f32.gmra.mxu0 %v2184
        %v2275 = vpop.f32.mrf.mxu0
        %v2276 = vadd.f32 0.0, %v2275
        %v2277 = vpop.f32.mrf.mxu0
        %2278 = vmatprep.mubr.f32.mxu0 0.0
        %2279 = vmatmul.mubr.f32.gmra.mxu0 %v2187
        %v2280 = vpop.f32.mrf.mxu0
        %v2281 = vadd.f32 0.0, %v2280
        %v2282 = vpop.f32.mrf.mxu0
        %2283 = vmatprep.mubr.f32.mxu0 0.0
        %2284 = vmatmul.mubr.f32.gmra.mxu0 %v2190
        %v2285 = vpop.f32.mrf.mxu0
        %v2286 = vadd.f32 0.0, %v2285
        %v2287 = vpop.f32.mrf.mxu0
        %2288 = vdwg.mxu0
        %2289 = vxpose.xlu0.b32.start [1/16] %v1768, 128
        %2290 = vxpose.xlu0.b32.cont [2/16] 0.0, 128
        %2291 = vxpose.xlu0.b32.cont [3/16] 0.0, 128
        %2292 = vxpose.xlu0.b32.cont [4/16] 0.0, 128
        %2293 = vxpose.xlu0.b32.cont [5/16] 0.0, 128
        %2294 = vxpose.xlu0.b32.cont [6/16] 0.0, 128
        %2295 = vxpose.xlu0.b32.cont [7/16] 0.0, 128
        %2296 = vxpose.xlu0.b32.cont [8/16] 0.0, 128
        %2297 = vxpose.xlu0.b32.cont [9/16] 0.0, 128
        %2298 = vxpose.xlu0.b32.cont [10/16] 0.0, 128
        %2299 = vxpose.xlu0.b32.cont [11/16] 0.0, 128
        %2300 = vxpose.xlu0.b32.cont [12/16] 0.0, 128
        %2301 = vxpose.xlu0.b32.cont [13/16] 0.0, 128
        %2302 = vxpose.xlu0.b32.cont [14/16] 0.0, 128
        %2303 = vxpose.xlu0.b32.cont [15/16] 0.0, 128
        %2304 = vxpose.xlu0.b32.end [16/16] 0.0, 128
        %v2305 = vpop.trf.xlu0
        %v2306 = vpop.trf.xlu0
        %v2307 = vpop.trf.xlu0
        %v2308 = vpop.trf.xlu0
        %v2309 = vpop.trf.xlu0
        %v2310 = vpop.trf.xlu0
        %v2311 = vpop.trf.xlu0
        %v2312 = vpop.trf.xlu0
        %v2313 = vpop.trf.xlu0
        %v2314 = vpop.trf.xlu0
        %v2315 = vpop.trf.xlu0
        %v2316 = vpop.trf.xlu0
        %v2317 = vpop.trf.xlu0
        %v2318 = vpop.trf.xlu0
        %v2319 = vpop.trf.xlu0
        %v2320 = vpop.trf.xlu0
        %2321 = vxpose.xlu0.b32.start [1/16] %v1769, 128
        %2322 = vxpose.xlu0.b32.cont [2/16] 0.0, 128
        %2323 = vxpose.xlu0.b32.cont [3/16] 0.0, 128
        %2324 = vxpose.xlu0.b32.cont [4/16] 0.0, 128
        %2325 = vxpose.xlu0.b32.cont [5/16] 0.0, 128
        %2326 = vxpose.xlu0.b32.cont [6/16] 0.0, 128
        %2327 = vxpose.xlu0.b32.cont [7/16] 0.0, 128
        %2328 = vxpose.xlu0.b32.cont [8/16] 0.0, 128
        %2329 = vxpose.xlu0.b32.cont [9/16] 0.0, 128
        %2330 = vxpose.xlu0.b32.cont [10/16] 0.0, 128
        %2331 = vxpose.xlu0.b32.cont [11/16] 0.0, 128
        %2332 = vxpose.xlu0.b32.cont [12/16] 0.0, 128
        %2333 = vxpose.xlu0.b32.cont [13/16] 0.0, 128
        %2334 = vxpose.xlu0.b32.cont [14/16] 0.0, 128
        %2335 = vxpose.xlu0.b32.cont [15/16] 0.0, 128
        %2336 = vxpose.xlu0.b32.end [16/16] 0.0, 128
        %v2337 = vpop.trf.xlu0
        %v2338 = vpop.trf.xlu0
        %v2339 = vpop.trf.xlu0
        %v2340 = vpop.trf.xlu0
        %v2341 = vpop.trf.xlu0
        %v2342 = vpop.trf.xlu0
        %v2343 = vpop.trf.xlu0
        %v2344 = vpop.trf.xlu0
        %v2345 = vpop.trf.xlu0
        %v2346 = vpop.trf.xlu0
        %v2347 = vpop.trf.xlu0
        %v2348 = vpop.trf.xlu0
        %v2349 = vpop.trf.xlu0
        %v2350 = vpop.trf.xlu0
        %v2351 = vpop.trf.xlu0
        %v2352 = vpop.trf.xlu0
        %2353 = vxpose.xlu0.b32.start [1/16] %v1770, 128
        %2354 = vxpose.xlu0.b32.cont [2/16] 0.0, 128
        %2355 = vxpose.xlu0.b32.cont [3/16] 0.0, 128
        %2356 = vxpose.xlu0.b32.cont [4/16] 0.0, 128
        %2357 = vxpose.xlu0.b32.cont [5/16] 0.0, 128
        %2358 = vxpose.xlu0.b32.cont [6/16] 0.0, 128
        %2359 = vxpose.xlu0.b32.cont [7/16] 0.0, 128
        %2360 = vxpose.xlu0.b32.cont [8/16] 0.0, 128
        %2361 = vxpose.xlu0.b32.cont [9/16] 0.0, 128
        %2362 = vxpose.xlu0.b32.cont [10/16] 0.0, 128
        %2363 = vxpose.xlu0.b32.cont [11/16] 0.0, 128
        %2364 = vxpose.xlu0.b32.cont [12/16] 0.0, 128
        %2365 = vxpose.xlu0.b32.cont [13/16] 0.0, 128
        %2366 = vxpose.xlu0.b32.cont [14/16] 0.0, 128
        %2367 = vxpose.xlu0.b32.cont [15/16] 0.0, 128
        %2368 = vxpose.xlu0.b32.end [16/16] 0.0, 128
        %v2369 = vpop.trf.xlu0
        %v2370 = vpop.trf.xlu0
        %v2371 = vpop.trf.xlu0
        %v2372 = vpop.trf.xlu0
        %v2373 = vpop.trf.xlu0
        %v2374 = vpop.trf.xlu0
        %v2375 = vpop.trf.xlu0
        %v2376 = vpop.trf.xlu0
        %v2377 = vpop.trf.xlu0
        %v2378 = vpop.trf.xlu0
        %v2379 = vpop.trf.xlu0
        %v2380 = vpop.trf.xlu0
        %v2381 = vpop.trf.xlu0
        %v2382 = vpop.trf.xlu0
        %v2383 = vpop.trf.xlu0
        %v2384 = vpop.trf.xlu0
        %2385 = vxpose.xlu0.b32.start [1/16] %v1771, 128
        %2386 = vxpose.xlu0.b32.cont [2/16] 0.0, 128
        %2387 = vxpose.xlu0.b32.cont [3/16] 0.0, 128
        %2388 = vxpose.xlu0.b32.cont [4/16] 0.0, 128
        %2389 = vxpose.xlu0.b32.cont [5/16] 0.0, 128
        %2390 = vxpose.xlu0.b32.cont [6/16] 0.0, 128
        %2391 = vxpose.xlu0.b32.cont [7/16] 0.0, 128
        %2392 = vxpose.xlu0.b32.cont [8/16] 0.0, 128
        %2393 = vxpose.xlu0.b32.cont [9/16] 0.0, 128
        %2394 = vxpose.xlu0.b32.cont [10/16] 0.0, 128
        %2395 = vxpose.xlu0.b32.cont [11/16] 0.0, 128
        %2396 = vxpose.xlu0.b32.cont [12/16] 0.0, 128
        %2397 = vxpose.xlu0.b32.cont [13/16] 0.0, 128
        %2398 = vxpose.xlu0.b32.cont [14/16] 0.0, 128
        %2399 = vxpose.xlu0.b32.cont [15/16] 0.0, 128
        %2400 = vxpose.xlu0.b32.end [16/16] 0.0, 128
        %v2401 = vpop.trf.xlu0
        %v2402 = vpop.trf.xlu0
        %v2403 = vpop.trf.xlu0
        %v2404 = vpop.trf.xlu0
        %v2405 = vpop.trf.xlu0
        %v2406 = vpop.trf.xlu0
        %v2407 = vpop.trf.xlu0
        %v2408 = vpop.trf.xlu0
        %v2409 = vpop.trf.xlu0
        %v2410 = vpop.trf.xlu0
        %v2411 = vpop.trf.xlu0
        %v2412 = vpop.trf.xlu0
        %v2413 = vpop.trf.xlu0
        %v2414 = vpop.trf.xlu0
        %v2415 = vpop.trf.xlu0
        %v2416 = vpop.trf.xlu0
        %v2417 = vld [vmem:[%s7] sm:$0xff]
        %v2418 = vld [vmem:[%s7 + $0x8] sm:$0xff]
        %v2419 = vld [vmem:[%s7 + $0x10] sm:$0xff]
        %v2420 = vld [vmem:[%s7 + $0x18] sm:$0xff]
        %v2421 = vld [vmem:[%s8] sm:$0xff]
        %v2422 = vld [vmem:[%s8 + $0x8] sm:$0xff]
        %v2423 = vld [vmem:[%s8 + $0x10] sm:$0xff]
        %v2424 = vld [vmem:[%s8 + $0x18] sm:$0xff]
        %v2426 = vsel %vm1123, %v522, 0
        %v2429 = vsel %vm1123, %v523, 0
        %v2432 = vsel %vm1123, %v524, 0
        %v2435 = vsel %vm1123, %v525, 0
        %v2438 = vsel %vm1123, %v526, 0
        %v2441 = vsel %vm1123, %v527, 0
        %v2444 = vsel %vm1123, %v528, 0
        %v2447 = vsel %vm1123, %v529, 0
        %v2450 = vsel %vm1123, %v530, 0
        %v2453 = vsel %vm1123, %v531, 0
        %v2456 = vsel %vm1123, %v532, 0
        %v2459 = vsel %vm1123, %v533, 0
        %v2462 = vsel %vm1123, %v534, 0
        %v2465 = vsel %vm1123, %v535, 0
        %v2468 = vsel %vm1123, %v536, 0
        %v2471 = vsel %vm1123, %v537, 0
        %v2474 = vsel %vm1123, %v2421, 0
        %v2477 = vsel %vm1123, %v2422, 0
        %v2480 = vsel %vm1123, %v2423, 0
        %v2483 = vsel %vm1123, %v2424, 0
        %2485 = vmatprep.subr.mxu0 0.0
        %2486 = vmatpush1.xpose.msra.mxu0 0.0
        %2487 = vmatprep.subr.mxu0 0.0
        %2488 = vmatpush1.xpose.msra.mxu0 0.0
        %2489 = vmatprep.subr.mxu0 0.0
        %2490 = vmatpush1.xpose.msra.mxu0 0.0
        %2491 = vmatprep.subr.mxu0 0.0
        %2492 = vmatpush1.xpose.msra.mxu0 0.0
        %2493 = vmatprep.subr.mxu0 0.0
        %2494 = vmatpush1.xpose.msra.mxu0 0.0
        %2495 = vmatprep.subr.mxu0 0.0
        %2496 = vmatpush1.xpose.msra.mxu0 0.0
        %2497 = vmatprep.subr.mxu0 0.0
        %2498 = vmatpush1.xpose.msra.mxu0 0.0
        %2499 = vmatprep.subr.mxu0 0.0
        %2500 = vmatpush1.xpose.msra.mxu0 0.0
        %2501 = vmatprep.subr.mxu0 0.0
        %2502 = vmatpush1.xpose.msra.mxu0 0.0
        %2503 = vmatprep.subr.mxu0 0.0
        %2504 = vmatpush1.xpose.msra.mxu0 0.0
        %2505 = vmatprep.subr.mxu0 0.0
        %2506 = vmatpush1.xpose.msra.mxu0 0.0
        %2507 = vmatprep.subr.mxu0 0.0
        %2508 = vmatpush1.xpose.msra.mxu0 0.0
        %2509 = vmatprep.subr.mxu0 0.0
        %2510 = vmatpush1.xpose.msra.mxu0 %v2483
        %2511 = vmatprep.subr.mxu0 0.0
        %2512 = vmatpush1.xpose.msra.mxu0 %v2480
        %2513 = vmatprep.subr.mxu0 0.0
        %2514 = vmatpush1.xpose.msra.mxu0 %v2477
        %2515 = vmatprep.subr.mxu0 0.0
        %2516 = vmatpush1.xpose.msra.mxu0 %v2474
        %2517 = vmatprep.subr.mxu0 0.0
        %2518 = vmatpush2.xpose.msra.mxu0 0.0
        %2519 = vmatprep.subr.mxu0 0.0
        %2520 = vmatpush2.xpose.msra.mxu0 0.0
        %2521 = vmatprep.subr.mxu0 0.0
        %2522 = vmatpush2.xpose.msra.mxu0 0.0
        %2523 = vmatprep.subr.mxu0 0.0
        %2524 = vmatpush2.xpose.msra.mxu0 0.0
        %2525 = vmatprep.subr.mxu0 0.0
        %2526 = vmatpush2.xpose.msra.mxu0 0.0
        %2527 = vmatprep.subr.mxu0 0.0
        %2528 = vmatpush2.xpose.msra.mxu0 0.0
        %2529 = vmatprep.subr.mxu0 0.0
        %2530 = vmatpush2.xpose.msra.mxu0 0.0
        %2531 = vmatprep.subr.mxu0 0.0
        %2532 = vmatpush2.xpose.msra.mxu0 0.0
        %2533 = vmatprep.subr.mxu0 0.0
        %2534 = vmatpush2.xpose.msra.mxu0 0.0
        %2535 = vmatprep.subr.mxu0 0.0
        %2536 = vmatpush2.xpose.msra.mxu0 0.0
        %2537 = vmatprep.subr.mxu0 0.0
        %2538 = vmatpush2.xpose.msra.mxu0 0.0
        %2539 = vmatprep.subr.mxu0 0.0
        %2540 = vmatpush2.xpose.msra.mxu0 0.0
        %2541 = vmatprep.subr.mxu0 0.0
        %2542 = vmatpush2.xpose.msra.mxu0 0.0
        %2543 = vmatprep.subr.mxu0 0.0
        %2544 = vmatpush2.xpose.msra.mxu0 0.0
        %2545 = vmatprep.subr.mxu0 0.0
        %2546 = vmatpush2.xpose.msra.mxu0 0.0
        %2547 = vmatprep.subr.mxu0 0.0
        %2548 = vmatpush2.xpose.msra.mxu0 0.0
        %2549 = vmatprep.mubr.f32.mxu0 0.0
        %2550 = vmatmul.mubr.f32.gmra.mxu0 %v2426
        %v2551 = vpop.f32.mrf.mxu0
        %v2552 = vadd.f32 0.0, %v2551
        %v2553 = vpop.f32.mrf.mxu0
        %2554 = vmatprep.mubr.f32.mxu0 0.0
        %2555 = vmatmul.mubr.f32.gmra.mxu0 %v2429
        %v2556 = vpop.f32.mrf.mxu0
        %v2557 = vadd.f32 0.0, %v2556
        %v2558 = vpop.f32.mrf.mxu0
        %2559 = vmatprep.mubr.f32.mxu0 0.0
        %2560 = vmatmul.mubr.f32.gmra.mxu0 %v2432
        %v2561 = vpop.f32.mrf.mxu0
        %v2562 = vadd.f32 0.0, %v2561
        %v2563 = vpop.f32.mrf.mxu0
        %2564 = vmatprep.mubr.f32.mxu0 0.0
        %2565 = vmatmul.mubr.f32.gmra.mxu0 %v2435
        %v2566 = vpop.f32.mrf.mxu0
        %v2567 = vadd.f32 0.0, %v2566
        %v2568 = vpop.f32.mrf.mxu0
        %2569 = vmatprep.mubr.f32.mxu0 0.0
        %2570 = vmatmul.mubr.f32.gmra.mxu0 %v2438
        %v2571 = vpop.f32.mrf.mxu0
        %v2572 = vadd.f32 0.0, %v2571
        %v2573 = vpop.f32.mrf.mxu0
        %2574 = vmatprep.mubr.f32.mxu0 0.0
        %2575 = vmatmul.mubr.f32.gmra.mxu0 %v2441
        %v2576 = vpop.f32.mrf.mxu0
        %v2577 = vadd.f32 0.0, %v2576
        %v2578 = vpop.f32.mrf.mxu0
        %2579 = vmatprep.mubr.f32.mxu0 0.0
        %2580 = vmatmul.mubr.f32.gmra.mxu0 %v2444
        %v2581 = vpop.f32.mrf.mxu0
        %v2582 = vadd.f32 0.0, %v2581
        %v2583 = vpop.f32.mrf.mxu0
        %2584 = vmatprep.mubr.f32.mxu0 0.0
        %2585 = vmatmul.mubr.f32.gmra.mxu0 %v2447
        %v2586 = vpop.f32.mrf.mxu0
        %v2587 = vadd.f32 0.0, %v2586
        %v2588 = vpop.f32.mrf.mxu0
        %2589 = vmatprep.mubr.f32.mxu0 0.0
        %2590 = vmatmul.mubr.f32.gmra.mxu0 %v2450
        %v2591 = vpop.f32.mrf.mxu0
        %v2592 = vadd.f32 0.0, %v2591
        %v2593 = vpop.f32.mrf.mxu0
        %2594 = vmatprep.mubr.f32.mxu0 0.0
        %2595 = vmatmul.mubr.f32.gmra.mxu0 %v2453
        %v2596 = vpop.f32.mrf.mxu0
        %v2597 = vadd.f32 0.0, %v2596
        %v2598 = vpop.f32.mrf.mxu0
        %2599 = vmatprep.mubr.f32.mxu0 0.0
        %2600 = vmatmul.mubr.f32.gmra.mxu0 %v2456
        %v2601 = vpop.f32.mrf.mxu0
        %v2602 = vadd.f32 0.0, %v2601
        %v2603 = vpop.f32.mrf.mxu0
        %2604 = vmatprep.mubr.f32.mxu0 0.0
        %2605 = vmatmul.mubr.f32.gmra.mxu0 %v2459
        %v2606 = vpop.f32.mrf.mxu0
        %v2607 = vadd.f32 0.0, %v2606
        %v2608 = vpop.f32.mrf.mxu0
        %2609 = vmatprep.mubr.f32.mxu0 0.0
        %2610 = vmatmul.mubr.f32.gmra.mxu0 %v2462
        %v2611 = vpop.f32.mrf.mxu0
        %v2612 = vadd.f32 0.0, %v2611
        %v2613 = vpop.f32.mrf.mxu0
        %2614 = vmatprep.mubr.f32.mxu0 0.0
        %2615 = vmatmul.mubr.f32.gmra.mxu0 %v2465
        %v2616 = vpop.f32.mrf.mxu0
        %v2617 = vadd.f32 0.0, %v2616
        %v2618 = vpop.f32.mrf.mxu0
        %2619 = vmatprep.mubr.f32.mxu0 0.0
        %2620 = vmatmul.mubr.f32.gmra.mxu0 %v2468
        %v2621 = vpop.f32.mrf.mxu0
        %v2622 = vadd.f32 0.0, %v2621
        %v2623 = vpop.f32.mrf.mxu0
        %2624 = vmatprep.mubr.f32.mxu0 0.0
        %2625 = vmatmul.mubr.f32.gmra.mxu0 %v2471
        %v2626 = vpop.f32.mrf.mxu0
        %v2627 = vadd.f32 0.0, %v2626
        %v2628 = vpop.f32.mrf.mxu0
        %2629 = vdwg.mxu0
        %v2631 = vsel %vm1123, %v2305, 0
        %v2634 = vsel %vm1123, %v2306, 0
        %v2637 = vsel %vm1123, %v2307, 0
        %v2640 = vsel %vm1123, %v2308, 0
        %v2643 = vsel %vm1123, %v2337, 0
        %v2646 = vsel %vm1123, %v2338, 0
        %v2649 = vsel %vm1123, %v2339, 0
        %v2652 = vsel %vm1123, %v2340, 0
        %v2655 = vsel %vm1123, %v2369, 0
        %v2658 = vsel %vm1123, %v2370, 0
        %v2661 = vsel %vm1123, %v2371, 0
        %v2664 = vsel %vm1123, %v2372, 0
        %v2667 = vsel %vm1123, %v2401, 0
        %v2670 = vsel %vm1123, %v2402, 0
        %v2673 = vsel %vm1123, %v2403, 0
        %v2676 = vsel %vm1123, %v2404, 0
        %v2679 = vsel %vm1123, %v2417, 0
        %v2682 = vsel %vm1123, %v2418, 0
        %v2685 = vsel %vm1123, %v2419, 0
        %v2688 = vsel %vm1123, %v2420, 0
        %2690 = vmatprep.subr.mxu0 0.0
        %2691 = vmatpush1.xpose.msra.mxu0 0.0
        %2692 = vmatprep.subr.mxu0 0.0
        %2693 = vmatpush1.xpose.msra.mxu0 0.0
        %2694 = vmatprep.subr.mxu0 0.0
        %2695 = vmatpush1.xpose.msra.mxu0 0.0
        %2696 = vmatprep.subr.mxu0 0.0
        %2697 = vmatpush1.xpose.msra.mxu0 0.0
        %2698 = vmatprep.subr.mxu0 0.0
        %2699 = vmatpush1.xpose.msra.mxu0 0.0
        %2700 = vmatprep.subr.mxu0 0.0
        %2701 = vmatpush1.xpose.msra.mxu0 0.0
        %2702 = vmatprep.subr.mxu0 0.0
        %2703 = vmatpush1.xpose.msra.mxu0 0.0
        %2704 = vmatprep.subr.mxu0 0.0
        %2705 = vmatpush1.xpose.msra.mxu0 0.0
        %2706 = vmatprep.subr.mxu0 0.0
        %2707 = vmatpush1.xpose.msra.mxu0 0.0
        %2708 = vmatprep.subr.mxu0 0.0
        %2709 = vmatpush1.xpose.msra.mxu0 0.0
        %2710 = vmatprep.subr.mxu0 0.0
        %2711 = vmatpush1.xpose.msra.mxu0 0.0
        %2712 = vmatprep.subr.mxu0 0.0
        %2713 = vmatpush1.xpose.msra.mxu0 0.0
        %2714 = vmatprep.subr.mxu0 0.0
        %2715 = vmatpush1.xpose.msra.mxu0 %v2688
        %2716 = vmatprep.subr.mxu0 0.0
        %2717 = vmatpush1.xpose.msra.mxu0 %v2685
        %2718 = vmatprep.subr.mxu0 0.0
        %2719 = vmatpush1.xpose.msra.mxu0 %v2682
        %2720 = vmatprep.subr.mxu0 0.0
        %2721 = vmatpush1.xpose.msra.mxu0 %v2679
        %2722 = vmatprep.subr.mxu0 0.0
        %2723 = vmatpush2.xpose.msra.mxu0 0.0
        %2724 = vmatprep.subr.mxu0 0.0
        %2725 = vmatpush2.xpose.msra.mxu0 0.0
        %2726 = vmatprep.subr.mxu0 0.0
        %2727 = vmatpush2.xpose.msra.mxu0 0.0
        %2728 = vmatprep.subr.mxu0 0.0
        %2729 = vmatpush2.xpose.msra.mxu0 0.0
        %2730 = vmatprep.subr.mxu0 0.0
        %2731 = vmatpush2.xpose.msra.mxu0 0.0
        %2732 = vmatprep.subr.mxu0 0.0
        %2733 = vmatpush2.xpose.msra.mxu0 0.0
        %2734 = vmatprep.subr.mxu0 0.0
        %2735 = vmatpush2.xpose.msra.mxu0 0.0
        %2736 = vmatprep.subr.mxu0 0.0
        %2737 = vmatpush2.xpose.msra.mxu0 0.0
        %2738 = vmatprep.subr.mxu0 0.0
        %2739 = vmatpush2.xpose.msra.mxu0 0.0
        %2740 = vmatprep.subr.mxu0 0.0
        %2741 = vmatpush2.xpose.msra.mxu0 0.0
        %2742 = vmatprep.subr.mxu0 0.0
        %2743 = vmatpush2.xpose.msra.mxu0 0.0
        %2744 = vmatprep.subr.mxu0 0.0
        %2745 = vmatpush2.xpose.msra.mxu0 0.0
        %2746 = vmatprep.subr.mxu0 0.0
        %2747 = vmatpush2.xpose.msra.mxu0 0.0
        %2748 = vmatprep.subr.mxu0 0.0
        %2749 = vmatpush2.xpose.msra.mxu0 0.0
        %2750 = vmatprep.subr.mxu0 0.0
        %2751 = vmatpush2.xpose.msra.mxu0 0.0
        %2752 = vmatprep.subr.mxu0 0.0
        %2753 = vmatpush2.xpose.msra.mxu0 0.0
        %2754 = vmatprep.mubr.f32.mxu0 0.0
        %2755 = vmatmul.mubr.f32.gmra.mxu0 %v2631
        %v2756 = vpop.f32.mrf.mxu0
        %v2757 = vadd.f32 %v2552, %v2756
        %v2758 = vpop.f32.mrf.mxu0
        %2759 = vmatprep.mubr.f32.mxu0 0.0
        %2760 = vmatmul.mubr.f32.gmra.mxu0 %v2634
        %v2761 = vpop.f32.mrf.mxu0
        %v2762 = vadd.f32 %v2557, %v2761
        %v2763 = vpop.f32.mrf.mxu0
        %2764 = vmatprep.mubr.f32.mxu0 0.0
        %2765 = vmatmul.mubr.f32.gmra.mxu0 %v2637
        %v2766 = vpop.f32.mrf.mxu0
        %v2767 = vadd.f32 %v2562, %v2766
        %v2768 = vpop.f32.mrf.mxu0
        %2769 = vmatprep.mubr.f32.mxu0 0.0
        %2770 = vmatmul.mubr.f32.gmra.mxu0 %v2640
        %v2771 = vpop.f32.mrf.mxu0
        %v2772 = vadd.f32 %v2567, %v2771
        %v2773 = vpop.f32.mrf.mxu0
        %2774 = vmatprep.mubr.f32.mxu0 0.0
        %2775 = vmatmul.mubr.f32.gmra.mxu0 %v2643
        %v2776 = vpop.f32.mrf.mxu0
        %v2777 = vadd.f32 %v2572, %v2776
        %v2778 = vpop.f32.mrf.mxu0
        %2779 = vmatprep.mubr.f32.mxu0 0.0
        %2780 = vmatmul.mubr.f32.gmra.mxu0 %v2646
        %v2781 = vpop.f32.mrf.mxu0
        %v2782 = vadd.f32 %v2577, %v2781
        %v2783 = vpop.f32.mrf.mxu0
        %2784 = vmatprep.mubr.f32.mxu0 0.0
        %2785 = vmatmul.mubr.f32.gmra.mxu0 %v2649
        %v2786 = vpop.f32.mrf.mxu0
        %v2787 = vadd.f32 %v2582, %v2786
        %v2788 = vpop.f32.mrf.mxu0
        %2789 = vmatprep.mubr.f32.mxu0 0.0
        %2790 = vmatmul.mubr.f32.gmra.mxu0 %v2652
        %v2791 = vpop.f32.mrf.mxu0
        %v2792 = vadd.f32 %v2587, %v2791
        %v2793 = vpop.f32.mrf.mxu0
        %2794 = vmatprep.mubr.f32.mxu0 0.0
        %2795 = vmatmul.mubr.f32.gmra.mxu0 %v2655
        %v2796 = vpop.f32.mrf.mxu0
        %v2797 = vadd.f32 %v2592, %v2796
        %v2798 = vpop.f32.mrf.mxu0
        %2799 = vmatprep.mubr.f32.mxu0 0.0
        %2800 = vmatmul.mubr.f32.gmra.mxu0 %v2658
        %v2801 = vpop.f32.mrf.mxu0
        %v2802 = vadd.f32 %v2597, %v2801
        %v2803 = vpop.f32.mrf.mxu0
        %2804 = vmatprep.mubr.f32.mxu0 0.0
        %2805 = vmatmul.mubr.f32.gmra.mxu0 %v2661
        %v2806 = vpop.f32.mrf.mxu0
        %v2807 = vadd.f32 %v2602, %v2806
        %v2808 = vpop.f32.mrf.mxu0
        %2809 = vmatprep.mubr.f32.mxu0 0.0
        %2810 = vmatmul.mubr.f32.gmra.mxu0 %v2664
        %v2811 = vpop.f32.mrf.mxu0
        %v2812 = vadd.f32 %v2607, %v2811
        %v2813 = vpop.f32.mrf.mxu0
        %2814 = vmatprep.mubr.f32.mxu0 0.0
        %2815 = vmatmul.mubr.f32.gmra.mxu0 %v2667
        %v2816 = vpop.f32.mrf.mxu0
        %v2817 = vadd.f32 %v2612, %v2816
        %v2818 = vpop.f32.mrf.mxu0
        %2819 = vmatprep.mubr.f32.mxu0 0.0
        %2820 = vmatmul.mubr.f32.gmra.mxu0 %v2670
        %v2821 = vpop.f32.mrf.mxu0
        %v2822 = vadd.f32 %v2617, %v2821
        %v2823 = vpop.f32.mrf.mxu0
        %2824 = vmatprep.mubr.f32.mxu0 0.0
        %2825 = vmatmul.mubr.f32.gmra.mxu0 %v2673
        %v2826 = vpop.f32.mrf.mxu0
        %v2827 = vadd.f32 %v2622, %v2826
        %v2828 = vpop.f32.mrf.mxu0
        %2829 = vmatprep.mubr.f32.mxu0 0.0
        %2830 = vmatmul.mubr.f32.gmra.mxu0 %v2676
        %v2831 = vpop.f32.mrf.mxu0
        %v2832 = vadd.f32 %v2627, %v2831
        %v2833 = vpop.f32.mrf.mxu0
        %2834 = vdwg.mxu0
        %v2835 = vld [vmem:[%s9] sm:$0x1]
        %v2837 = vlaneseq
        %v2838 = vshrl.u32 %v2837, 7
        %v2839 = vsub.s32 0, %v2838
        %v2840 = vrot.slane %v2835, %v2839
        %v2842 = vadd.f32 %v2757, %v2840
        %v2843 = vadd.f32 %v2762, %v2840
        %v2844 = vadd.f32 %v2767, %v2840
        %v2845 = vadd.f32 %v2772, %v2840
        %v2846 = vadd.f32 %v2777, %v2840
        %v2847 = vadd.f32 %v2782, %v2840
        %v2848 = vadd.f32 %v2787, %v2840
        %v2849 = vadd.f32 %v2792, %v2840
        %v2850 = vadd.f32 %v2797, %v2840
        %v2851 = vadd.f32 %v2802, %v2840
        %v2852 = vadd.f32 %v2807, %v2840
        %v2853 = vadd.f32 %v2812, %v2840
        %v2854 = vadd.f32 %v2817, %v2840
        %v2855 = vadd.f32 %v2822, %v2840
        %v2856 = vadd.f32 %v2827, %v2840
        %v2857 = vadd.f32 %v2832, %v2840
        %vm2858 = vcmp.gt.f32.partialorder %v2842, 0.0
        %vm2859 = vcmp.gt.f32.partialorder %v2843, 0.0
        %vm2860 = vcmp.gt.f32.partialorder %v2844, 0.0
        %vm2861 = vcmp.gt.f32.partialorder %v2845, 0.0
        %vm2862 = vcmp.gt.f32.partialorder %v2846, 0.0
        %vm2863 = vcmp.gt.f32.partialorder %v2847, 0.0
        %vm2864 = vcmp.gt.f32.partialorder %v2848, 0.0
        %vm2865 = vcmp.gt.f32.partialorder %v2849, 0.0
        %vm2866 = vcmp.gt.f32.partialorder %v2850, 0.0
        %vm2867 = vcmp.gt.f32.partialorder %v2851, 0.0
        %vm2868 = vcmp.gt.f32.partialorder %v2852, 0.0
        %vm2869 = vcmp.gt.f32.partialorder %v2853, 0.0
        %vm2870 = vcmp.gt.f32.partialorder %v2854, 0.0
        %vm2871 = vcmp.gt.f32.partialorder %v2855, 0.0
        %vm2872 = vcmp.gt.f32.partialorder %v2856, 0.0
        %vm2873 = vcmp.gt.f32.partialorder %v2857, 0.0
        %v2874 = vmul.f32 %v2842, 0.1
        %v2875 = vmul.f32 %v2843, 0.1
        %v2876 = vmul.f32 %v2844, 0.1
        %v2877 = vmul.f32 %v2845, 0.1
        %v2878 = vmul.f32 %v2846, 0.1
        %v2879 = vmul.f32 %v2847, 0.1
        %v2880 = vmul.f32 %v2848, 0.1
        %v2881 = vmul.f32 %v2849, 0.1
        %v2882 = vmul.f32 %v2850, 0.1
        %v2883 = vmul.f32 %v2851, 0.1
        %v2884 = vmul.f32 %v2852, 0.1
        %v2885 = vmul.f32 %v2853, 0.1
        %v2886 = vmul.f32 %v2854, 0.1
        %v2887 = vmul.f32 %v2855, 0.1
        %v2888 = vmul.f32 %v2856, 0.1
        %v2889 = vmul.f32 %v2857, 0.1
        %v2890 = vsel %vm2858, %v2842, %v2874
        %v2891 = vsel %vm2859, %v2843, %v2875
        %v2892 = vsel %vm2860, %v2844, %v2876
        %v2893 = vsel %vm2861, %v2845, %v2877
        %v2894 = vsel %vm2862, %v2846, %v2878
        %v2895 = vsel %vm2863, %v2847, %v2879
        %v2896 = vsel %vm2864, %v2848, %v2880
        %v2897 = vsel %vm2865, %v2849, %v2881
        %v2898 = vsel %vm2866, %v2850, %v2882
        %v2899 = vsel %vm2867, %v2851, %v2883
        %v2900 = vsel %vm2868, %v2852, %v2884
        %v2901 = vsel %vm2869, %v2853, %v2885
        %v2902 = vsel %vm2870, %v2854, %v2886
        %v2903 = vsel %vm2871, %v2855, %v2887
        %v2904 = vsel %vm2872, %v2856, %v2888
        %v2905 = vsel %vm2873, %v2857, %v2889
        %v2906 = vld [vmem:[%s10] sm:$0xff]
        %v2907 = vld [vmem:[%s10 + $0x8] sm:$0xff]
        %v2908 = vld [vmem:[%s10 + $0x10] sm:$0xff]
        %v2909 = vld [vmem:[%s10 + $0x18] sm:$0xff]
        %v2910 = vld [vmem:[%s11] sm:$0x1]
        %v2912 = vlaneseq
        %v2913 = vshrl.u32 %v2912, 7
        %v2914 = vsub.s32 0, %v2913
        %v2915 = vrot.slane %v2910, %v2914
        %v2918 = vsel %vm1911, %v2890, 0
        %v2921 = vsel %vm1911, %v2891, 0
        %v2924 = vsel %vm1911, %v2892, 0
        %v2927 = vsel %vm1911, %v2893, 0
        %v2930 = vsel %vm1911, %v2894, 0
        %v2933 = vsel %vm1911, %v2895, 0
        %v2936 = vsel %vm1911, %v2896, 0
        %v2939 = vsel %vm1911, %v2897, 0
        %v2942 = vsel %vm1911, %v2898, 0
        %v2945 = vsel %vm1911, %v2899, 0
        %v2948 = vsel %vm1911, %v2900, 0
        %v2951 = vsel %vm1911, %v2901, 0
        %v2954 = vsel %vm1911, %v2902, 0
        %v2957 = vsel %vm1911, %v2903, 0
        %v2960 = vsel %vm1911, %v2904, 0
        %v2963 = vsel %vm1911, %v2905, 0
        %v2966 = vsel %vm1911, %v2906, 0
        %v2969 = vsel %vm1911, %v2907, 0
        %v2972 = vsel %vm1911, %v2908, 0
        %v2975 = vsel %vm1911, %v2909, 0
        %2977 = vmatprep.subr.mxu0 0.0
        %2978 = vmatpush1.xpose.msra.mxu0 0.0
        %2979 = vmatprep.subr.mxu0 0.0
        %2980 = vmatpush1.xpose.msra.mxu0 0.0
        %2981 = vmatprep.subr.mxu0 0.0
        %2982 = vmatpush1.xpose.msra.mxu0 0.0
        %2983 = vmatprep.subr.mxu0 0.0
        %2984 = vmatpush1.xpose.msra.mxu0 0.0
        %2985 = vmatprep.subr.mxu0 0.0
        %2986 = vmatpush1.xpose.msra.mxu0 0.0
        %2987 = vmatprep.subr.mxu0 0.0
        %2988 = vmatpush1.xpose.msra.mxu0 0.0
        %2989 = vmatprep.subr.mxu0 0.0
        %2990 = vmatpush1.xpose.msra.mxu0 0.0
        %2991 = vmatprep.subr.mxu0 0.0
        %2992 = vmatpush1.xpose.msra.mxu0 0.0
        %2993 = vmatprep.subr.mxu0 0.0
        %2994 = vmatpush1.xpose.msra.mxu0 0.0
        %2995 = vmatprep.subr.mxu0 0.0
        %2996 = vmatpush1.xpose.msra.mxu0 0.0
        %2997 = vmatprep.subr.mxu0 0.0
        %2998 = vmatpush1.xpose.msra.mxu0 0.0
        %2999 = vmatprep.subr.mxu0 0.0
        %3000 = vmatpush1.xpose.msra.mxu0 0.0
        %3001 = vmatprep.subr.mxu0 0.0
        %3002 = vmatpush1.xpose.msra.mxu0 %v2975
        %3003 = vmatprep.subr.mxu0 0.0
        %3004 = vmatpush1.xpose.msra.mxu0 %v2972
        %3005 = vmatprep.subr.mxu0 0.0
        %3006 = vmatpush1.xpose.msra.mxu0 %v2969
        %3007 = vmatprep.subr.mxu0 0.0
        %3008 = vmatpush1.xpose.msra.mxu0 %v2966
        %3009 = vmatprep.subr.mxu0 0.0
        %3010 = vmatpush2.xpose.msra.mxu0 0.0
        %3011 = vmatprep.subr.mxu0 0.0
        %3012 = vmatpush2.xpose.msra.mxu0 0.0
        %3013 = vmatprep.subr.mxu0 0.0
        %3014 = vmatpush2.xpose.msra.mxu0 0.0
        %3015 = vmatprep.subr.mxu0 0.0
        %3016 = vmatpush2.xpose.msra.mxu0 0.0
        %3017 = vmatprep.subr.mxu0 0.0
        %3018 = vmatpush2.xpose.msra.mxu0 0.0
        %3019 = vmatprep.subr.mxu0 0.0
        %3020 = vmatpush2.xpose.msra.mxu0 0.0
        %3021 = vmatprep.subr.mxu0 0.0
        %3022 = vmatpush2.xpose.msra.mxu0 0.0
        %3023 = vmatprep.subr.mxu0 0.0
        %3024 = vmatpush2.xpose.msra.mxu0 0.0
        %3025 = vmatprep.subr.mxu0 0.0
        %3026 = vmatpush2.xpose.msra.mxu0 0.0
        %3027 = vmatprep.subr.mxu0 0.0
        %3028 = vmatpush2.xpose.msra.mxu0 0.0
        %3029 = vmatprep.subr.mxu0 0.0
        %3030 = vmatpush2.xpose.msra.mxu0 0.0
        %3031 = vmatprep.subr.mxu0 0.0
        %3032 = vmatpush2.xpose.msra.mxu0 0.0
        %3033 = vmatprep.subr.mxu0 0.0
        %3034 = vmatpush2.xpose.msra.mxu0 0.0
        %3035 = vmatprep.subr.mxu0 0.0
        %3036 = vmatpush2.xpose.msra.mxu0 0.0
        %3037 = vmatprep.subr.mxu0 0.0
        %3038 = vmatpush2.xpose.msra.mxu0 0.0
        %3039 = vmatprep.subr.mxu0 0.0
        %3040 = vmatpush2.xpose.msra.mxu0 0.0
        %3041 = vmatprep.mubr.f32.mxu0 0.0
        %3042 = vmatmul.mubr.f32.gmra.mxu0 %v2918
        %v3043 = vpop.f32.mrf.mxu0
        %v3044 = vadd.f32 %v2915, %v3043
        %v3045 = vpop.f32.mrf.mxu0
        %3046 = vmatprep.mubr.f32.mxu0 0.0
        %3047 = vmatmul.mubr.f32.gmra.mxu0 %v2921
        %v3048 = vpop.f32.mrf.mxu0
        %v3049 = vadd.f32 %v2915, %v3048
        %v3050 = vpop.f32.mrf.mxu0
        %3051 = vmatprep.mubr.f32.mxu0 0.0
        %3052 = vmatmul.mubr.f32.gmra.mxu0 %v2924
        %v3053 = vpop.f32.mrf.mxu0
        %v3054 = vadd.f32 %v2915, %v3053
        %v3055 = vpop.f32.mrf.mxu0
        %3056 = vmatprep.mubr.f32.mxu0 0.0
        %3057 = vmatmul.mubr.f32.gmra.mxu0 %v2927
        %v3058 = vpop.f32.mrf.mxu0
        %v3059 = vadd.f32 %v2915, %v3058
        %v3060 = vpop.f32.mrf.mxu0
        %3061 = vmatprep.mubr.f32.mxu0 0.0
        %3062 = vmatmul.mubr.f32.gmra.mxu0 %v2930
        %v3063 = vpop.f32.mrf.mxu0
        %v3064 = vadd.f32 %v2915, %v3063
        %v3065 = vpop.f32.mrf.mxu0
        %3066 = vmatprep.mubr.f32.mxu0 0.0
        %3067 = vmatmul.mubr.f32.gmra.mxu0 %v2933
        %v3068 = vpop.f32.mrf.mxu0
        %v3069 = vadd.f32 %v2915, %v3068
        %v3070 = vpop.f32.mrf.mxu0
        %3071 = vmatprep.mubr.f32.mxu0 0.0
        %3072 = vmatmul.mubr.f32.gmra.mxu0 %v2936
        %v3073 = vpop.f32.mrf.mxu0
        %v3074 = vadd.f32 %v2915, %v3073
        %v3075 = vpop.f32.mrf.mxu0
        %3076 = vmatprep.mubr.f32.mxu0 0.0
        %3077 = vmatmul.mubr.f32.gmra.mxu0 %v2939
        %v3078 = vpop.f32.mrf.mxu0
        %v3079 = vadd.f32 %v2915, %v3078
        %v3080 = vpop.f32.mrf.mxu0
        %3081 = vmatprep.mubr.f32.mxu0 0.0
        %3082 = vmatmul.mubr.f32.gmra.mxu0 %v2942
        %v3083 = vpop.f32.mrf.mxu0
        %v3084 = vadd.f32 %v2915, %v3083
        %v3085 = vpop.f32.mrf.mxu0
        %3086 = vmatprep.mubr.f32.mxu0 0.0
        %3087 = vmatmul.mubr.f32.gmra.mxu0 %v2945
        %v3088 = vpop.f32.mrf.mxu0
        %v3089 = vadd.f32 %v2915, %v3088
        %v3090 = vpop.f32.mrf.mxu0
        %3091 = vmatprep.mubr.f32.mxu0 0.0
        %3092 = vmatmul.mubr.f32.gmra.mxu0 %v2948
        %v3093 = vpop.f32.mrf.mxu0
        %v3094 = vadd.f32 %v2915, %v3093
        %v3095 = vpop.f32.mrf.mxu0
        %3096 = vmatprep.mubr.f32.mxu0 0.0
        %3097 = vmatmul.mubr.f32.gmra.mxu0 %v2951
        %v3098 = vpop.f32.mrf.mxu0
        %v3099 = vadd.f32 %v2915, %v3098
        %v3100 = vpop.f32.mrf.mxu0
        %3101 = vmatprep.mubr.f32.mxu0 0.0
        %3102 = vmatmul.mubr.f32.gmra.mxu0 %v2954
        %v3103 = vpop.f32.mrf.mxu0
        %v3104 = vadd.f32 %v2915, %v3103
        %v3105 = vpop.f32.mrf.mxu0
        %3106 = vmatprep.mubr.f32.mxu0 0.0
        %3107 = vmatmul.mubr.f32.gmra.mxu0 %v2957
        %v3108 = vpop.f32.mrf.mxu0
        %v3109 = vadd.f32 %v2915, %v3108
        %v3110 = vpop.f32.mrf.mxu0
        %3111 = vmatprep.mubr.f32.mxu0 0.0
        %3112 = vmatmul.mubr.f32.gmra.mxu0 %v2960
        %v3113 = vpop.f32.mrf.mxu0
        %v3114 = vadd.f32 %v2915, %v3113
        %v3115 = vpop.f32.mrf.mxu0
        %3116 = vmatprep.mubr.f32.mxu0 0.0
        %3117 = vmatmul.mubr.f32.gmra.mxu0 %v2963
        %v3118 = vpop.f32.mrf.mxu0
        %v3119 = vadd.f32 %v2915, %v3118
        %v3120 = vpop.f32.mrf.mxu0
        %3121 = vdwg.mxu0
        %vm3122 = vcmp.gt.f32.partialorder %v3044, 0.0
        %vm3123 = vcmp.gt.f32.partialorder %v3049, 0.0
        %vm3124 = vcmp.gt.f32.partialorder %v3054, 0.0
        %vm3125 = vcmp.gt.f32.partialorder %v3059, 0.0
        %vm3126 = vcmp.gt.f32.partialorder %v3064, 0.0
        %vm3127 = vcmp.gt.f32.partialorder %v3069, 0.0
        %vm3128 = vcmp.gt.f32.partialorder %v3074, 0.0
        %vm3129 = vcmp.gt.f32.partialorder %v3079, 0.0
        %vm3130 = vcmp.gt.f32.partialorder %v3084, 0.0
        %vm3131 = vcmp.gt.f32.partialorder %v3089, 0.0
        %vm3132 = vcmp.gt.f32.partialorder %v3094, 0.0
        %vm3133 = vcmp.gt.f32.partialorder %v3099, 0.0
        %vm3134 = vcmp.gt.f32.partialorder %v3104, 0.0
        %vm3135 = vcmp.gt.f32.partialorder %v3109, 0.0
        %vm3136 = vcmp.gt.f32.partialorder %v3114, 0.0
        %vm3137 = vcmp.gt.f32.partialorder %v3119, 0.0
        %v3138 = vmul.f32 %v3044, 0.1
        %v3139 = vmul.f32 %v3049, 0.1
        %v3140 = vmul.f32 %v3054, 0.1
        %v3141 = vmul.f32 %v3059, 0.1
        %v3142 = vmul.f32 %v3064, 0.1
        %v3143 = vmul.f32 %v3069, 0.1
        %v3144 = vmul.f32 %v3074, 0.1
        %v3145 = vmul.f32 %v3079, 0.1
        %v3146 = vmul.f32 %v3084, 0.1
        %v3147 = vmul.f32 %v3089, 0.1
        %v3148 = vmul.f32 %v3094, 0.1
        %v3149 = vmul.f32 %v3099, 0.1
        %v3150 = vmul.f32 %v3104, 0.1
        %v3151 = vmul.f32 %v3109, 0.1
        %v3152 = vmul.f32 %v3114, 0.1
        %v3153 = vmul.f32 %v3119, 0.1
        %v3154 = vsel %vm3122, %v3044, %v3138
        %v3155 = vsel %vm3123, %v3049, %v3139
        %v3156 = vsel %vm3124, %v3054, %v3140
        %v3157 = vsel %vm3125, %v3059, %v3141
        %v3158 = vsel %vm3126, %v3064, %v3142
        %v3159 = vsel %vm3127, %v3069, %v3143
        %v3160 = vsel %vm3128, %v3074, %v3144
        %v3161 = vsel %vm3129, %v3079, %v3145
        %v3162 = vsel %vm3130, %v3084, %v3146
        %v3163 = vsel %vm3131, %v3089, %v3147
        %v3164 = vsel %vm3132, %v3094, %v3148
        %v3165 = vsel %vm3133, %v3099, %v3149
        %v3166 = vsel %vm3134, %v3104, %v3150
        %v3167 = vsel %vm3135, %v3109, %v3151
        %v3168 = vsel %vm3136, %v3114, %v3152
        %v3169 = vsel %vm3137, %v3119, %v3153
        %v3170 = vld [vmem:[%s12] sm:$0xff]
        %v3172 = vsel %vm1911, %v3154, 0
        %v3175 = vsel %vm1911, %v3155, 0
        %v3178 = vsel %vm1911, %v3156, 0
        %v3181 = vsel %vm1911, %v3157, 0
        %v3184 = vsel %vm1911, %v3158, 0
        %v3187 = vsel %vm1911, %v3159, 0
        %v3190 = vsel %vm1911, %v3160, 0
        %v3193 = vsel %vm1911, %v3161, 0
        %v3196 = vsel %vm1911, %v3162, 0
        %v3199 = vsel %vm1911, %v3163, 0
        %v3202 = vsel %vm1911, %v3164, 0
        %v3205 = vsel %vm1911, %v3165, 0
        %v3208 = vsel %vm1911, %v3166, 0
        %v3211 = vsel %vm1911, %v3167, 0
        %v3214 = vsel %vm1911, %v3168, 0
        %v3217 = vsel %vm1911, %v3169, 0
        %v3220 = vsel %vm1911, %v3170, 0
        %3222 = vmatprep.subr.mxu0 0.0
        %3223 = vmatpush1.xpose.msra.mxu0 0.0
        %3224 = vmatprep.subr.mxu0 0.0
        %3225 = vmatpush1.xpose.msra.mxu0 0.0
        %3226 = vmatprep.subr.mxu0 0.0
        %3227 = vmatpush1.xpose.msra.mxu0 0.0
        %3228 = vmatprep.subr.mxu0 0.0
        %3229 = vmatpush1.xpose.msra.mxu0 0.0
        %3230 = vmatprep.subr.mxu0 0.0
        %3231 = vmatpush1.xpose.msra.mxu0 0.0
        %3232 = vmatprep.subr.mxu0 0.0
        %3233 = vmatpush1.xpose.msra.mxu0 0.0
        %3234 = vmatprep.subr.mxu0 0.0
        %3235 = vmatpush1.xpose.msra.mxu0 0.0
        %3236 = vmatprep.subr.mxu0 0.0
        %3237 = vmatpush1.xpose.msra.mxu0 0.0
        %3238 = vmatprep.subr.mxu0 0.0
        %3239 = vmatpush1.xpose.msra.mxu0 0.0
        %3240 = vmatprep.subr.mxu0 0.0
        %3241 = vmatpush1.xpose.msra.mxu0 0.0
        %3242 = vmatprep.subr.mxu0 0.0
        %3243 = vmatpush1.xpose.msra.mxu0 0.0
        %3244 = vmatprep.subr.mxu0 0.0
        %3245 = vmatpush1.xpose.msra.mxu0 0.0
        %3246 = vmatprep.subr.mxu0 0.0
        %3247 = vmatpush1.xpose.msra.mxu0 0.0
        %3248 = vmatprep.subr.mxu0 0.0
        %3249 = vmatpush1.xpose.msra.mxu0 0.0
        %3250 = vmatprep.subr.mxu0 0.0
        %3251 = vmatpush1.xpose.msra.mxu0 0.0
        %3252 = vmatprep.subr.mxu0 0.0
        %3253 = vmatpush1.xpose.msra.mxu0 %v3220
        %3254 = vmatprep.subr.mxu0 0.0
        %3255 = vmatpush2.xpose.msra.mxu0 0.0
        %3256 = vmatprep.subr.mxu0 0.0
        %3257 = vmatpush2.xpose.msra.mxu0 0.0
        %3258 = vmatprep.subr.mxu0 0.0
        %3259 = vmatpush2.xpose.msra.mxu0 0.0
        %3260 = vmatprep.subr.mxu0 0.0
        %3261 = vmatpush2.xpose.msra.mxu0 0.0
        %3262 = vmatprep.subr.mxu0 0.0
        %3263 = vmatpush2.xpose.msra.mxu0 0.0
        %3264 = vmatprep.subr.mxu0 0.0
        %3265 = vmatpush2.xpose.msra.mxu0 0.0
        %3266 = vmatprep.subr.mxu0 0.0
        %3267 = vmatpush2.xpose.msra.mxu0 0.0
        %3268 = vmatprep.subr.mxu0 0.0
        %3269 = vmatpush2.xpose.msra.mxu0 0.0
        %3270 = vmatprep.subr.mxu0 0.0
        %3271 = vmatpush2.xpose.msra.mxu0 0.0
        %3272 = vmatprep.subr.mxu0 0.0
        %3273 = vmatpush2.xpose.msra.mxu0 0.0
        %3274 = vmatprep.subr.mxu0 0.0
        %3275 = vmatpush2.xpose.msra.mxu0 0.0
        %3276 = vmatprep.subr.mxu0 0.0
        %3277 = vmatpush2.xpose.msra.mxu0 0.0
        %3278 = vmatprep.subr.mxu0 0.0
        %3279 = vmatpush2.xpose.msra.mxu0 0.0
        %3280 = vmatprep.subr.mxu0 0.0
        %3281 = vmatpush2.xpose.msra.mxu0 0.0
        %3282 = vmatprep.subr.mxu0 0.0
        %3283 = vmatpush2.xpose.msra.mxu0 0.0
        %3284 = vmatprep.subr.mxu0 0.0
        %3285 = vmatpush2.xpose.msra.mxu0 0.0
        %3286 = vmatprep.mubr.f32.mxu0 0.0
        %3287 = vmatmul.mubr.f32.gmra.mxu0 %v3172
        %v3288 = vpop.f32.mrf.mxu0
        %v3289 = vadd.f32 0.0, %v3288
        %v3290 = vpop.f32.mrf.mxu0
        %3291 = vmatprep.mubr.f32.mxu0 0.0
        %3292 = vmatmul.mubr.f32.gmra.mxu0 %v3175
        %v3293 = vpop.f32.mrf.mxu0
        %v3294 = vadd.f32 0.0, %v3293
        %v3295 = vpop.f32.mrf.mxu0
        %3296 = vmatprep.mubr.f32.mxu0 0.0
        %3297 = vmatmul.mubr.f32.gmra.mxu0 %v3178
        %v3298 = vpop.f32.mrf.mxu0
        %v3299 = vadd.f32 0.0, %v3298
        %v3300 = vpop.f32.mrf.mxu0
        %3301 = vmatprep.mubr.f32.mxu0 0.0
        %3302 = vmatmul.mubr.f32.gmra.mxu0 %v3181
        %v3303 = vpop.f32.mrf.mxu0
        %v3304 = vadd.f32 0.0, %v3303
        %v3305 = vpop.f32.mrf.mxu0
        %3306 = vmatprep.mubr.f32.mxu0 0.0
        %3307 = vmatmul.mubr.f32.gmra.mxu0 %v3184
        %v3308 = vpop.f32.mrf.mxu0
        %v3309 = vadd.f32 0.0, %v3308
        %v3310 = vpop.f32.mrf.mxu0
        %3311 = vmatprep.mubr.f32.mxu0 0.0
        %3312 = vmatmul.mubr.f32.gmra.mxu0 %v3187
        %v3313 = vpop.f32.mrf.mxu0
        %v3314 = vadd.f32 0.0, %v3313
        %v3315 = vpop.f32.mrf.mxu0
        %3316 = vmatprep.mubr.f32.mxu0 0.0
        %3317 = vmatmul.mubr.f32.gmra.mxu0 %v3190
        %v3318 = vpop.f32.mrf.mxu0
        %v3319 = vadd.f32 0.0, %v3318
        %v3320 = vpop.f32.mrf.mxu0
        %3321 = vmatprep.mubr.f32.mxu0 0.0
        %3322 = vmatmul.mubr.f32.gmra.mxu0 %v3193
        %v3323 = vpop.f32.mrf.mxu0
        %v3324 = vadd.f32 0.0, %v3323
        %v3325 = vpop.f32.mrf.mxu0
        %3326 = vmatprep.mubr.f32.mxu0 0.0
        %3327 = vmatmul.mubr.f32.gmra.mxu0 %v3196
        %v3328 = vpop.f32.mrf.mxu0
        %v3329 = vadd.f32 0.0, %v3328
        %v3330 = vpop.f32.mrf.mxu0
        %3331 = vmatprep.mubr.f32.mxu0 0.0
        %3332 = vmatmul.mubr.f32.gmra.mxu0 %v3199
        %v3333 = vpop.f32.mrf.mxu0
        %v3334 = vadd.f32 0.0, %v3333
        %v3335 = vpop.f32.mrf.mxu0
        %3336 = vmatprep.mubr.f32.mxu0 0.0
        %3337 = vmatmul.mubr.f32.gmra.mxu0 %v3202
        %v3338 = vpop.f32.mrf.mxu0
        %v3339 = vadd.f32 0.0, %v3338
        %v3340 = vpop.f32.mrf.mxu0
        %3341 = vmatprep.mubr.f32.mxu0 0.0
        %3342 = vmatmul.mubr.f32.gmra.mxu0 %v3205
        %v3343 = vpop.f32.mrf.mxu0
        %v3344 = vadd.f32 0.0, %v3343
        %v3345 = vpop.f32.mrf.mxu0
        %3346 = vmatprep.mubr.f32.mxu0 0.0
        %3347 = vmatmul.mubr.f32.gmra.mxu0 %v3208
        %v3348 = vpop.f32.mrf.mxu0
        %v3349 = vadd.f32 0.0, %v3348
        %v3350 = vpop.f32.mrf.mxu0
        %3351 = vmatprep.mubr.f32.mxu0 0.0
        %3352 = vmatmul.mubr.f32.gmra.mxu0 %v3211
        %v3353 = vpop.f32.mrf.mxu0
        %v3354 = vadd.f32 0.0, %v3353
        %v3355 = vpop.f32.mrf.mxu0
        %3356 = vmatprep.mubr.f32.mxu0 0.0
        %3357 = vmatmul.mubr.f32.gmra.mxu0 %v3214
        %v3358 = vpop.f32.mrf.mxu0
        %v3359 = vadd.f32 0.0, %v3358
        %v3360 = vpop.f32.mrf.mxu0
        %3361 = vmatprep.mubr.f32.mxu0 0.0
        %3362 = vmatmul.mubr.f32.gmra.mxu0 %v3217
        %v3363 = vpop.f32.mrf.mxu0
        %v3364 = vadd.f32 0.0, %v3363
        %v3365 = vpop.f32.mrf.mxu0
        %3366 = vdwg.mxu0
        %3367 = vxpose.xlu0.b32.start [1/16] %v3289, 128
        %3368 = vxpose.xlu0.b32.cont [2/16] %v3294, 128
        %3369 = vxpose.xlu0.b32.cont [3/16] %v3299, 128
        %3370 = vxpose.xlu0.b32.cont [4/16] %v3304, 128
        %3371 = vxpose.xlu0.b32.cont [5/16] 0.0, 128
        %3372 = vxpose.xlu0.b32.cont [6/16] 0.0, 128
        %3373 = vxpose.xlu0.b32.cont [7/16] 0.0, 128
        %3374 = vxpose.xlu0.b32.cont [8/16] 0.0, 128
        %3375 = vxpose.xlu0.b32.cont [9/16] 0.0, 128
        %3376 = vxpose.xlu0.b32.cont [10/16] 0.0, 128
        %3377 = vxpose.xlu0.b32.cont [11/16] 0.0, 128
        %3378 = vxpose.xlu0.b32.cont [12/16] 0.0, 128
        %3379 = vxpose.xlu0.b32.cont [13/16] 0.0, 128
        %3380 = vxpose.xlu0.b32.cont [14/16] 0.0, 128
        %3381 = vxpose.xlu0.b32.cont [15/16] 0.0, 128
        %3382 = vxpose.xlu0.b32.end [16/16] 0.0, 128
        %v3383 = vpop.trf.xlu0
        %v3384 = vpop.trf.xlu0
        %v3385 = vpop.trf.xlu0
        %v3386 = vpop.trf.xlu0
        %v3387 = vpop.trf.xlu0
        %v3388 = vpop.trf.xlu0
        %v3389 = vpop.trf.xlu0
        %v3390 = vpop.trf.xlu0
        %v3391 = vpop.trf.xlu0
        %v3392 = vpop.trf.xlu0
        %v3393 = vpop.trf.xlu0
        %v3394 = vpop.trf.xlu0
        %v3395 = vpop.trf.xlu0
        %v3396 = vpop.trf.xlu0
        %v3397 = vpop.trf.xlu0
        %v3398 = vpop.trf.xlu0
        %3399 = vxpose.xlu0.b32.start [1/16] %v3309, 128
        %3400 = vxpose.xlu0.b32.cont [2/16] %v3314, 128
        %3401 = vxpose.xlu0.b32.cont [3/16] %v3319, 128
        %3402 = vxpose.xlu0.b32.cont [4/16] %v3324, 128
        %3403 = vxpose.xlu0.b32.cont [5/16] 0.0, 128
        %3404 = vxpose.xlu0.b32.cont [6/16] 0.0, 128
        %3405 = vxpose.xlu0.b32.cont [7/16] 0.0, 128
        %3406 = vxpose.xlu0.b32.cont [8/16] 0.0, 128
        %3407 = vxpose.xlu0.b32.cont [9/16] 0.0, 128
        %3408 = vxpose.xlu0.b32.cont [10/16] 0.0, 128
        %3409 = vxpose.xlu0.b32.cont [11/16] 0.0, 128
        %3410 = vxpose.xlu0.b32.cont [12/16] 0.0, 128
        %3411 = vxpose.xlu0.b32.cont [13/16] 0.0, 128
        %3412 = vxpose.xlu0.b32.cont [14/16] 0.0, 128
        %3413 = vxpose.xlu0.b32.cont [15/16] 0.0, 128
        %3414 = vxpose.xlu0.b32.end [16/16] 0.0, 128
        %v3415 = vpop.trf.xlu0
        %v3416 = vpop.trf.xlu0
        %v3417 = vpop.trf.xlu0
        %v3418 = vpop.trf.xlu0
        %v3419 = vpop.trf.xlu0
        %v3420 = vpop.trf.xlu0
        %v3421 = vpop.trf.xlu0
        %v3422 = vpop.trf.xlu0
        %v3423 = vpop.trf.xlu0
        %v3424 = vpop.trf.xlu0
        %v3425 = vpop.trf.xlu0
        %v3426 = vpop.trf.xlu0
        %v3427 = vpop.trf.xlu0
        %v3428 = vpop.trf.xlu0
        %v3429 = vpop.trf.xlu0
        %v3430 = vpop.trf.xlu0
        %3431 = vxpose.xlu0.b32.start [1/16] %v3329, 128
        %3432 = vxpose.xlu0.b32.cont [2/16] %v3334, 128
        %3433 = vxpose.xlu0.b32.cont [3/16] %v3339, 128
        %3434 = vxpose.xlu0.b32.cont [4/16] %v3344, 128
        %3435 = vxpose.xlu0.b32.cont [5/16] 0.0, 128
        %3436 = vxpose.xlu0.b32.cont [6/16] 0.0, 128
        %3437 = vxpose.xlu0.b32.cont [7/16] 0.0, 128
        %3438 = vxpose.xlu0.b32.cont [8/16] 0.0, 128
        %3439 = vxpose.xlu0.b32.cont [9/16] 0.0, 128
        %3440 = vxpose.xlu0.b32.cont [10/16] 0.0, 128
        %3441 = vxpose.xlu0.b32.cont [11/16] 0.0, 128
        %3442 = vxpose.xlu0.b32.cont [12/16] 0.0, 128
        %3443 = vxpose.xlu0.b32.cont [13/16] 0.0, 128
        %3444 = vxpose.xlu0.b32.cont [14/16] 0.0, 128
        %3445 = vxpose.xlu0.b32.cont [15/16] 0.0, 128
        %3446 = vxpose.xlu0.b32.end [16/16] 0.0, 128
        %v3447 = vpop.trf.xlu0
        %v3448 = vpop.trf.xlu0
        %v3449 = vpop.trf.xlu0
        %v3450 = vpop.trf.xlu0
        %v3451 = vpop.trf.xlu0
        %v3452 = vpop.trf.xlu0
        %v3453 = vpop.trf.xlu0
        %v3454 = vpop.trf.xlu0
        %v3455 = vpop.trf.xlu0
        %v3456 = vpop.trf.xlu0
        %v3457 = vpop.trf.xlu0
        %v3458 = vpop.trf.xlu0
        %v3459 = vpop.trf.xlu0
        %v3460 = vpop.trf.xlu0
        %v3461 = vpop.trf.xlu0
        %v3462 = vpop.trf.xlu0
        %3463 = vxpose.xlu0.b32.start [1/16] %v3349, 128
        %3464 = vxpose.xlu0.b32.cont [2/16] %v3354, 128
        %3465 = vxpose.xlu0.b32.cont [3/16] %v3359, 128
        %3466 = vxpose.xlu0.b32.cont [4/16] %v3364, 128
        %3467 = vxpose.xlu0.b32.cont [5/16] 0.0, 128
        %3468 = vxpose.xlu0.b32.cont [6/16] 0.0, 128
        %3469 = vxpose.xlu0.b32.cont [7/16] 0.0, 128
        %3470 = vxpose.xlu0.b32.cont [8/16] 0.0, 128
        %3471 = vxpose.xlu0.b32.cont [9/16] 0.0, 128
        %3472 = vxpose.xlu0.b32.cont [10/16] 0.0, 128
        %3473 = vxpose.xlu0.b32.cont [11/16] 0.0, 128
        %3474 = vxpose.xlu0.b32.cont [12/16] 0.0, 128
        %3475 = vxpose.xlu0.b32.cont [13/16] 0.0, 128
        %3476 = vxpose.xlu0.b32.cont [14/16] 0.0, 128
        %3477 = vxpose.xlu0.b32.cont [15/16] 0.0, 128
        %3478 = vxpose.xlu0.b32.end [16/16] 0.0, 128
        %v3479 = vpop.trf.xlu0
        %v3480 = vpop.trf.xlu0
        %v3481 = vpop.trf.xlu0
        %v3482 = vpop.trf.xlu0
        %v3483 = vpop.trf.xlu0
        %v3484 = vpop.trf.xlu0
        %v3485 = vpop.trf.xlu0
        %v3486 = vpop.trf.xlu0
        %v3487 = vpop.trf.xlu0
        %v3488 = vpop.trf.xlu0
        %v3489 = vpop.trf.xlu0
        %v3490 = vpop.trf.xlu0
        %v3491 = vpop.trf.xlu0
        %v3492 = vpop.trf.xlu0
        %v3493 = vpop.trf.xlu0
        %v3494 = vpop.trf.xlu0
        %v3495 = vmul.f32 %v2271, %v2271
        %v3496 = vmul.f32 %v2276, %v2276
        %v3497 = vmul.f32 %v2281, %v2281
        %v3498 = vmul.f32 %v2286, %v2286
        %v3499 = vsel %vm1911, %v3495, 0.0
        %3500 = vadd.xlane.f32.xlu0 %v3499
        %v3501 = vpop.xlane.xlu0 %3500
        %v3502 = vsel %vm1911, %v3496, 0.0
        %3503 = vadd.xlane.f32.xlu0 %v3502
        %v3504 = vpop.xlane.xlu0 %3503
        %v3505 = vsel %vm1911, %v3497, 0.0
        %3506 = vadd.xlane.f32.xlu0 %v3505
        %v3507 = vpop.xlane.xlu0 %3506
        %v3508 = vsel %vm1911, %v3498, 0.0
        %3509 = vadd.xlane.f32.xlu0 %v3508
        %v3510 = vpop.xlane.xlu0 %3509
        %vm3511 = vcmp.eq.f32.partialorder %v3501, 0.0
        %vm3512 = vcmp.eq.f32.partialorder %v3504, 0.0
        %vm3513 = vcmp.eq.f32.partialorder %v3507, 0.0
        %vm3514 = vcmp.eq.f32.partialorder %v3510, 0.0
        %v3515 = vsel %vm3511, 1.0, %v3501
        %v3516 = vsel %vm3512, 1.0, %v3504
        %v3517 = vsel %vm3513, 1.0, %v3507
        %v3518 = vsel %vm3514, 1.0, %v3510
        %v3519 = vrsqrt.pop %v3515
        %v3520 = vrsqrt.pop %v3516
        %v3521 = vrsqrt.pop %v3517
        %v3522 = vrsqrt.pop %v3518
        %v3523 = vmul.f32 %v2271, %v3519
        %v3524 = vmul.f32 %v2276, %v3520
        %v3525 = vmul.f32 %v2281, %v3521
        %v3526 = vmul.f32 %v2286, %v3522
        %v3527 = vmul.f32 %v3383, %v3383
        %v3528 = vmul.f32 %v3415, %v3415
        %v3529 = vmul.f32 %v3447, %v3447
        %v3530 = vmul.f32 %v3479, %v3479
        %v3531 = vsel %vm1911, %v3527, 0.0
        %3532 = vadd.xlane.f32.xlu0 %v3531
        %v3533 = vpop.xlane.xlu0 %3532
        %v3534 = vsel %vm1911, %v3528, 0.0
        %3535 = vadd.xlane.f32.xlu0 %v3534
        %v3536 = vpop.xlane.xlu0 %3535
        %v3537 = vsel %vm1911, %v3529, 0.0
        %3538 = vadd.xlane.f32.xlu0 %v3537
        %v3539 = vpop.xlane.xlu0 %3538
        %v3540 = vsel %vm1911, %v3530, 0.0
        %3541 = vadd.xlane.f32.xlu0 %v3540
        %v3542 = vpop.xlane.xlu0 %3541
        %vm3543 = vcmp.eq.f32.partialorder %v3533, 0.0
        %vm3544 = vcmp.eq.f32.partialorder %v3536, 0.0
        %vm3545 = vcmp.eq.f32.partialorder %v3539, 0.0
        %vm3546 = vcmp.eq.f32.partialorder %v3542, 0.0
        %v3547 = vsel %vm3543, 1.0, %v3533
        %v3548 = vsel %vm3544, 1.0, %v3536
        %v3549 = vsel %vm3545, 1.0, %v3539
        %v3550 = vsel %vm3546, 1.0, %v3542
        %v3551 = vrsqrt.pop %v3547
        %v3552 = vrsqrt.pop %v3548
        %v3553 = vrsqrt.pop %v3549
        %v3554 = vrsqrt.pop %v3550
        %v3555 = vmul.f32 %v3383, %v3551
        %v3556 = vmul.f32 %v3415, %v3552
        %v3557 = vmul.f32 %v3447, %v3553
        %v3558 = vmul.f32 %v3479, %v3554
        %s3559 = sld [smem:[#allocation2 + $0x3]]
        %v3560 = vstv %s3559
        %v3561 = vmul.f32 %v3560, %v3523
        %v3562 = vmul.f32 %v3560, %v3524
        %v3563 = vmul.f32 %v3560, %v3525
        %v3564 = vmul.f32 %v3560, %v3526
        %s3565 = sld [smem:[#allocation2 + $0x4]]
        %v3566 = vstv %s3565
        %v3567 = vmul.f32 %v3566, %v3555
        %v3568 = vmul.f32 %v3566, %v3556
        %v3569 = vmul.f32 %v3566, %v3557
        %v3570 = vmul.f32 %v3566, %v3558
        %v3571 = vadd.f32 %v3561, %v3567
        %v3572 = vadd.f32 %v3562, %v3568
        %v3573 = vadd.f32 %v3563, %v3569
        %v3574 = vadd.f32 %v3564, %v3570
        %s3575 = sld [smem:[#allocation2 + $0x5]]
        %v3576 = vstv %s3575
        %v3577 = vadd.f32 %v3571, %v3576
        %v3578 = vadd.f32 %v3572, %v3576
        %v3579 = vadd.f32 %v3573, %v3576
        %v3580 = vadd.f32 %v3574, %v3576
        %v3581 = vsel %vm1911, %v3577, -inf
        %3582 = vmax.xlane.f32.xlu0 %v3581
        %v3583 = vpop.xlane.xlu0 %3582
        %v3584 = vsel %vm1911, %v3578, -inf
        %3585 = vmax.xlane.f32.xlu0 %v3584
        %v3586 = vpop.xlane.xlu0 %3585
        %v3587 = vsel %vm1911, %v3579, -inf
        %3588 = vmax.xlane.f32.xlu0 %v3587
        %v3589 = vpop.xlane.xlu0 %3588
        %v3590 = vsel %vm1911, %v3580, -inf
        %3591 = vmax.xlane.f32.xlu0 %v3590
        %v3592 = vpop.xlane.xlu0 %3591
        %v3593 = vsub.f32 %v3577, %v3583
        %v3594 = vsub.f32 %v3578, %v3586
        %v3595 = vsub.f32 %v3579, %v3589
        %v3596 = vsub.f32 %v3580, %v3592
        %v3597 = vmul.f32 %v3593, 1.442695
        %v3598 = vpow.pop %v3597
        %v3599 = vmul.f32 %v3594, 1.442695
        %v3600 = vpow.pop %v3599
        %v3601 = vmul.f32 %v3595, 1.442695
        %v3602 = vpow.pop %v3601
        %v3603 = vmul.f32 %v3596, 1.442695
        %v3604 = vpow.pop %v3603
        %v3605 = vsel %vm1911, %v3598, 0.0
        %3606 = vadd.xlane.f32.xlu0 %v3605
        %v3607 = vpop.xlane.xlu0 %3606
        %v3608 = vsel %vm1911, %v3600, 0.0
        %3609 = vadd.xlane.f32.xlu0 %v3608
        %v3610 = vpop.xlane.xlu0 %3609
        %v3611 = vsel %vm1911, %v3602, 0.0
        %3612 = vadd.xlane.f32.xlu0 %v3611
        %v3613 = vpop.xlane.xlu0 %3612
        %v3614 = vsel %vm1911, %v3604, 0.0
        %3615 = vadd.xlane.f32.xlu0 %v3614
        %v3616 = vpop.xlane.xlu0 %3615
        %v3617 = vrcp.pop %v3607
        %v3618 = vrcp.pop %v3610
        %v3619 = vrcp.pop %v3613
        %v3620 = vrcp.pop %v3616
        %v3621 = vmul.f32 %v3598, %v3617
        %v3622 = vmul.f32 %v3600, %v3618
        %v3623 = vmul.f32 %v3602, %v3619
        %v3624 = vmul.f32 %v3604, %v3620
        %v3626 = vsel %vm1911, %v3577, 0
        %v3629 = vsel %vm1911, %v1316, 0
        %3631 = vmatprep.subr.mxu0 0.0
        %3632 = vmatpush1.xpose.msra.mxu0 0.0
        %3633 = vmatprep.subr.mxu0 0.0
        %3634 = vmatpush1.xpose.msra.mxu0 0.0
        %3635 = vmatprep.subr.mxu0 0.0
        %3636 = vmatpush1.xpose.msra.mxu0 0.0
        %3637 = vmatprep.subr.mxu0 0.0
        %3638 = vmatpush1.xpose.msra.mxu0 0.0
        %3639 = vmatprep.subr.mxu0 0.0
        %3640 = vmatpush1.xpose.msra.mxu0 0.0
        %3641 = vmatprep.subr.mxu0 0.0
        %3642 = vmatpush1.xpose.msra.mxu0 0.0
        %3643 = vmatprep.subr.mxu0 0.0
        %3644 = vmatpush1.xpose.msra.mxu0 0.0
        %3645 = vmatprep.subr.mxu0 0.0
        %3646 = vmatpush1.xpose.msra.mxu0 0.0
        %3647 = vmatprep.subr.mxu0 0.0
        %3648 = vmatpush1.xpose.msra.mxu0 0.0
        %3649 = vmatprep.subr.mxu0 0.0
        %3650 = vmatpush1.xpose.msra.mxu0 0.0
        %3651 = vmatprep.subr.mxu0 0.0
        %3652 = vmatpush1.xpose.msra.mxu0 0.0
        %3653 = vmatprep.subr.mxu0 0.0
        %3654 = vmatpush1.xpose.msra.mxu0 0.0
        %3655 = vmatprep.subr.mxu0 0.0
        %3656 = vmatpush1.xpose.msra.mxu0 0.0
        %3657 = vmatprep.subr.mxu0 0.0
        %3658 = vmatpush1.xpose.msra.mxu0 0.0
        %3659 = vmatprep.subr.mxu0 0.0
        %3660 = vmatpush1.xpose.msra.mxu0 0.0
        %3661 = vmatprep.subr.mxu0 0.0
        %3662 = vmatpush1.xpose.msra.mxu0 %v3629
        %3663 = vmatprep.subr.mxu0 0.0
        %3664 = vmatpush2.xpose.msra.mxu0 0.0
        %3665 = vmatprep.subr.mxu0 0.0
        %3666 = vmatpush2.xpose.msra.mxu0 0.0
        %3667 = vmatprep.subr.mxu0 0.0
        %3668 = vmatpush2.xpose.msra.mxu0 0.0
        %3669 = vmatprep.subr.mxu0 0.0
        %3670 = vmatpush2.xpose.msra.mxu0 0.0
        %3671 = vmatprep.subr.mxu0 0.0
        %3672 = vmatpush2.xpose.msra.mxu0 0.0
        %3673 = vmatprep.subr.mxu0 0.0
        %3674 = vmatpush2.xpose.msra.mxu0 0.0
        %3675 = vmatprep.subr.mxu0 0.0
        %3676 = vmatpush2.xpose.msra.mxu0 0.0
        %3677 = vmatprep.subr.mxu0 0.0
        %3678 = vmatpush2.xpose.msra.mxu0 0.0
        %3679 = vmatprep.subr.mxu0 0.0
        %3680 = vmatpush2.xpose.msra.mxu0 0.0
        %3681 = vmatprep.subr.mxu0 0.0
        %3682 = vmatpush2.xpose.msra.mxu0 0.0
        %3683 = vmatprep.subr.mxu0 0.0
        %3684 = vmatpush2.xpose.msra.mxu0 0.0
        %3685 = vmatprep.subr.mxu0 0.0
        %3686 = vmatpush2.xpose.msra.mxu0 0.0
        %3687 = vmatprep.subr.mxu0 0.0
        %3688 = vmatpush2.xpose.msra.mxu0 0.0
        %3689 = vmatprep.subr.mxu0 0.0
        %3690 = vmatpush2.xpose.msra.mxu0 0.0
        %3691 = vmatprep.subr.mxu0 0.0
        %3692 = vmatpush2.xpose.msra.mxu0 0.0
        %3693 = vmatprep.subr.mxu0 0.0
        %3694 = vmatpush2.xpose.msra.mxu0 0.0
        %3695 = vmatprep.mubr.f32.mxu0 0.0
        %3696 = vmatmul.mubr.f32.gmra.mxu0 %v3626
        %v3697 = vpop.f32.mrf.mxu0
        %v3698 = vadd.f32 0.0, %v3697
        %v3699 = vpop.f32.mrf.mxu0
        %3700 = vdwg.mxu0
        %v3702 = vsel %vm1911, %v3578, 0
        %v3705 = vsel %vm1911, %v1348, 0
        %3707 = vmatprep.subr.mxu0 0.0
        %3708 = vmatpush1.xpose.msra.mxu0 0.0
        %3709 = vmatprep.subr.mxu0 0.0
        %3710 = vmatpush1.xpose.msra.mxu0 0.0
        %3711 = vmatprep.subr.mxu0 0.0
        %3712 = vmatpush1.xpose.msra.mxu0 0.0
        %3713 = vmatprep.subr.mxu0 0.0
        %3714 = vmatpush1.xpose.msra.mxu0 0.0
        %3715 = vmatprep.subr.mxu0 0.0
        %3716 = vmatpush1.xpose.msra.mxu0 0.0
        %3717 = vmatprep.subr.mxu0 0.0
        %3718 = vmatpush1.xpose.msra.mxu0 0.0
        %3719 = vmatprep.subr.mxu0 0.0
        %3720 = vmatpush1.xpose.msra.mxu0 0.0
        %3721 = vmatprep.subr.mxu0 0.0
        %3722 = vmatpush1.xpose.msra.mxu0 0.0
        %3723 = vmatprep.subr.mxu0 0.0
        %3724 = vmatpush1.xpose.msra.mxu0 0.0
        %3725 = vmatprep.subr.mxu0 0.0
        %3726 = vmatpush1.xpose.msra.mxu0 0.0
        %3727 = vmatprep.subr.mxu0 0.0
        %3728 = vmatpush1.xpose.msra.mxu0 0.0
        %3729 = vmatprep.subr.mxu0 0.0
        %3730 = vmatpush1.xpose.msra.mxu0 0.0
        %3731 = vmatprep.subr.mxu0 0.0
        %3732 = vmatpush1.xpose.msra.mxu0 0.0
        %3733 = vmatprep.subr.mxu0 0.0
        %3734 = vmatpush1.xpose.msra.mxu0 0.0
        %3735 = vmatprep.subr.mxu0 0.0
        %3736 = vmatpush1.xpose.msra.mxu0 0.0
        %3737 = vmatprep.subr.mxu0 0.0
        %3738 = vmatpush1.xpose.msra.mxu0 %v3705
        %3739 = vmatprep.subr.mxu0 0.0
        %3740 = vmatpush2.xpose.msra.mxu0 0.0
        %3741 = vmatprep.subr.mxu0 0.0
        %3742 = vmatpush2.xpose.msra.mxu0 0.0
        %3743 = vmatprep.subr.mxu0 0.0
        %3744 = vmatpush2.xpose.msra.mxu0 0.0
        %3745 = vmatprep.subr.mxu0 0.0
        %3746 = vmatpush2.xpose.msra.mxu0 0.0
        %3747 = vmatprep.subr.mxu0 0.0
        %3748 = vmatpush2.xpose.msra.mxu0 0.0
        %3749 = vmatprep.subr.mxu0 0.0
        %3750 = vmatpush2.xpose.msra.mxu0 0.0
        %3751 = vmatprep.subr.mxu0 0.0
        %3752 = vmatpush2.xpose.msra.mxu0 0.0
        %3753 = vmatprep.subr.mxu0 0.0
        %3754 = vmatpush2.xpose.msra.mxu0 0.0
        %3755 = vmatprep.subr.mxu0 0.0
        %3756 = vmatpush2.xpose.msra.mxu0 0.0
        %3757 = vmatprep.subr.mxu0 0.0
        %3758 = vmatpush2.xpose.msra.mxu0 0.0
        %3759 = vmatprep.subr.mxu0 0.0
        %3760 = vmatpush2.xpose.msra.mxu0 0.0
        %3761 = vmatprep.subr.mxu0 0.0
        %3762 = vmatpush2.xpose.msra.mxu0 0.0
        %3763 = vmatprep.subr.mxu0 0.0
        %3764 = vmatpush2.xpose.msra.mxu0 0.0
        %3765 = vmatprep.subr.mxu0 0.0
        %3766 = vmatpush2.xpose.msra.mxu0 0.0
        %3767 = vmatprep.subr.mxu0 0.0
        %3768 = vmatpush2.xpose.msra.mxu0 0.0
        %3769 = vmatprep.subr.mxu0 0.0
        %3770 = vmatpush2.xpose.msra.mxu0 0.0
        %3771 = vmatprep.mubr.f32.mxu0 0.0
        %3772 = vmatmul.mubr.f32.gmra.mxu0 %v3702
        %v3773 = vpop.f32.mrf.mxu0
        %v3774 = vadd.f32 0.0, %v3773
        %v3775 = vpop.f32.mrf.mxu0
        %3776 = vdwg.mxu0
        %v3778 = vsel %vm1911, %v3579, 0
        %v3781 = vsel %vm1911, %v1380, 0
        %3783 = vmatprep.subr.mxu0 0.0
        %3784 = vmatpush1.xpose.msra.mxu0 0.0
        %3785 = vmatprep.subr.mxu0 0.0
        %3786 = vmatpush1.xpose.msra.mxu0 0.0
        %3787 = vmatprep.subr.mxu0 0.0
        %3788 = vmatpush1.xpose.msra.mxu0 0.0
        %3789 = vmatprep.subr.mxu0 0.0
        %3790 = vmatpush1.xpose.msra.mxu0 0.0
        %3791 = vmatprep.subr.mxu0 0.0
        %3792 = vmatpush1.xpose.msra.mxu0 0.0
        %3793 = vmatprep.subr.mxu0 0.0
        %3794 = vmatpush1.xpose.msra.mxu0 0.0
        %3795 = vmatprep.subr.mxu0 0.0
        %3796 = vmatpush1.xpose.msra.mxu0 0.0
        %3797 = vmatprep.subr.mxu0 0.0
        %3798 = vmatpush1.xpose.msra.mxu0 0.0
        %3799 = vmatprep.subr.mxu0 0.0
        %3800 = vmatpush1.xpose.msra.mxu0 0.0
        %3801 = vmatprep.subr.mxu0 0.0
        %3802 = vmatpush1.xpose.msra.mxu0 0.0
        %3803 = vmatprep.subr.mxu0 0.0
        %3804 = vmatpush1.xpose.msra.mxu0 0.0
        %3805 = vmatprep.subr.mxu0 0.0
        %3806 = vmatpush1.xpose.msra.mxu0 0.0
        %3807 = vmatprep.subr.mxu0 0.0
        %3808 = vmatpush1.xpose.msra.mxu0 0.0
        %3809 = vmatprep.subr.mxu0 0.0
        %3810 = vmatpush1.xpose.msra.mxu0 0.0
        %3811 = vmatprep.subr.mxu0 0.0
        %3812 = vmatpush1.xpose.msra.mxu0 0.0
        %3813 = vmatprep.subr.mxu0 0.0
        %3814 = vmatpush1.xpose.msra.mxu0 %v3781
        %3815 = vmatprep.subr.mxu0 0.0
        %3816 = vmatpush2.xpose.msra.mxu0 0.0
        %3817 = vmatprep.subr.mxu0 0.0
        %3818 = vmatpush2.xpose.msra.mxu0 0.0
        %3819 = vmatprep.subr.mxu0 0.0
        %3820 = vmatpush2.xpose.msra.mxu0 0.0
        %3821 = vmatprep.subr.mxu0 0.0
        %3822 = vmatpush2.xpose.msra.mxu0 0.0
        %3823 = vmatprep.subr.mxu0 0.0
        %3824 = vmatpush2.xpose.msra.mxu0 0.0
        %3825 = vmatprep.subr.mxu0 0.0
        %3826 = vmatpush2.xpose.msra.mxu0 0.0
        %3827 = vmatprep.subr.mxu0 0.0
        %3828 = vmatpush2.xpose.msra.mxu0 0.0
        %3829 = vmatprep.subr.mxu0 0.0
        %3830 = vmatpush2.xpose.msra.mxu0 0.0
        %3831 = vmatprep.subr.mxu0 0.0
        %3832 = vmatpush2.xpose.msra.mxu0 0.0
        %3833 = vmatprep.subr.mxu0 0.0
        %3834 = vmatpush2.xpose.msra.mxu0 0.0
        %3835 = vmatprep.subr.mxu0 0.0
        %3836 = vmatpush2.xpose.msra.mxu0 0.0
        %3837 = vmatprep.subr.mxu0 0.0
        %3838 = vmatpush2.xpose.msra.mxu0 0.0
        %3839 = vmatprep.subr.mxu0 0.0
        %3840 = vmatpush2.xpose.msra.mxu0 0.0
        %3841 = vmatprep.subr.mxu0 0.0
        %3842 = vmatpush2.xpose.msra.mxu0 0.0
        %3843 = vmatprep.subr.mxu0 0.0
        %3844 = vmatpush2.xpose.msra.mxu0 0.0
        %3845 = vmatprep.subr.mxu0 0.0
        %3846 = vmatpush2.xpose.msra.mxu0 0.0
        %3847 = vmatprep.mubr.f32.mxu0 0.0
        %3848 = vmatmul.mubr.f32.gmra.mxu0 %v3778
        %v3849 = vpop.f32.mrf.mxu0
        %v3850 = vadd.f32 0.0, %v3849
        %v3851 = vpop.f32.mrf.mxu0
        %3852 = vdwg.mxu0
        %v3854 = vsel %vm1911, %v3580, 0
        %v3857 = vsel %vm1911, %v1412, 0
        %3859 = vmatprep.subr.mxu0 0.0
        %3860 = vmatpush1.xpose.msra.mxu0 0.0
        %3861 = vmatprep.subr.mxu0 0.0
        %3862 = vmatpush1.xpose.msra.mxu0 0.0
        %3863 = vmatprep.subr.mxu0 0.0
        %3864 = vmatpush1.xpose.msra.mxu0 0.0
        %3865 = vmatprep.subr.mxu0 0.0
        %3866 = vmatpush1.xpose.msra.mxu0 0.0
        %3867 = vmatprep.subr.mxu0 0.0
        %3868 = vmatpush1.xpose.msra.mxu0 0.0
        %3869 = vmatprep.subr.mxu0 0.0
        %3870 = vmatpush1.xpose.msra.mxu0 0.0
        %3871 = vmatprep.subr.mxu0 0.0
        %3872 = vmatpush1.xpose.msra.mxu0 0.0
        %3873 = vmatprep.subr.mxu0 0.0
        %3874 = vmatpush1.xpose.msra.mxu0 0.0
        %3875 = vmatprep.subr.mxu0 0.0
        %3876 = vmatpush1.xpose.msra.mxu0 0.0
        %3877 = vmatprep.subr.mxu0 0.0
        %3878 = vmatpush1.xpose.msra.mxu0 0.0
        %3879 = vmatprep.subr.mxu0 0.0
        %3880 = vmatpush1.xpose.msra.mxu0 0.0
        %3881 = vmatprep.subr.mxu0 0.0
        %3882 = vmatpush1.xpose.msra.mxu0 0.0
        %3883 = vmatprep.subr.mxu0 0.0
        %3884 = vmatpush1.xpose.msra.mxu0 0.0
        %3885 = vmatprep.subr.mxu0 0.0
        %3886 = vmatpush1.xpose.msra.mxu0 0.0
        %3887 = vmatprep.subr.mxu0 0.0
        %3888 = vmatpush1.xpose.msra.mxu0 0.0
        %3889 = vmatprep.subr.mxu0 0.0
        %3890 = vmatpush1.xpose.msra.mxu0 %v3857
        %3891 = vmatprep.subr.mxu0 0.0
        %3892 = vmatpush2.xpose.msra.mxu0 0.0
        %3893 = vmatprep.subr.mxu0 0.0
        %3894 = vmatpush2.xpose.msra.mxu0 0.0
        %3895 = vmatprep.subr.mxu0 0.0
        %3896 = vmatpush2.xpose.msra.mxu0 0.0
        %3897 = vmatprep.subr.mxu0 0.0
        %3898 = vmatpush2.xpose.msra.mxu0 0.0
        %3899 = vmatprep.subr.mxu0 0.0
        %3900 = vmatpush2.xpose.msra.mxu0 0.0
        %3901 = vmatprep.subr.mxu0 0.0
        %3902 = vmatpush2.xpose.msra.mxu0 0.0
        %3903 = vmatprep.subr.mxu0 0.0
        %3904 = vmatpush2.xpose.msra.mxu0 0.0
        %3905 = vmatprep.subr.mxu0 0.0
        %3906 = vmatpush2.xpose.msra.mxu0 0.0
        %3907 = vmatprep.subr.mxu0 0.0
        %3908 = vmatpush2.xpose.msra.mxu0 0.0
        %3909 = vmatprep.subr.mxu0 0.0
        %3910 = vmatpush2.xpose.msra.mxu0 0.0
        %3911 = vmatprep.subr.mxu0 0.0
        %3912 = vmatpush2.xpose.msra.mxu0 0.0
        %3913 = vmatprep.subr.mxu0 0.0
        %3914 = vmatpush2.xpose.msra.mxu0 0.0
        %3915 = vmatprep.subr.mxu0 0.0
        %3916 = vmatpush2.xpose.msra.mxu0 0.0
        %3917 = vmatprep.subr.mxu0 0.0
        %3918 = vmatpush2.xpose.msra.mxu0 0.0
        %3919 = vmatprep.subr.mxu0 0.0
        %3920 = vmatpush2.xpose.msra.mxu0 0.0
        %3921 = vmatprep.subr.mxu0 0.0
        %3922 = vmatpush2.xpose.msra.mxu0 0.0
        %3923 = vmatprep.mubr.f32.mxu0 0.0
        %3924 = vmatmul.mubr.f32.gmra.mxu0 %v3854
        %v3925 = vpop.f32.mrf.mxu0
        %v3926 = vadd.f32 0.0, %v3925
        %v3927 = vpop.f32.mrf.mxu0
        %3928 = vdwg.mxu0
        %v3929 = vsel %vm1123, %v3698, -inf
        %3930 = vmax.xlane.f32.xlu0 %v3929
        %v3931 = vpop.xlane.xlu0 %3930
        %v3932 = vsel %vm1123, %v3774, -inf
        %3933 = vmax.xlane.f32.xlu0 %v3932
        %v3934 = vpop.xlane.xlu0 %3933
        %v3935 = vsel %vm1123, %v3850, -inf
        %3936 = vmax.xlane.f32.xlu0 %v3935
        %v3937 = vpop.xlane.xlu0 %3936
        %v3938 = vsel %vm1123, %v3926, -inf
        %3939 = vmax.xlane.f32.xlu0 %v3938
        %v3940 = vpop.xlane.xlu0 %3939
        %v3941 = vsub.f32 %v3698, %v3931
        %v3942 = vsub.f32 %v3774, %v3934
        %v3943 = vsub.f32 %v3850, %v3937
        %v3944 = vsub.f32 %v3926, %v3940
        %v3945 = vmul.f32 %v3941, 1.442695
        %v3946 = vpow.pop %v3945
        %v3947 = vmul.f32 %v3942, 1.442695
        %v3948 = vpow.pop %v3947
        %v3949 = vmul.f32 %v3943, 1.442695
        %v3950 = vpow.pop %v3949
        %v3951 = vmul.f32 %v3944, 1.442695
        %v3952 = vpow.pop %v3951
        %v3953 = vsel %vm1123, %v3946, 0.0
        %3954 = vadd.xlane.f32.xlu0 %v3953
        %v3955 = vpop.xlane.xlu0 %3954
        %v3956 = vsel %vm1123, %v3948, 0.0
        %3957 = vadd.xlane.f32.xlu0 %v3956
        %v3958 = vpop.xlane.xlu0 %3957
        %v3959 = vsel %vm1123, %v3950, 0.0
        %3960 = vadd.xlane.f32.xlu0 %v3959
        %v3961 = vpop.xlane.xlu0 %3960
        %v3962 = vsel %vm1123, %v3952, 0.0
        %3963 = vadd.xlane.f32.xlu0 %v3962
        %v3964 = vpop.xlane.xlu0 %3963
        %v3965 = vrcp.pop %v3955
        %v3966 = vrcp.pop %v3958
        %v3967 = vrcp.pop %v3961
        %v3968 = vrcp.pop %v3964
        %v3969 = vmul.f32 %v3946, %v3965
        %v3970 = vmul.f32 %v3948, %v3966
        %v3971 = vmul.f32 %v3950, %v3967
        %v3972 = vmul.f32 %v3952, %v3968
        %3977 = vrot.lane.b32.xlu0 %v3621, 8
        %v3978 = vpop.permute.xlu0 %3977
        %3979 = vrot.lane.b32.xlu0 %v3622, 8
        %v3980 = vpop.permute.xlu0 %3979
        %3981 = vrot.lane.b32.xlu0 %v3623, 8
        %v3982 = vpop.permute.xlu0 %3981
        %3983 = vrot.lane.b32.xlu0 %v3624, 8
        %v3984 = vpop.permute.xlu0 %3983
        %3993 = vrot.lane.b32.xlu0 %v609, 40
        %v3994 = vpop.permute.xlu0 %3993
        %3995 = vrot.lane.b32.xlu0 %v682, 40
        %v3996 = vpop.permute.xlu0 %3995
        %3997 = vrot.lane.b32.xlu0 %v755, 40
        %v3998 = vpop.permute.xlu0 %3997
        %3999 = vrot.lane.b32.xlu0 %v828, 40
        %v4000 = vpop.permute.xlu0 %3999
        %4009 = vrot.lane.b32.xlu0 %v901, 48
        %v4010 = vpop.permute.xlu0 %4009
        %4011 = vrot.lane.b32.xlu0 %v974, 48
        %v4012 = vpop.permute.xlu0 %4011
        %4013 = vrot.lane.b32.xlu0 %v1047, 48
        %v4014 = vpop.permute.xlu0 %4013
        %4015 = vrot.lane.b32.xlu0 %v1120, 48
        %v4016 = vpop.permute.xlu0 %4015
        %v4021 = vsel %vm1123, %v3969, %v3978
        %v4022 = vsel %vm1123, %v3970, %v3980
        %v4023 = vsel %vm1123, %v3971, %v3982
        %v4024 = vsel %vm1123, %v3972, %v3984
        %vm4025 = vcmask 326656
        %v4026 = vsel %vm4025, %v4021, %v3994
        %v4027 = vsel %vm4025, %v4022, %v3996
        %v4028 = vsel %vm4025, %v4023, %v3998
        %v4029 = vsel %vm4025, %v4024, %v4000
        %vm4030 = vcmask 392192
        %v4031 = vsel %vm4030, %v4026, %v4010
        %v4032 = vsel %vm4030, %v4027, %v4012
        %v4033 = vsel %vm4030, %v4028, %v4014
        %v4034 = vsel %vm4030, %v4029, %v4016
        %vm4035 = vcmask 457728
        %v4036 = vsel %vm4035, %v4031, 0.0
        %v4037 = vsel %vm4035, %v4032, 0.0
        %v4038 = vsel %vm4035, %v4033, 0.0
        %v4039 = vsel %vm4035, %v4034, 0.0
        %v4040 = vsel %vm1911, %v1316, 0.0
        %v4041 = vsel %vm1911, %v1348, 0.0
        %v4042 = vsel %vm1911, %v1380, 0.0
        %v4043 = vsel %vm1911, %v1412, 0.0
        %4044 = vst [vmem:[%s488] sm:$0xff] %v4036
        %4045 = vst [vmem:[%s488 + $0x8] sm:$0xff] %v4040
        %4046 = vst [vmem:[%s488 + $0x10] sm:$0xff] %v4037
        %4047 = vst [vmem:[%s488 + $0x18] sm:$0xff] %v4041
        %4048 = vst [vmem:[%s488 + $0x20] sm:$0xff] %v4038
        %4049 = vst [vmem:[%s488 + $0x28] sm:$0xff] %v4042
        %4050 = vst [vmem:[%s488 + $0x30] sm:$0xff] %v4039
        %4051 = vst [vmem:[%s488 + $0x38] sm:$0xff] %v4043
        %s4052 = smul.u32 4, %s26
        %p4053 = scmp.lt.s32.totalorder %s4052, 7
        %s4054 = scalar_select %p4053, %s4052, 7
        %s4055 = smul.addr %s4054, 2
        %s4056 = smul.addr %s4055, 8
        %s4057 = scalar_lea.vmem %s14, %s4056
        // Predicated region
        $region81: #{recommender_forward_batched.1} parent=75 // pred_check
          %p4058 = pneg %p343
        $region82: #{recommender_forward_batched.1} parent=75 // pred_check_branch
          %4060 = sbr.rel (%p4058) target = $region84
        $region83: #{recommender_forward_batched.1} parent=75 // pred_region
          %s4061 = smul.u32 4, %s26
        $region84: #{recommender_forward_batched.1} parent=75 // pred_fallthru
          _
      $region76: #{recommender_forward_batched.1} parent=5 // pred_fallthru
        _
      %p4062 = scmp.le.s32.totalorder 2, %s21
      // Predicated region
      $region85: #{recommender_forward_batched.1} parent=5 // pred_check
        %p4063 = pneg %p4062
      $region86: #{recommender_forward_batched.1} parent=5 // pred_check_branch
        %4065 = sbr.rel (%p4063) target = $region88
      $region87: #{recommender_forward_batched.1} parent=5 // pred_region
        %s4066 = ssub.s32 %s21, 2
        // Predicated region
        $region89: #{recommender_forward_batched.1} parent=87 // pred_check
          %p4067 = pneg %p349
        $region90: #{recommender_forward_batched.1} parent=87 // pred_check_branch
          %4069 = sbr.rel (%p4067) target = $region92
        $region91: #{recommender_forward_batched.1} parent=87 // pred_region
          %s4070 = smul.u32 4, %s27
          %p4071 = scmp.lt.s32.totalorder %s4070, 7
          %s4072 = scalar_select %p4071, %s4070, 7
          %s4073 = smul.addr %s4072, 2
          %s4074 = smul.addr %s4073, 8
          %s4075 = scalar_lea.vmem %s14, %s4074
        $region92: #{recommender_forward_batched.1} parent=87 // pred_fallthru
          _
      $region88: #{recommender_forward_batched.1} parent=5 // pred_fallthru
        _
    $region6: #{recommender_forward_batched.1} parent=1 // loop_footer
      %s25 = sadd.s32 1, %s21
    $region7: #{recommender_forward_batched.1} parent=1 // loop_footer_branch
      %20 = sbr.rel target = $region3
    $region8: #{recommender_forward_batched.1} parent=1 // loop_exit
      _
    %4076 = vsyncpa [#allocation3], 1
    %s4077 = scalar_lea.sflag [#allocation3], 1
    %4078 = vsyncpa %s4077, 1

</llo_original>
